<compile_context>
chip_gen: v7x
topology: tpu7x:2x2x1
jax: 0.10.0
libtpu: 0.0.40
codegen_flags: <defaults>
</compile_context>

<pallas_src>
import numpy as np
import jax
import jax.numpy as jnp
from jax import lax
from jax.experimental import pallas as pl
from jax.experimental.pallas import tpu as pltpu


def _build_tap_matrices(L, L_out, dtype=np.float32):
    """One-hot (3, L, L_out) matrices folding nearest-upsample + conv-tap shift
    + zero padding into a single right-matmul per tap:

        (x @ U[t])[:, j] == x_up_padded[:, j + t - 1]

    where x_up[:, i] = x[:, floor(i*L/L_out)] and out-of-range positions are 0
    (the Conv1d padding=1 zeros). Host-side setup, tiny."""
    U = np.zeros((3, L, L_out), dtype)
    for t in range(3):
        for j in range(L_out):
            s = j + t - 1  # position in the upsampled (pre-pad) sequence
            if 0 <= s < L_out:
                U[t, (s * L) // L_out, j] = 1.0
    return U


def tcnn_deconv_kernel(x_ref, u_ref, w_ref, b_ref, o_ref):
    """Fused upsample + Conv1d(k=3, pad=1) + bias + ReLU for one batch block.

    x_ref: (Bt, C_in, L)       input block, PyTorch NCL layout (L in lanes)
    u_ref: (3, L, L_out)       per-tap upsample/shift/pad one-hot matrices
    w_ref: (3, C_out, C_in)    conv taps (tap-major)
    b_ref: (C_out, 1)          bias
    o_ref: (Bt, C_out, L_out)  output block (L_out in lanes)
    """
    bt = x_ref.shape[0]
    c_out, l_out = o_ref.shape[1], o_ref.shape[2]
    bias = b_ref[...]                      # (C_out, 1), hoisted out of the loop

    for b in range(bt):                    # static, unrolled over the batch tile
        x2 = x_ref[b]                      # (C_in, L)
        acc = jnp.zeros((c_out, l_out), jnp.float32)
        for t in range(3):
            # channel contraction on the MXU: (C_out, L)
            z = jnp.dot(w_ref[t], x2, preferred_element_type=jnp.float32)
            # fused upsample + tap shift + zero pad on the MXU: (C_out, L_out)
            acc = acc + jnp.dot(z, u_ref[t], preferred_element_type=jnp.float32)
        o_ref[b] = jnp.maximum(acc + bias, 0.0).astype(o_ref.dtype)


def tcnn_deconv(x, weight, bias, scale=2, out_length=None, block_b=8):
    """Pallas TCNNDeconv forward.

    x      : (..., C_in, L)      (PyTorch NCL convention)
    weight : (C_out, C_in, 3)    (PyTorch Conv1d weight layout)
    bias   : (C_out,)
    returns: (..., C_out, L_out)
    """
    extra_dims = x.shape[:-2]
    C_in, L = int(x.shape[-2]), int(x.shape[-1])
    C_out = int(weight.shape[0])
    B = int(np.prod(extra_dims)) if extra_dims else 1
    L_out = scale * L if out_length is None else int(out_length)

    xf = x.reshape((B, C_in, L))

    # Batch tiling: pad B up to a multiple of the block so every grid step is full.
    Bt = max(1, min(block_b, B))
    n_blocks = -(-B // Bt)
    B_pad = n_blocks * Bt
    if B_pad != B:
        xf = jnp.pad(xf, ((0, B_pad - B), (0, 0), (0, 0)))

    U = jnp.asarray(_build_tap_matrices(L, L_out))        # (3, L, L_out)
    w_tap = jnp.transpose(weight, (2, 0, 1))               # (3, C_out, C_in)
    b2 = bias.reshape(C_out, 1)

    out = pl.pallas_call(
        tcnn_deconv_kernel,
        out_shape=jax.ShapeDtypeStruct((B_pad, C_out, L_out), x.dtype),
        grid_spec=pltpu.PrefetchScalarGridSpec(
            num_scalar_prefetch=0,
            grid=(n_blocks,),
            in_specs=[
                pl.BlockSpec((Bt, C_in, L), lambda i: (i, 0, 0)),       # x block
                pl.BlockSpec((3, L, L_out), lambda i: (0, 0, 0)),       # U (resident)
                pl.BlockSpec((3, C_out, C_in), lambda i: (0, 0, 0)),    # W (resident)
                pl.BlockSpec((C_out, 1), lambda i: (0, 0)),             # bias (resident)
            ],
            out_specs=pl.BlockSpec((Bt, C_out, L_out), lambda i: (i, 0, 0)),
        ),
        compiler_params=pltpu.CompilerParams(
            dimension_semantics=("parallel",),   # shard batch blocks across cores
        ),
    )(xf, U, w_tap, b2)

    if B_pad != B:
        out = out[:B]
    return out.reshape(extra_dims + (C_out, L_out))


def _reference(x, weight, bias, scale=2, out_length=None):
    """Pure-JAX reference matching the PyTorch module."""
    extra_dims = x.shape[:-2]
    C_in, L = x.shape[-2], x.shape[-1]
    B = int(np.prod(extra_dims)) if extra_dims else 1
    xf = x.reshape((B, C_in, L))
    L_out = scale * L if out_length is None else out_length
    idx = (jnp.arange(L_out) * L) // L_out
    x_up = jnp.take(xf, idx, axis=-1)
    y = lax.conv_general_dilated(
        x_up, weight, window_strides=(1,), padding=((1, 1),),
        dimension_numbers=("NCH", "OIH", "NCH"))
    y = y + bias.reshape(1, -1, 1)
    y = jnp.maximum(y, 0.0)
    return y.reshape(extra_dims + y.shape[-2:])


if __name__ == "__main__":
    # Small shapes consistent with the module's forward:
    # x has leading "extra dims", then (in_channels, length).
    extra = (2, 3)
    in_channels, out_channels, L, scale = 4, 8, 16, 2

    key = jax.random.PRNGKey(0)
    kx, kw, kb = jax.random.split(key, 3)

    x = jax.random.normal(kx, extra + (in_channels, L), dtype=jnp.float32)

    # Deterministic Conv1d init (PyTorch default: U(-bound, bound), bound = 1/sqrt(C_in*k)).
    fan_in = in_channels * 3
    bound = 1.0 / np.sqrt(fan_in)
    weight = jax.random.uniform(kw, (out_channels, in_channels, 3),
                                minval=-bound, maxval=bound, dtype=jnp.float32)
    bias = jax.random.uniform(kb, (out_channels,),
                              minval=-bound, maxval=bound, dtype=jnp.float32)

    out = tcnn_deconv(x, weight, bias, scale=scale, out_length=None)
    out = jax.block_until_ready(out)

    ref = jax.block_until_ready(_reference(x, weight, bias, scale=scale))
    assert out.shape == extra + (out_channels, scale * L), out.shape
    np.testing.assert_allclose(np.asarray(out), np.asarray(ref), rtol=1e-5, atol=1e-5)

    print("KERNEL_OK")
</pallas_src>

<mosaic_0001>
module attributes {stable_mosaic.version = 11 : i64} {
  func.func @tcnn_deconv_kernel(%arg0: i32, %arg1: memref<6x4x16xf32, #tpu.memory_space<vmem>>, %arg2: memref<3x16x32xf32, #tpu.memory_space<vmem>>, %arg3: memref<3x8x4xf32, #tpu.memory_space<vmem>>, %arg4: memref<8x1xf32, #tpu.memory_space<vmem>>, %arg5: memref<6x8x32xf32, #tpu.memory_space<vmem>>) attributes {dimension_semantics = [#tpu.dimension_semantics<parallel>], iteration_bounds = array<i64: 1>, scalar_prefetch = 0 : i64, scratch_operands = 0 : i64, tpu.core_type = #tpu.core_type<tc>, window_params = [{transform_indices = @transform_0, window_bounds = array<i64: 6, 4, 16>}, {pipeline_mode = #tpu.pipeline_mode<synchronous>, transform_indices = @transform_1, window_bounds = array<i64: 3, 16, 32>}, {pipeline_mode = #tpu.pipeline_mode<synchronous>, transform_indices = @transform_2, window_bounds = array<i64: 3, 8, 4>}, {pipeline_mode = #tpu.pipeline_mode<synchronous>, transform_indices = @transform_3, window_bounds = array<i64: 8, 1>}, {transform_indices = @transform_4, window_bounds = array<i64: 6, 8, 32>}]} {
    %c0 = arith.constant 0 : index
    %c0_0 = arith.constant 0 : index
    %0 = vector.load %arg4[%c0, %c0_0] : memref<8x1xf32, #tpu.memory_space<vmem>>, vector<8x1xf32>
    %c0_1 = arith.constant 0 : index
    %c0_2 = arith.constant 0 : index
    %c0_3 = arith.constant 0 : index
    %1 = vector.load %arg1[%c0_1, %c0_2, %c0_3] : memref<6x4x16xf32, #tpu.memory_space<vmem>>, vector<1x4x16xf32>
    %2 = vector.shape_cast %1 : vector<1x4x16xf32> to vector<4x16xf32>
    %cst = arith.constant 0.000000e+00 : f32
    %3 = vector.broadcast %cst : f32 to vector<8x32xf32>
    %c0_4 = arith.constant 0 : index
    %c0_5 = arith.constant 0 : index
    %c0_6 = arith.constant 0 : index
    %4 = vector.load %arg3[%c0_4, %c0_5, %c0_6] : memref<3x8x4xf32, #tpu.memory_space<vmem>>, vector<1x8x4xf32>
    %5 = vector.shape_cast %4 : vector<1x8x4xf32> to vector<8x4xf32>
    %cst_7 = arith.constant dense<0.000000e+00> : vector<8x16xf32>
    %6 = tpu.matmul %5, %2, %cst_7 {dimension_numbers = #tpu.dot_dimension_numbers<[1], [0], [0], [1], [0, 0, 1, 1], [], []>} : vector<8x4xf32>, vector<4x16xf32>, vector<8x16xf32> -> vector<8x16xf32>
    %c0_8 = arith.constant 0 : index
    %c0_9 = arith.constant 0 : index
    %c0_10 = arith.constant 0 : index
    %7 = vector.load %arg2[%c0_8, %c0_9, %c0_10] : memref<3x16x32xf32, #tpu.memory_space<vmem>>, vector<1x16x32xf32>
    %8 = vector.shape_cast %7 : vector<1x16x32xf32> to vector<16x32xf32>
    %cst_11 = arith.constant dense<0.000000e+00> : vector<8x32xf32>
    %9 = tpu.matmul %6, %8, %cst_11 {dimension_numbers = #tpu.dot_dimension_numbers<[1], [0], [0], [1], [0, 0, 1, 1], [], []>} : vector<8x16xf32>, vector<16x32xf32>, vector<8x32xf32> -> vector<8x32xf32>
    %10 = arith.addf %3, %9 : vector<8x32xf32>
    %c1 = arith.constant 1 : index
    %c0_12 = arith.constant 0 : index
    %c0_13 = arith.constant 0 : index
    %11 = vector.load %arg3[%c1, %c0_12, %c0_13] : memref<3x8x4xf32, #tpu.memory_space<vmem>>, vector<1x8x4xf32>
    %12 = vector.shape_cast %11 : vector<1x8x4xf32> to vector<8x4xf32>
    %cst_14 = arith.constant dense<0.000000e+00> : vector<8x16xf32>
    %13 = tpu.matmul %12, %2, %cst_14 {dimension_numbers = #tpu.dot_dimension_numbers<[1], [0], [0], [1], [0, 0, 1, 1], [], []>} : vector<8x4xf32>, vector<4x16xf32>, vector<8x16xf32> -> vector<8x16xf32>
    %c1_15 = arith.constant 1 : index
    %c0_16 = arith.constant 0 : index
    %c0_17 = arith.constant 0 : index
    %14 = vector.load %arg2[%c1_15, %c0_16, %c0_17] : memref<3x16x32xf32, #tpu.memory_space<vmem>>, vector<1x16x32xf32>
    %15 = vector.shape_cast %14 : vector<1x16x32xf32> to vector<16x32xf32>
    %cst_18 = arith.constant dense<0.000000e+00> : vector<8x32xf32>
    %16 = tpu.matmul %13, %15, %cst_18 {dimension_numbers = #tpu.dot_dimension_numbers<[1], [0], [0], [1], [0, 0, 1, 1], [], []>} : vector<8x16xf32>, vector<16x32xf32>, vector<8x32xf32> -> vector<8x32xf32>
    %17 = arith.addf %10, %16 : vector<8x32xf32>
    %c2 = arith.constant 2 : index
    %c0_19 = arith.constant 0 : index
    %c0_20 = arith.constant 0 : index
    %18 = vector.load %arg3[%c2, %c0_19, %c0_20] : memref<3x8x4xf32, #tpu.memory_space<vmem>>, vector<1x8x4xf32>
    %19 = vector.shape_cast %18 : vector<1x8x4xf32> to vector<8x4xf32>
    %cst_21 = arith.constant dense<0.000000e+00> : vector<8x16xf32>
    %20 = tpu.matmul %19, %2, %cst_21 {dimension_numbers = #tpu.dot_dimension_numbers<[1], [0], [0], [1], [0, 0, 1, 1], [], []>} : vector<8x4xf32>, vector<4x16xf32>, vector<8x16xf32> -> vector<8x16xf32>
    %c2_22 = arith.constant 2 : index
    %c0_23 = arith.constant 0 : index
    %c0_24 = arith.constant 0 : index
    %21 = vector.load %arg2[%c2_22, %c0_23, %c0_24] : memref<3x16x32xf32, #tpu.memory_space<vmem>>, vector<1x16x32xf32>
    %22 = vector.shape_cast %21 : vector<1x16x32xf32> to vector<16x32xf32>
    %cst_25 = arith.constant dense<0.000000e+00> : vector<8x32xf32>
    %23 = tpu.matmul %20, %22, %cst_25 {dimension_numbers = #tpu.dot_dimension_numbers<[1], [0], [0], [1], [0, 0, 1, 1], [], []>} : vector<8x16xf32>, vector<16x32xf32>, vector<8x32xf32> -> vector<8x32xf32>
    %24 = arith.addf %17, %23 : vector<8x32xf32>
    %25 = vector.broadcast %0 : vector<8x1xf32> to vector<8x32xf32>
    %26 = arith.addf %24, %25 : vector<8x32xf32>
    %cst_26 = arith.constant 0.000000e+00 : f32
    %27 = vector.broadcast %cst_26 : f32 to vector<8x32xf32>
    %28 = arith.maximumf %26, %27 : vector<8x32xf32>
    %c0_27 = arith.constant 0 : index
    %c0_28 = arith.constant 0 : index
    %c0_29 = arith.constant 0 : index
    %29 = vector.load %arg5[%c0_27, %c0_28, %c0_29] : memref<6x8x32xf32, #tpu.memory_space<vmem>>, vector<1x8x32xf32>
    %30 = vector.shape_cast %29 : vector<1x8x32xf32> to vector<8x32xf32>
    %31 = vector.shape_cast %28 : vector<8x32xf32> to vector<1x8x32xf32>
    tpu.vector_store %arg5[%c0_27, %c0_28, %c0_29], %31 {strides = array<i32>} : memref<6x8x32xf32, #tpu.memory_space<vmem>>, vector<1x8x32xf32>,
    %c1_30 = arith.constant 1 : index
    %c0_31 = arith.constant 0 : index
    %c0_32 = arith.constant 0 : index
    %32 = vector.load %arg1[%c1_30, %c0_31, %c0_32] : memref<6x4x16xf32, #tpu.memory_space<vmem>>, vector<1x4x16xf32>
    %33 = vector.shape_cast %32 : vector<1x4x16xf32> to vector<4x16xf32>
    %cst_33 = arith.constant 0.000000e+00 : f32
    %34 = vector.broadcast %cst_33 : f32 to vector<8x32xf32>
    %c0_34 = arith.constant 0 : index
    %c0_35 = arith.constant 0 : index
    %c0_36 = arith.constant 0 : index
    %35 = vector.load %arg3[%c0_34, %c0_35, %c0_36] : memref<3x8x4xf32, #tpu.memory_space<vmem>>, vector<1x8x4xf32>
    %36 = vector.shape_cast %35 : vector<1x8x4xf32> to vector<8x4xf32>
    %cst_37 = arith.constant dense<0.000000e+00> : vector<8x16xf32>
    %37 = tpu.matmul %36, %33, %cst_37 {dimension_numbers = #tpu.dot_dimension_numbers<[1], [0], [0], [1], [0, 0, 1, 1], [], []>} : vector<8x4xf32>, vector<4x16xf32>, vector<8x16xf32> -> vector<8x16xf32>
    %c0_38 = arith.constant 0 : index
    %c0_39 = arith.constant 0 : index
    %c0_40 = arith.constant 0 : index
    %38 = vector.load %arg2[%c0_38, %c0_39, %c0_40] : memref<3x16x32xf32, #tpu.memory_space<vmem>>, vector<1x16x32xf32>
    %39 = vector.shape_cast %38 : vector<1x16x32xf32> to vector<16x32xf32>
    %cst_41 = arith.constant dense<0.000000e+00> : vector<8x32xf32>
    %40 = tpu.matmul %37, %39, %cst_41 {dimension_numbers = #tpu.dot_dimension_numbers<[1], [0], [0], [1], [0, 0, 1, 1], [], []>} : vector<8x16xf32>, vector<16x32xf32>, vector<8x32xf32> -> vector<8x32xf32>
    %41 = arith.addf %34, %40 : vector<8x32xf32>
    %c1_42 = arith.constant 1 : index
    %c0_43 = arith.constant 0 : index
    %c0_44 = arith.constant 0 : index
    %42 = vector.load %arg3[%c1_42, %c0_43, %c0_44] : memref<3x8x4xf32, #tpu.memory_space<vmem>>, vector<1x8x4xf32>
    %43 = vector.shape_cast %42 : vector<1x8x4xf32> to vector<8x4xf32>
    %cst_45 = arith.constant dense<0.000000e+00> : vector<8x16xf32>
    %44 = tpu.matmul %43, %33, %cst_45 {dimension_numbers = #tpu.dot_dimension_numbers<[1], [0], [0], [1], [0, 0, 1, 1], [], []>} : vector<8x4xf32>, vector<4x16xf32>, vector<8x16xf32> -> vector<8x16xf32>
    %c1_46 = arith.constant 1 : index
    %c0_47 = arith.constant 0 : index
    %c0_48 = arith.constant 0 : index
    %45 = vector.load %arg2[%c1_46, %c0_47, %c0_48] : memref<3x16x32xf32, #tpu.memory_space<vmem>>, vector<1x16x32xf32>
    %46 = vector.shape_cast %45 : vector<1x16x32xf32> to vector<16x32xf32>
    %cst_49 = arith.constant dense<0.000000e+00> : vector<8x32xf32>
    %47 = tpu.matmul %44, %46, %cst_49 {dimension_numbers = #tpu.dot_dimension_numbers<[1], [0], [0], [1], [0, 0, 1, 1], [], []>} : vector<8x16xf32>, vector<16x32xf32>, vector<8x32xf32> -> vector<8x32xf32>
    %48 = arith.addf %41, %47 : vector<8x32xf32>
    %c2_50 = arith.constant 2 : index
    %c0_51 = arith.constant 0 : index
    %c0_52 = arith.constant 0 : index
    %49 = vector.load %arg3[%c2_50, %c0_51, %c0_52] : memref<3x8x4xf32, #tpu.memory_space<vmem>>, vector<1x8x4xf32>
    %50 = vector.shape_cast %49 : vector<1x8x4xf32> to vector<8x4xf32>
    %cst_53 = arith.constant dense<0.000000e+00> : vector<8x16xf32>
    %51 = tpu.matmul %50, %33, %cst_53 {dimension_numbers = #tpu.dot_dimension_numbers<[1], [0], [0], [1], [0, 0, 1, 1], [], []>} : vector<8x4xf32>, vector<4x16xf32>, vector<8x16xf32> -> vector<8x16xf32>
    %c2_54 = arith.constant 2 : index
    %c0_55 = arith.constant 0 : index
    %c0_56 = arith.constant 0 : index
    %52 = vector.load %arg2[%c2_54, %c0_55, %c0_56] : memref<3x16x32xf32, #tpu.memory_space<vmem>>, vector<1x16x32xf32>
    %53 = vector.shape_cast %52 : vector<1x16x32xf32> to vector<16x32xf32>
    %cst_57 = arith.constant dense<0.000000e+00> : vector<8x32xf32>
    %54 = tpu.matmul %51, %53, %cst_57 {dimension_numbers = #tpu.dot_dimension_numbers<[1], [0], [0], [1], [0, 0, 1, 1], [], []>} : vector<8x16xf32>, vector<16x32xf32>, vector<8x32xf32> -> vector<8x32xf32>
    %55 = arith.addf %48, %54 : vector<8x32xf32>
    %56 = vector.broadcast %0 : vector<8x1xf32> to vector<8x32xf32>
    %57 = arith.addf %55, %56 : vector<8x32xf32>
    %cst_58 = arith.constant 0.000000e+00 : f32
    %58 = vector.broadcast %cst_58 : f32 to vector<8x32xf32>
    %59 = arith.maximumf %57, %58 : vector<8x32xf32>
    %c1_59 = arith.constant 1 : index
    %c0_60 = arith.constant 0 : index
    %c0_61 = arith.constant 0 : index
    %60 = vector.load %arg5[%c1_59, %c0_60, %c0_61] : memref<6x8x32xf32, #tpu.memory_space<vmem>>, vector<1x8x32xf32>
    %61 = vector.shape_cast %60 : vector<1x8x32xf32> to vector<8x32xf32>
    %62 = vector.shape_cast %59 : vector<8x32xf32> to vector<1x8x32xf32>
    tpu.vector_store %arg5[%c1_59, %c0_60, %c0_61], %62 {strides = array<i32>} : memref<6x8x32xf32, #tpu.memory_space<vmem>>, vector<1x8x32xf32>,
    %c2_62 = arith.constant 2 : index
    %c0_63 = arith.constant 0 : index
    %c0_64 = arith.constant 0 : index
    %63 = vector.load %arg1[%c2_62, %c0_63, %c0_64] : memref<6x4x16xf32, #tpu.memory_space<vmem>>, vector<1x4x16xf32>
    %64 = vector.shape_cast %63 : vector<1x4x16xf32> to vector<4x16xf32>
    %cst_65 = arith.constant 0.000000e+00 : f32
    %65 = vector.broadcast %cst_65 : f32 to vector<8x32xf32>
    %c0_66 = arith.constant 0 : index
    %c0_67 = arith.constant 0 : index
    %c0_68 = arith.constant 0 : index
    %66 = vector.load %arg3[%c0_66, %c0_67, %c0_68] : memref<3x8x4xf32, #tpu.memory_space<vmem>>, vector<1x8x4xf32>
    %67 = vector.shape_cast %66 : vector<1x8x4xf32> to vector<8x4xf32>
    %cst_69 = arith.constant dense<0.000000e+00> : vector<8x16xf32>
    %68 = tpu.matmul %67, %64, %cst_69 {dimension_numbers = #tpu.dot_dimension_numbers<[1], [0], [0], [1], [0, 0, 1, 1], [], []>} : vector<8x4xf32>, vector<4x16xf32>, vector<8x16xf32> -> vector<8x16xf32>
    %c0_70 = arith.constant 0 : index
    %c0_71 = arith.constant 0 : index
    %c0_72 = arith.constant 0 : index
    %69 = vector.load %arg2[%c0_70, %c0_71, %c0_72] : memref<3x16x32xf32, #tpu.memory_space<vmem>>, vector<1x16x32xf32>
    %70 = vector.shape_cast %69 : vector<1x16x32xf32> to vector<16x32xf32>
    %cst_73 = arith.constant dense<0.000000e+00> : vector<8x32xf32>
    %71 = tpu.matmul %68, %70, %cst_73 {dimension_numbers = #tpu.dot_dimension_numbers<[1], [0], [0], [1], [0, 0, 1, 1], [], []>} : vector<8x16xf32>, vector<16x32xf32>, vector<8x32xf32> -> vector<8x32xf32>
    %72 = arith.addf %65, %71 : vector<8x32xf32>
    %c1_74 = arith.constant 1 : index
    %c0_75 = arith.constant 0 : index
    %c0_76 = arith.constant 0 : index
    %73 = vector.load %arg3[%c1_74, %c0_75, %c0_76] : memref<3x8x4xf32, #tpu.memory_space<vmem>>, vector<1x8x4xf32>
    %74 = vector.shape_cast %73 : vector<1x8x4xf32> to vector<8x4xf32>
    %cst_77 = arith.constant dense<0.000000e+00> : vector<8x16xf32>
    %75 = tpu.matmul %74, %64, %cst_77 {dimension_numbers = #tpu.dot_dimension_numbers<[1], [0], [0], [1], [0, 0, 1, 1], [], []>} : vector<8x4xf32>, vector<4x16xf32>, vector<8x16xf32> -> vector<8x16xf32>
    %c1_78 = arith.constant 1 : index
    %c0_79 = arith.constant 0 : index
    %c0_80 = arith.constant 0 : index
    %76 = vector.load %arg2[%c1_78, %c0_79, %c0_80] : memref<3x16x32xf32, #tpu.memory_space<vmem>>, vector<1x16x32xf32>
    %77 = vector.shape_cast %76 : vector<1x16x32xf32> to vector<16x32xf32>
    %cst_81 = arith.constant dense<0.000000e+00> : vector<8x32xf32>
    %78 = tpu.matmul %75, %77, %cst_81 {dimension_numbers = #tpu.dot_dimension_numbers<[1], [0], [0], [1], [0, 0, 1, 1], [], []>} : vector<8x16xf32>, vector<16x32xf32>, vector<8x32xf32> -> vector<8x32xf32>
    %79 = arith.addf %72, %78 : vector<8x32xf32>
    %c2_82 = arith.constant 2 : index
    %c0_83 = arith.constant 0 : index
    %c0_84 = arith.constant 0 : index
    %80 = vector.load %arg3[%c2_82, %c0_83, %c0_84] : memref<3x8x4xf32, #tpu.memory_space<vmem>>, vector<1x8x4xf32>
    %81 = vector.shape_cast %80 : vector<1x8x4xf32> to vector<8x4xf32>
    %cst_85 = arith.constant dense<0.000000e+00> : vector<8x16xf32>
    %82 = tpu.matmul %81, %64, %cst_85 {dimension_numbers = #tpu.dot_dimension_numbers<[1], [0], [0], [1], [0, 0, 1, 1], [], []>} : vector<8x4xf32>, vector<4x16xf32>, vector<8x16xf32> -> vector<8x16xf32>
    %c2_86 = arith.constant 2 : index
    %c0_87 = arith.constant 0 : index
    %c0_88 = arith.constant 0 : index
    %83 = vector.load %arg2[%c2_86, %c0_87, %c0_88] : memref<3x16x32xf32, #tpu.memory_space<vmem>>, vector<1x16x32xf32>
    %84 = vector.shape_cast %83 : vector<1x16x32xf32> to vector<16x32xf32>
    %cst_89 = arith.constant dense<0.000000e+00> : vector<8x32xf32>
    %85 = tpu.matmul %82, %84, %cst_89 {dimension_numbers = #tpu.dot_dimension_numbers<[1], [0], [0], [1], [0, 0, 1, 1], [], []>} : vector<8x16xf32>, vector<16x32xf32>, vector<8x32xf32> -> vector<8x32xf32>
    %86 = arith.addf %79, %85 : vector<8x32xf32>
    %87 = vector.broadcast %0 : vector<8x1xf32> to vector<8x32xf32>
    %88 = arith.addf %86, %87 : vector<8x32xf32>
    %cst_90 = arith.constant 0.000000e+00 : f32
    %89 = vector.broadcast %cst_90 : f32 to vector<8x32xf32>
    %90 = arith.maximumf %88, %89 : vector<8x32xf32>
    %c2_91 = arith.constant 2 : index
    %c0_92 = arith.constant 0 : index
    %c0_93 = arith.constant 0 : index
    %91 = vector.load %arg5[%c2_91, %c0_92, %c0_93] : memref<6x8x32xf32, #tpu.memory_space<vmem>>, vector<1x8x32xf32>
    %92 = vector.shape_cast %91 : vector<1x8x32xf32> to vector<8x32xf32>
    %93 = vector.shape_cast %90 : vector<8x32xf32> to vector<1x8x32xf32>
    tpu.vector_store %arg5[%c2_91, %c0_92, %c0_93], %93 {strides = array<i32>} : memref<6x8x32xf32, #tpu.memory_space<vmem>>, vector<1x8x32xf32>,
    %c3 = arith.constant 3 : index
    %c0_94 = arith.constant 0 : index
    %c0_95 = arith.constant 0 : index
    %94 = vector.load %arg1[%c3, %c0_94, %c0_95] : memref<6x4x16xf32, #tpu.memory_space<vmem>>, vector<1x4x16xf32>
    %95 = vector.shape_cast %94 : vector<1x4x16xf32> to vector<4x16xf32>
    %cst_96 = arith.constant 0.000000e+00 : f32
    %96 = vector.broadcast %cst_96 : f32 to vector<8x32xf32>
    %c0_97 = arith.constant 0 : index
    %c0_98 = arith.constant 0 : index
    %c0_99 = arith.constant 0 : index
    %97 = vector.load %arg3[%c0_97, %c0_98, %c0_99] : memref<3x8x4xf32, #tpu.memory_space<vmem>>, vector<1x8x4xf32>
    %98 = vector.shape_cast %97 : vector<1x8x4xf32> to vector<8x4xf32>
    %cst_100 = arith.constant dense<0.000000e+00> : vector<8x16xf32>
    %99 = tpu.matmul %98, %95, %cst_100 {dimension_numbers = #tpu.dot_dimension_numbers<[1], [0], [0], [1], [0, 0, 1, 1], [], []>} : vector<8x4xf32>, vector<4x16xf32>, vector<8x16xf32> -> vector<8x16xf32>
    %c0_101 = arith.constant 0 : index
    %c0_102 = arith.constant 0 : index
    %c0_103 = arith.constant 0 : index
    %100 = vector.load %arg2[%c0_101, %c0_102, %c0_103] : memref<3x16x32xf32, #tpu.memory_space<vmem>>, vector<1x16x32xf32>
    %101 = vector.shape_cast %100 : vector<1x16x32xf32> to vector<16x32xf32>
    %cst_104 = arith.constant dense<0.000000e+00> : vector<8x32xf32>
    %102 = tpu.matmul %99, %101, %cst_104 {dimension_numbers = #tpu.dot_dimension_numbers<[1], [0], [0], [1], [0, 0, 1, 1], [], []>} : vector<8x16xf32>, vector<16x32xf32>, vector<8x32xf32> -> vector<8x32xf32>
    %103 = arith.addf %96, %102 : vector<8x32xf32>
    %c1_105 = arith.constant 1 : index
    %c0_106 = arith.constant 0 : index
    %c0_107 = arith.constant 0 : index
    %104 = vector.load %arg3[%c1_105, %c0_106, %c0_107] : memref<3x8x4xf32, #tpu.memory_space<vmem>>, vector<1x8x4xf32>
    %105 = vector.shape_cast %104 : vector<1x8x4xf32> to vector<8x4xf32>
    %cst_108 = arith.constant dense<0.000000e+00> : vector<8x16xf32>
    %106 = tpu.matmul %105, %95, %cst_108 {dimension_numbers = #tpu.dot_dimension_numbers<[1], [0], [0], [1], [0, 0, 1, 1], [], []>} : vector<8x4xf32>, vector<4x16xf32>, vector<8x16xf32> -> vector<8x16xf32>
    %c1_109 = arith.constant 1 : index
    %c0_110 = arith.constant 0 : index
    %c0_111 = arith.constant 0 : index
    %107 = vector.load %arg2[%c1_109, %c0_110, %c0_111] : memref<3x16x32xf32, #tpu.memory_space<vmem>>, vector<1x16x32xf32>
    %108 = vector.shape_cast %107 : vector<1x16x32xf32> to vector<16x32xf32>
    %cst_112 = arith.constant dense<0.000000e+00> : vector<8x32xf32>
    %109 = tpu.matmul %106, %108, %cst_112 {dimension_numbers = #tpu.dot_dimension_numbers<[1], [0], [0], [1], [0, 0, 1, 1], [], []>} : vector<8x16xf32>, vector<16x32xf32>, vector<8x32xf32> -> vector<8x32xf32>
    %110 = arith.addf %103, %109 : vector<8x32xf32>
    %c2_113 = arith.constant 2 : index
    %c0_114 = arith.constant 0 : index
    %c0_115 = arith.constant 0 : index
    %111 = vector.load %arg3[%c2_113, %c0_114, %c0_115] : memref<3x8x4xf32, #tpu.memory_space<vmem>>, vector<1x8x4xf32>
    %112 = vector.shape_cast %111 : vector<1x8x4xf32> to vector<8x4xf32>
    %cst_116 = arith.constant dense<0.000000e+00> : vector<8x16xf32>
    %113 = tpu.matmul %112, %95, %cst_116 {dimension_numbers = #tpu.dot_dimension_numbers<[1], [0], [0], [1], [0, 0, 1, 1], [], []>} : vector<8x4xf32>, vector<4x16xf32>, vector<8x16xf32> -> vector<8x16xf32>
    %c2_117 = arith.constant 2 : index
    %c0_118 = arith.constant 0 : index
    %c0_119 = arith.constant 0 : index
    %114 = vector.load %arg2[%c2_117, %c0_118, %c0_119] : memref<3x16x32xf32, #tpu.memory_space<vmem>>, vector<1x16x32xf32>
    %115 = vector.shape_cast %114 : vector<1x16x32xf32> to vector<16x32xf32>
    %cst_120 = arith.constant dense<0.000000e+00> : vector<8x32xf32>
    %116 = tpu.matmul %113, %115, %cst_120 {dimension_numbers = #tpu.dot_dimension_numbers<[1], [0], [0], [1], [0, 0, 1, 1], [], []>} : vector<8x16xf32>, vector<16x32xf32>, vector<8x32xf32> -> vector<8x32xf32>
    %117 = arith.addf %110, %116 : vector<8x32xf32>
    %118 = vector.broadcast %0 : vector<8x1xf32> to vector<8x32xf32>
    %119 = arith.addf %117, %118 : vector<8x32xf32>
    %cst_121 = arith.constant 0.000000e+00 : f32
    %120 = vector.broadcast %cst_121 : f32 to vector<8x32xf32>
    %121 = arith.maximumf %119, %120 : vector<8x32xf32>
    %c3_122 = arith.constant 3 : index
    %c0_123 = arith.constant 0 : index
    %c0_124 = arith.constant 0 : index
    %122 = vector.load %arg5[%c3_122, %c0_123, %c0_124] : memref<6x8x32xf32, #tpu.memory_space<vmem>>, vector<1x8x32xf32>
    %123 = vector.shape_cast %122 : vector<1x8x32xf32> to vector<8x32xf32>
    %124 = vector.shape_cast %121 : vector<8x32xf32> to vector<1x8x32xf32>
    tpu.vector_store %arg5[%c3_122, %c0_123, %c0_124], %124 {strides = array<i32>} : memref<6x8x32xf32, #tpu.memory_space<vmem>>, vector<1x8x32xf32>,
    %c4 = arith.constant 4 : index
    %c0_125 = arith.constant 0 : index
    %c0_126 = arith.constant 0 : index
    %125 = vector.load %arg1[%c4, %c0_125, %c0_126] : memref<6x4x16xf32, #tpu.memory_space<vmem>>, vector<1x4x16xf32>
    %126 = vector.shape_cast %125 : vector<1x4x16xf32> to vector<4x16xf32>
    %cst_127 = arith.constant 0.000000e+00 : f32
    %127 = vector.broadcast %cst_127 : f32 to vector<8x32xf32>
    %c0_128 = arith.constant 0 : index
    %c0_129 = arith.constant 0 : index
    %c0_130 = arith.constant 0 : index
    %128 = vector.load %arg3[%c0_128, %c0_129, %c0_130] : memref<3x8x4xf32, #tpu.memory_space<vmem>>, vector<1x8x4xf32>
    %129 = vector.shape_cast %128 : vector<1x8x4xf32> to vector<8x4xf32>
    %cst_131 = arith.constant dense<0.000000e+00> : vector<8x16xf32>
    %130 = tpu.matmul %129, %126, %cst_131 {dimension_numbers = #tpu.dot_dimension_numbers<[1], [0], [0], [1], [0, 0, 1, 1], [], []>} : vector<8x4xf32>, vector<4x16xf32>, vector<8x16xf32> -> vector<8x16xf32>
    %c0_132 = arith.constant 0 : index
    %c0_133 = arith.constant 0 : index
    %c0_134 = arith.constant 0 : index
    %131 = vector.load %arg2[%c0_132, %c0_133, %c0_134] : memref<3x16x32xf32, #tpu.memory_space<vmem>>, vector<1x16x32xf32>
    %132 = vector.shape_cast %131 : vector<1x16x32xf32> to vector<16x32xf32>
    %cst_135 = arith.constant dense<0.000000e+00> : vector<8x32xf32>
    %133 = tpu.matmul %130, %132, %cst_135 {dimension_numbers = #tpu.dot_dimension_numbers<[1], [0], [0], [1], [0, 0, 1, 1], [], []>} : vector<8x16xf32>, vector<16x32xf32>, vector<8x32xf32> -> vector<8x32xf32>
    %134 = arith.addf %127, %133 : vector<8x32xf32>
    %c1_136 = arith.constant 1 : index
    %c0_137 = arith.constant 0 : index
    %c0_138 = arith.constant 0 : index
    %135 = vector.load %arg3[%c1_136, %c0_137, %c0_138] : memref<3x8x4xf32, #tpu.memory_space<vmem>>, vector<1x8x4xf32>
    %136 = vector.shape_cast %135 : vector<1x8x4xf32> to vector<8x4xf32>
    %cst_139 = arith.constant dense<0.000000e+00> : vector<8x16xf32>
    %137 = tpu.matmul %136, %126, %cst_139 {dimension_numbers = #tpu.dot_dimension_numbers<[1], [0], [0], [1], [0, 0, 1, 1], [], []>} : vector<8x4xf32>, vector<4x16xf32>, vector<8x16xf32> -> vector<8x16xf32>
    %c1_140 = arith.constant 1 : index
    %c0_141 = arith.constant 0 : index
    %c0_142 = arith.constant 0 : index
    %138 = vector.load %arg2[%c1_140, %c0_141, %c0_142] : memref<3x16x32xf32, #tpu.memory_space<vmem>>, vector<1x16x32xf32>
    %139 = vector.shape_cast %138 : vector<1x16x32xf32> to vector<16x32xf32>
    %cst_143 = arith.constant dense<0.000000e+00> : vector<8x32xf32>
    %140 = tpu.matmul %137, %139, %cst_143 {dimension_numbers = #tpu.dot_dimension_numbers<[1], [0], [0], [1], [0, 0, 1, 1], [], []>} : vector<8x16xf32>, vector<16x32xf32>, vector<8x32xf32> -> vector<8x32xf32>
    %141 = arith.addf %134, %140 : vector<8x32xf32>
    %c2_144 = arith.constant 2 : index
    %c0_145 = arith.constant 0 : index
    %c0_146 = arith.constant 0 : index
    %142 = vector.load %arg3[%c2_144, %c0_145, %c0_146] : memref<3x8x4xf32, #tpu.memory_space<vmem>>, vector<1x8x4xf32>
    %143 = vector.shape_cast %142 : vector<1x8x4xf32> to vector<8x4xf32>
    %cst_147 = arith.constant dense<0.000000e+00> : vector<8x16xf32>
    %144 = tpu.matmul %143, %126, %cst_147 {dimension_numbers = #tpu.dot_dimension_numbers<[1], [0], [0], [1], [0, 0, 1, 1], [], []>} : vector<8x4xf32>, vector<4x16xf32>, vector<8x16xf32> -> vector<8x16xf32>
    %c2_148 = arith.constant 2 : index
    %c0_149 = arith.constant 0 : index
    %c0_150 = arith.constant 0 : index
    %145 = vector.load %arg2[%c2_148, %c0_149, %c0_150] : memref<3x16x32xf32, #tpu.memory_space<vmem>>, vector<1x16x32xf32>
    %146 = vector.shape_cast %145 : vector<1x16x32xf32> to vector<16x32xf32>
    %cst_151 = arith.constant dense<0.000000e+00> : vector<8x32xf32>
    %147 = tpu.matmul %144, %146, %cst_151 {dimension_numbers = #tpu.dot_dimension_numbers<[1], [0], [0], [1], [0, 0, 1, 1], [], []>} : vector<8x16xf32>, vector<16x32xf32>, vector<8x32xf32> -> vector<8x32xf32>
    %148 = arith.addf %141, %147 : vector<8x32xf32>
    %149 = vector.broadcast %0 : vector<8x1xf32> to vector<8x32xf32>
    %150 = arith.addf %148, %149 : vector<8x32xf32>
    %cst_152 = arith.constant 0.000000e+00 : f32
    %151 = vector.broadcast %cst_152 : f32 to vector<8x32xf32>
    %152 = arith.maximumf %150, %151 : vector<8x32xf32>
    %c4_153 = arith.constant 4 : index
    %c0_154 = arith.constant 0 : index
    %c0_155 = arith.constant 0 : index
    %153 = vector.load %arg5[%c4_153, %c0_154, %c0_155] : memref<6x8x32xf32, #tpu.memory_space<vmem>>, vector<1x8x32xf32>
    %154 = vector.shape_cast %153 : vector<1x8x32xf32> to vector<8x32xf32>
    %155 = vector.shape_cast %152 : vector<8x32xf32> to vector<1x8x32xf32>
    tpu.vector_store %arg5[%c4_153, %c0_154, %c0_155], %155 {strides = array<i32>} : memref<6x8x32xf32, #tpu.memory_space<vmem>>, vector<1x8x32xf32>,
    %c5 = arith.constant 5 : index
    %c0_156 = arith.constant 0 : index
    %c0_157 = arith.constant 0 : index
    %156 = vector.load %arg1[%c5, %c0_156, %c0_157] : memref<6x4x16xf32, #tpu.memory_space<vmem>>, vector<1x4x16xf32>
    %157 = vector.shape_cast %156 : vector<1x4x16xf32> to vector<4x16xf32>
    %cst_158 = arith.constant 0.000000e+00 : f32
    %158 = vector.broadcast %cst_158 : f32 to vector<8x32xf32>
    %c0_159 = arith.constant 0 : index
    %c0_160 = arith.constant 0 : index
    %c0_161 = arith.constant 0 : index
    %159 = vector.load %arg3[%c0_159, %c0_160, %c0_161] : memref<3x8x4xf32, #tpu.memory_space<vmem>>, vector<1x8x4xf32>
    %160 = vector.shape_cast %159 : vector<1x8x4xf32> to vector<8x4xf32>
    %cst_162 = arith.constant dense<0.000000e+00> : vector<8x16xf32>
    %161 = tpu.matmul %160, %157, %cst_162 {dimension_numbers = #tpu.dot_dimension_numbers<[1], [0], [0], [1], [0, 0, 1, 1], [], []>} : vector<8x4xf32>, vector<4x16xf32>, vector<8x16xf32> -> vector<8x16xf32>
    %c0_163 = arith.constant 0 : index
    %c0_164 = arith.constant 0 : index
    %c0_165 = arith.constant 0 : index
    %162 = vector.load %arg2[%c0_163, %c0_164, %c0_165] : memref<3x16x32xf32, #tpu.memory_space<vmem>>, vector<1x16x32xf32>
    %163 = vector.shape_cast %162 : vector<1x16x32xf32> to vector<16x32xf32>
    %cst_166 = arith.constant dense<0.000000e+00> : vector<8x32xf32>
    %164 = tpu.matmul %161, %163, %cst_166 {dimension_numbers = #tpu.dot_dimension_numbers<[1], [0], [0], [1], [0, 0, 1, 1], [], []>} : vector<8x16xf32>, vector<16x32xf32>, vector<8x32xf32> -> vector<8x32xf32>
    %165 = arith.addf %158, %164 : vector<8x32xf32>
    %c1_167 = arith.constant 1 : index
    %c0_168 = arith.constant 0 : index
    %c0_169 = arith.constant 0 : index
    %166 = vector.load %arg3[%c1_167, %c0_168, %c0_169] : memref<3x8x4xf32, #tpu.memory_space<vmem>>, vector<1x8x4xf32>
    %167 = vector.shape_cast %166 : vector<1x8x4xf32> to vector<8x4xf32>
    %cst_170 = arith.constant dense<0.000000e+00> : vector<8x16xf32>
    %168 = tpu.matmul %167, %157, %cst_170 {dimension_numbers = #tpu.dot_dimension_numbers<[1], [0], [0], [1], [0, 0, 1, 1], [], []>} : vector<8x4xf32>, vector<4x16xf32>, vector<8x16xf32> -> vector<8x16xf32>
    %c1_171 = arith.constant 1 : index
    %c0_172 = arith.constant 0 : index
    %c0_173 = arith.constant 0 : index
    %169 = vector.load %arg2[%c1_171, %c0_172, %c0_173] : memref<3x16x32xf32, #tpu.memory_space<vmem>>, vector<1x16x32xf32>
    %170 = vector.shape_cast %169 : vector<1x16x32xf32> to vector<16x32xf32>
    %cst_174 = arith.constant dense<0.000000e+00> : vector<8x32xf32>
    %171 = tpu.matmul %168, %170, %cst_174 {dimension_numbers = #tpu.dot_dimension_numbers<[1], [0], [0], [1], [0, 0, 1, 1], [], []>} : vector<8x16xf32>, vector<16x32xf32>, vector<8x32xf32> -> vector<8x32xf32>
    %172 = arith.addf %165, %171 : vector<8x32xf32>
    %c2_175 = arith.constant 2 : index
    %c0_176 = arith.constant 0 : index
    %c0_177 = arith.constant 0 : index
    %173 = vector.load %arg3[%c2_175, %c0_176, %c0_177] : memref<3x8x4xf32, #tpu.memory_space<vmem>>, vector<1x8x4xf32>
    %174 = vector.shape_cast %173 : vector<1x8x4xf32> to vector<8x4xf32>
    %cst_178 = arith.constant dense<0.000000e+00> : vector<8x16xf32>
    %175 = tpu.matmul %174, %157, %cst_178 {dimension_numbers = #tpu.dot_dimension_numbers<[1], [0], [0], [1], [0, 0, 1, 1], [], []>} : vector<8x4xf32>, vector<4x16xf32>, vector<8x16xf32> -> vector<8x16xf32>
    %c2_179 = arith.constant 2 : index
    %c0_180 = arith.constant 0 : index
    %c0_181 = arith.constant 0 : index
    %176 = vector.load %arg2[%c2_179, %c0_180, %c0_181] : memref<3x16x32xf32, #tpu.memory_space<vmem>>, vector<1x16x32xf32>
    %177 = vector.shape_cast %176 : vector<1x16x32xf32> to vector<16x32xf32>
    %cst_182 = arith.constant dense<0.000000e+00> : vector<8x32xf32>
    %178 = tpu.matmul %175, %177, %cst_182 {dimension_numbers = #tpu.dot_dimension_numbers<[1], [0], [0], [1], [0, 0, 1, 1], [], []>} : vector<8x16xf32>, vector<16x32xf32>, vector<8x32xf32> -> vector<8x32xf32>
    %179 = arith.addf %172, %178 : vector<8x32xf32>
    %180 = vector.broadcast %0 : vector<8x1xf32> to vector<8x32xf32>
    %181 = arith.addf %179, %180 : vector<8x32xf32>
    %cst_183 = arith.constant 0.000000e+00 : f32
    %182 = vector.broadcast %cst_183 : f32 to vector<8x32xf32>
    %183 = arith.maximumf %181, %182 : vector<8x32xf32>
    %c5_184 = arith.constant 5 : index
    %c0_185 = arith.constant 0 : index
    %c0_186 = arith.constant 0 : index
    %184 = vector.load %arg5[%c5_184, %c0_185, %c0_186] : memref<6x8x32xf32, #tpu.memory_space<vmem>>, vector<1x8x32xf32>
    %185 = vector.shape_cast %184 : vector<1x8x32xf32> to vector<8x32xf32>
    %186 = vector.shape_cast %183 : vector<8x32xf32> to vector<1x8x32xf32>
    tpu.vector_store %arg5[%c5_184, %c0_185, %c0_186], %186 {strides = array<i32>} : memref<6x8x32xf32, #tpu.memory_space<vmem>>, vector<1x8x32xf32>,
    return
  }
  func.func @transform_0(%arg0: i32) -> (i32, i32, i32) {
    %c0_i32 = arith.constant 0 : i32
    %c0_i32_0 = arith.constant 0 : i32
    %c0_i32_1 = arith.constant 0 : i32
    return %arg0, %c0_i32, %c0_i32_0 : i32, i32, i32
  }
  func.func @transform_1(%arg0: i32) -> (i32, i32, i32) {
    %c0_i32 = arith.constant 0 : i32
    %c0_i32_0 = arith.constant 0 : i32
    %c0_i32_1 = arith.constant 0 : i32
    %c0_i32_2 = arith.constant 0 : i32
    return %c0_i32, %c0_i32_0, %c0_i32_1 : i32, i32, i32
  }
  func.func @transform_2(%arg0: i32) -> (i32, i32, i32) {
    %c0_i32 = arith.constant 0 : i32
    %c0_i32_0 = arith.constant 0 : i32
    %c0_i32_1 = arith.constant 0 : i32
    %c0_i32_2 = arith.constant 0 : i32
    return %c0_i32, %c0_i32_0, %c0_i32_1 : i32, i32, i32
  }
  func.func @transform_3(%arg0: i32) -> (i32, i32) {
    %c0_i32 = arith.constant 0 : i32
    %c0_i32_0 = arith.constant 0 : i32
    %c0_i32_1 = arith.constant 0 : i32
    return %c0_i32, %c0_i32_0 : i32, i32
  }
  func.func @transform_4(%arg0: i32) -> (i32, i32, i32) {
    %c0_i32 = arith.constant 0 : i32
    %c0_i32_0 = arith.constant 0 : i32
    %c0_i32_1 = arith.constant 0 : i32
    return %arg0, %c0_i32, %c0_i32_0 : i32, i32, i32
  }
}

</mosaic_0001>

<llo_original>
// kernel: tpu_custom_call.1
$region0: #{tpu_custom_call.1}
  #allocation0 [shape = 'u32[]', space=smem, size = 0x4, offset = 0x4, fixed_abs, tag = 'smem constant byte address 0x4 - core index']
  #allocation1 [shape = 'u32[144,128]{1,0:T(1,128)}', space=vmem, size = 0x12000, scoped, tag = 'internal scratch']
  %s0 = inlined_call_operand.hbm [shape: f32[6,4,16], index: 0, kind: input, shape index: {}]
  %s1 = inlined_call_operand.vmem [shape: f32[3,16,32], index: 1, kind: input, shape index: {}]
  %s2 = inlined_call_operand.vmem [shape: f32[3,8,4], index: 2, kind: input, shape index: {}]
  %s3 = inlined_call_operand.vmem [shape: f32[8,1], index: 3, kind: input, shape index: {}]
  %s4 = inlined_call_operand.hbm [shape: f32[6,8,32], index: 4, kind: output, shape index: {}]
  %s5 = sld [smem:[#allocation0]]
  $region30: #{tpu_custom_call.1} parent=0
    _
  %s7 = ssub.s32 1, %s5
  %s8 = scalar_select 0, %s7, %s5
  $region1: #{tpu_custom_call.1} parent=0
    #allocation2 [shape = 'u8[12288]{0}', space=vmem, size = 0x3000, scoped, tag = 'input window, operand 0, single buffered']
    #allocation3 [shape = 's32[1]{0}', space=sflag, size = 0x4, scoped, tag = 'scoped memory for tpu_custom_call.1']
    #allocation4 [shape = 's32[1]{0}', space=sflag, size = 0x4, scoped, tag = 'scoped memory for tpu_custom_call.1']
    #allocation5 [shape = 'u8[24576]{0}', space=vmem, size = 0x6000, scoped, tag = 'output window, operand 0, single buffered']
    %9 = vsyncpa [#allocation3], 0
    %10 = vsyncpa [#allocation4], 0
    // Predicated region
    $region2: #{tpu_custom_call.1} parent=1 // pred_check
      _
    $region3: #{tpu_custom_call.1} parent=1 // pred_check_branch
      %12 = sbr.rel (0) target = $region5
    $region4: #{tpu_custom_call.1} parent=1 // pred_region
      %s14 = ssub.s32 384, 384
      %15 = vsyncadd [#allocation3], %s14
      %s16 = sshll.u32 [#allocation2], 4
      %s17 = int_to_ptr.vmem [resolvable:$true] %s16
      %22 = dma.hbm_to_vmem [thread:$0]  %s0, 384, %s17, [#allocation3], 64, 64, 4
    $region5: #{tpu_custom_call.1} parent=1 // pred_fallthru
      _
    // Predicated region
    $region6: #{tpu_custom_call.1} parent=1 // pred_check
      _
    $region7: #{tpu_custom_call.1} parent=1 // pred_check_branch
      %24 = sbr.rel (0) target = $region9
    $region8: #{tpu_custom_call.1} parent=1 // pred_region
      _
    $region9: #{tpu_custom_call.1} parent=1 // pred_fallthru
      _
    // Predicated region
    $region10: #{tpu_custom_call.1} parent=1 // pred_check
      _
    $region11: #{tpu_custom_call.1} parent=1 // pred_check_branch
      %26 = sbr.rel (0) target = $region13
    $region12: #{tpu_custom_call.1} parent=1 // pred_region
      _
    $region13: #{tpu_custom_call.1} parent=1 // pred_fallthru
      _
    // Predicated region
    $region14: #{tpu_custom_call.1} parent=1 // pred_check
      _
    $region15: #{tpu_custom_call.1} parent=1 // pred_check_branch
      %28 = sbr.rel (0) target = $region17
    $region16: #{tpu_custom_call.1} parent=1 // pred_region
      _
    $region17: #{tpu_custom_call.1} parent=1 // pred_fallthru
      _
    // Predicated region
    $region18: #{tpu_custom_call.1} parent=1 // pred_check
      _
    $region19: #{tpu_custom_call.1} parent=1 // pred_check_branch
      %30 = sbr.rel (0) target = $region21
    $region20: #{tpu_custom_call.1} parent=1 // pred_region
      %31 = dma.done [#allocation3], 384
    $region21: #{tpu_custom_call.1} parent=1 // pred_fallthru
      _
    %v32 = vld [vmem:[%s3] sm:$0xff]
    %v33 = vld [vmem:[#allocation2] sm:$0xf]
    %v34 = vld [vmem:[%s2] sm:$0xff]
    %vm35 = vcmask 31744
    %v37 = vsel %vm35, %v34, 0
    %vm39 = vcmask 1043456
    %v41 = vsel %vm39, %v33, 0
    %43 = vmatprep.subr.mxu0 0.0
    %44 = vmatpush1.msra.mxu0 %v41
    %45 = vmatprep.subr.mxu0 0.0
    %46 = vmatpush1.msra.mxu0 0.0
    %47 = vmatprep.subr.mxu0 0.0
    %48 = vmatpush1.msra.mxu0 0.0
    %49 = vmatprep.subr.mxu0 0.0
    %50 = vmatpush1.msra.mxu0 0.0
    %51 = vmatprep.subr.mxu0 0.0
    %52 = vmatpush1.msra.mxu0 0.0
    %53 = vmatprep.subr.mxu0 0.0
    %54 = vmatpush1.msra.mxu0 0.0
    %55 = vmatprep.subr.mxu0 0.0
    %56 = vmatpush1.msra.mxu0 0.0
    %57 = vmatprep.subr.mxu0 0.0
    %58 = vmatpush1.msra.mxu0 0.0
    %59 = vmatprep.subr.mxu0 0.0
    %60 = vmatpush1.msra.mxu0 0.0
    %61 = vmatprep.subr.mxu0 0.0
    %62 = vmatpush1.msra.mxu0 0.0
    %63 = vmatprep.subr.mxu0 0.0
    %64 = vmatpush1.msra.mxu0 0.0
    %65 = vmatprep.subr.mxu0 0.0
    %66 = vmatpush1.msra.mxu0 0.0
    %67 = vmatprep.subr.mxu0 0.0
    %68 = vmatpush1.msra.mxu0 0.0
    %69 = vmatprep.subr.mxu0 0.0
    %70 = vmatpush1.msra.mxu0 0.0
    %71 = vmatprep.subr.mxu0 0.0
    %72 = vmatpush1.msra.mxu0 0.0
    %73 = vmatprep.subr.mxu0 0.0
    %74 = vmatpush1.msra.mxu0 0.0
    %75 = vmatprep.subr.mxu0 0.0
    %76 = vmatpush1.msra.mxu0 0.0
    %77 = vmatprep.subr.mxu0 0.0
    %78 = vmatpush1.msra.mxu0 0.0
    %79 = vmatprep.subr.mxu0 0.0
    %80 = vmatpush1.msra.mxu0 0.0
    %81 = vmatprep.subr.mxu0 0.0
    %82 = vmatpush1.msra.mxu0 0.0
    %83 = vmatprep.subr.mxu0 0.0
    %84 = vmatpush1.msra.mxu0 0.0
    %85 = vmatprep.subr.mxu0 0.0
    %86 = vmatpush1.msra.mxu0 0.0
    %87 = vmatprep.subr.mxu0 0.0
    %88 = vmatpush1.msra.mxu0 0.0
    %89 = vmatprep.subr.mxu0 0.0
    %90 = vmatpush1.msra.mxu0 0.0
    %91 = vmatprep.subr.mxu0 0.0
    %92 = vmatpush1.msra.mxu0 0.0
    %93 = vmatprep.subr.mxu0 0.0
    %94 = vmatpush1.msra.mxu0 0.0
    %95 = vmatprep.subr.mxu0 0.0
    %96 = vmatpush1.msra.mxu0 0.0
    %97 = vmatprep.subr.mxu0 0.0
    %98 = vmatpush1.msra.mxu0 0.0
    %99 = vmatprep.subr.mxu0 0.0
    %100 = vmatpush1.msra.mxu0 0.0
    %101 = vmatprep.subr.mxu0 0.0
    %102 = vmatpush1.msra.mxu0 0.0
    %103 = vmatprep.subr.mxu0 0.0
    %104 = vmatpush1.msra.mxu0 0.0
    %105 = vmatprep.subr.mxu0 0.0
    %106 = vmatpush1.msra.mxu0 0.0
    %107 = vmatprep.mubr.f32.mxu0 0.0
    %108 = vmatmul.mubr.f32.gmra.mrb[0].mxu0 %v37
    %v109 = vpop.f32.mrb[0].mxu0
    %v110 = vadd.f32 0.0, %v109
    %v111 = vpop.f32.mrb[0].mxu0
    %112 = vdwg.mxu0
    %v113 = vld [vmem:[%s1] sm:$0xff]
    %v114 = vld [vmem:[%s1 + $0x8] sm:$0xff]
    %s115 = scalar_lea.vmem %s2, 8
    %v116 = vld [vmem:[%s115] sm:$0xff]
    %v118 = vsel %vm35, %v116, 0
    %120 = vmatprep.subr.mxu0 0.0
    %121 = vmatpush1.msra.mxu0 %v41
    %122 = vmatprep.subr.mxu0 0.0
    %123 = vmatpush1.msra.mxu0 0.0
    %124 = vmatprep.subr.mxu0 0.0
    %125 = vmatpush1.msra.mxu0 0.0
    %126 = vmatprep.subr.mxu0 0.0
    %127 = vmatpush1.msra.mxu0 0.0
    %128 = vmatprep.subr.mxu0 0.0
    %129 = vmatpush1.msra.mxu0 0.0
    %130 = vmatprep.subr.mxu0 0.0
    %131 = vmatpush1.msra.mxu0 0.0
    %132 = vmatprep.subr.mxu0 0.0
    %133 = vmatpush1.msra.mxu0 0.0
    %134 = vmatprep.subr.mxu0 0.0
    %135 = vmatpush1.msra.mxu0 0.0
    %136 = vmatprep.subr.mxu0 0.0
    %137 = vmatpush1.msra.mxu0 0.0
    %138 = vmatprep.subr.mxu0 0.0
    %139 = vmatpush1.msra.mxu0 0.0
    %140 = vmatprep.subr.mxu0 0.0
    %141 = vmatpush1.msra.mxu0 0.0
    %142 = vmatprep.subr.mxu0 0.0
    %143 = vmatpush1.msra.mxu0 0.0
    %144 = vmatprep.subr.mxu0 0.0
    %145 = vmatpush1.msra.mxu0 0.0
    %146 = vmatprep.subr.mxu0 0.0
    %147 = vmatpush1.msra.mxu0 0.0
    %148 = vmatprep.subr.mxu0 0.0
    %149 = vmatpush1.msra.mxu0 0.0
    %150 = vmatprep.subr.mxu0 0.0
    %151 = vmatpush1.msra.mxu0 0.0
    %152 = vmatprep.subr.mxu0 0.0
    %153 = vmatpush1.msra.mxu0 0.0
    %154 = vmatprep.subr.mxu0 0.0
    %155 = vmatpush1.msra.mxu0 0.0
    %156 = vmatprep.subr.mxu0 0.0
    %157 = vmatpush1.msra.mxu0 0.0
    %158 = vmatprep.subr.mxu0 0.0
    %159 = vmatpush1.msra.mxu0 0.0
    %160 = vmatprep.subr.mxu0 0.0
    %161 = vmatpush1.msra.mxu0 0.0
    %162 = vmatprep.subr.mxu0 0.0
    %163 = vmatpush1.msra.mxu0 0.0
    %164 = vmatprep.subr.mxu0 0.0
    %165 = vmatpush1.msra.mxu0 0.0
    %166 = vmatprep.subr.mxu0 0.0
    %167 = vmatpush1.msra.mxu0 0.0
    %168 = vmatprep.subr.mxu0 0.0
    %169 = vmatpush1.msra.mxu0 0.0
    %170 = vmatprep.subr.mxu0 0.0
    %171 = vmatpush1.msra.mxu0 0.0
    %172 = vmatprep.subr.mxu0 0.0
    %173 = vmatpush1.msra.mxu0 0.0
    %174 = vmatprep.subr.mxu0 0.0
    %175 = vmatpush1.msra.mxu0 0.0
    %176 = vmatprep.subr.mxu0 0.0
    %177 = vmatpush1.msra.mxu0 0.0
    %178 = vmatprep.subr.mxu0 0.0
    %179 = vmatpush1.msra.mxu0 0.0
    %180 = vmatprep.subr.mxu0 0.0
    %181 = vmatpush1.msra.mxu0 0.0
    %182 = vmatprep.subr.mxu0 0.0
    %183 = vmatpush1.msra.mxu0 0.0
    %184 = vmatprep.mubr.f32.mxu0 0.0
    %185 = vmatmul.mubr.f32.gmra.mrb[0].mxu0 %v118
    %v186 = vpop.f32.mrb[0].mxu0
    %v187 = vadd.f32 0.0, %v186
    %v188 = vpop.f32.mrb[0].mxu0
    %189 = vdwg.mxu0
    %s190 = scalar_lea.vmem %s1, 16
    %v191 = vld [vmem:[%s190] sm:$0xff]
    %v192 = vld [vmem:[%s190 + $0x8] sm:$0xff]
    %vm193 = vcmask 130048
    %v195 = vsel %vm193, %v187, 0
    %197 = vmatprep.subr.mxu0 0.0
    %198 = vmatpush1.msra.mxu0 %v191
    %199 = vmatprep.subr.mxu0 0.0
    %200 = vmatpush1.msra.mxu0 %v192
    %201 = vmatprep.subr.mxu0 0.0
    %202 = vmatpush1.msra.mxu0 0.0
    %203 = vmatprep.subr.mxu0 0.0
    %204 = vmatpush1.msra.mxu0 0.0
    %205 = vmatprep.subr.mxu0 0.0
    %206 = vmatpush1.msra.mxu0 0.0
    %207 = vmatprep.subr.mxu0 0.0
    %208 = vmatpush1.msra.mxu0 0.0
    %209 = vmatprep.subr.mxu0 0.0
    %210 = vmatpush1.msra.mxu0 0.0
    %211 = vmatprep.subr.mxu0 0.0
    %212 = vmatpush1.msra.mxu0 0.0
    %213 = vmatprep.subr.mxu0 0.0
    %214 = vmatpush1.msra.mxu0 0.0
    %215 = vmatprep.subr.mxu0 0.0
    %216 = vmatpush1.msra.mxu0 0.0
    %217 = vmatprep.subr.mxu0 0.0
    %218 = vmatpush1.msra.mxu0 0.0
    %219 = vmatprep.subr.mxu0 0.0
    %220 = vmatpush1.msra.mxu0 0.0
    %221 = vmatprep.subr.mxu0 0.0
    %222 = vmatpush1.msra.mxu0 0.0
    %223 = vmatprep.subr.mxu0 0.0
    %224 = vmatpush1.msra.mxu0 0.0
    %225 = vmatprep.subr.mxu0 0.0
    %226 = vmatpush1.msra.mxu0 0.0
    %227 = vmatprep.subr.mxu0 0.0
    %228 = vmatpush1.msra.mxu0 0.0
    %229 = vmatprep.subr.mxu0 0.0
    %230 = vmatpush1.msra.mxu0 0.0
    %231 = vmatprep.subr.mxu0 0.0
    %232 = vmatpush1.msra.mxu0 0.0
    %233 = vmatprep.subr.mxu0 0.0
    %234 = vmatpush1.msra.mxu0 0.0
    %235 = vmatprep.subr.mxu0 0.0
    %236 = vmatpush1.msra.mxu0 0.0
    %237 = vmatprep.subr.mxu0 0.0
    %238 = vmatpush1.msra.mxu0 0.0
    %239 = vmatprep.subr.mxu0 0.0
    %240 = vmatpush1.msra.mxu0 0.0
    %241 = vmatprep.subr.mxu0 0.0
    %242 = vmatpush1.msra.mxu0 0.0
    %243 = vmatprep.subr.mxu0 0.0
    %244 = vmatpush1.msra.mxu0 0.0
    %245 = vmatprep.subr.mxu0 0.0
    %246 = vmatpush1.msra.mxu0 0.0
    %247 = vmatprep.subr.mxu0 0.0
    %248 = vmatpush1.msra.mxu0 0.0
    %249 = vmatprep.subr.mxu0 0.0
    %250 = vmatpush1.msra.mxu0 0.0
    %251 = vmatprep.subr.mxu0 0.0
    %252 = vmatpush1.msra.mxu0 0.0
    %253 = vmatprep.subr.mxu0 0.0
    %254 = vmatpush1.msra.mxu0 0.0
    %255 = vmatprep.subr.mxu0 0.0
    %256 = vmatpush1.msra.mxu0 0.0
    %257 = vmatprep.subr.mxu0 0.0
    %258 = vmatpush1.msra.mxu0 0.0
    %259 = vmatprep.subr.mxu0 0.0
    %260 = vmatpush1.msra.mxu0 0.0
    %261 = vmatprep.mubr.f32.mxu0 0.0
    %262 = vmatmul.mubr.f32.gmra.mrb[0].mxu0 %v195
    %v263 = vpop.f32.mrb[0].mxu0
    %v264 = vadd.f32 0.0, %v263
    %v265 = vpop.f32.mrb[0].mxu0
    %266 = vdwg.mxu0
    %v268 = vsel %vm193, %v110, 0
    %270 = vmatprep.subr.mxu0 0.0
    %271 = vmatpush1.msra.mxu0 %v113
    %272 = vmatprep.subr.mxu0 0.0
    %273 = vmatpush1.msra.mxu0 %v114
    %274 = vmatprep.subr.mxu0 0.0
    %275 = vmatpush1.msra.mxu0 0.0
    %276 = vmatprep.subr.mxu0 0.0
    %277 = vmatpush1.msra.mxu0 0.0
    %278 = vmatprep.subr.mxu0 0.0
    %279 = vmatpush1.msra.mxu0 0.0
    %280 = vmatprep.subr.mxu0 0.0
    %281 = vmatpush1.msra.mxu0 0.0
    %282 = vmatprep.subr.mxu0 0.0
    %283 = vmatpush1.msra.mxu0 0.0
    %284 = vmatprep.subr.mxu0 0.0
    %285 = vmatpush1.msra.mxu0 0.0
    %286 = vmatprep.subr.mxu0 0.0
    %287 = vmatpush1.msra.mxu0 0.0
    %288 = vmatprep.subr.mxu0 0.0
    %289 = vmatpush1.msra.mxu0 0.0
    %290 = vmatprep.subr.mxu0 0.0
    %291 = vmatpush1.msra.mxu0 0.0
    %292 = vmatprep.subr.mxu0 0.0
    %293 = vmatpush1.msra.mxu0 0.0
    %294 = vmatprep.subr.mxu0 0.0
    %295 = vmatpush1.msra.mxu0 0.0
    %296 = vmatprep.subr.mxu0 0.0
    %297 = vmatpush1.msra.mxu0 0.0
    %298 = vmatprep.subr.mxu0 0.0
    %299 = vmatpush1.msra.mxu0 0.0
    %300 = vmatprep.subr.mxu0 0.0
    %301 = vmatpush1.msra.mxu0 0.0
    %302 = vmatprep.subr.mxu0 0.0
    %303 = vmatpush1.msra.mxu0 0.0
    %304 = vmatprep.subr.mxu0 0.0
    %305 = vmatpush1.msra.mxu0 0.0
    %306 = vmatprep.subr.mxu0 0.0
    %307 = vmatpush1.msra.mxu0 0.0
    %308 = vmatprep.subr.mxu0 0.0
    %309 = vmatpush1.msra.mxu0 0.0
    %310 = vmatprep.subr.mxu0 0.0
    %311 = vmatpush1.msra.mxu0 0.0
    %312 = vmatprep.subr.mxu0 0.0
    %313 = vmatpush1.msra.mxu0 0.0
    %314 = vmatprep.subr.mxu0 0.0
    %315 = vmatpush1.msra.mxu0 0.0
    %316 = vmatprep.subr.mxu0 0.0
    %317 = vmatpush1.msra.mxu0 0.0
    %318 = vmatprep.subr.mxu0 0.0
    %319 = vmatpush1.msra.mxu0 0.0
    %320 = vmatprep.subr.mxu0 0.0
    %321 = vmatpush1.msra.mxu0 0.0
    %322 = vmatprep.subr.mxu0 0.0
    %323 = vmatpush1.msra.mxu0 0.0
    %324 = vmatprep.subr.mxu0 0.0
    %325 = vmatpush1.msra.mxu0 0.0
    %326 = vmatprep.subr.mxu0 0.0
    %327 = vmatpush1.msra.mxu0 0.0
    %328 = vmatprep.subr.mxu0 0.0
    %329 = vmatpush1.msra.mxu0 0.0
    %330 = vmatprep.subr.mxu0 0.0
    %331 = vmatpush1.msra.mxu0 0.0
    %332 = vmatprep.subr.mxu0 0.0
    %333 = vmatpush1.msra.mxu0 0.0
    %334 = vmatprep.mubr.f32.mxu0 0.0
    %335 = vmatmul.mubr.f32.gmra.mrb[0].mxu0 %v268
    %v336 = vpop.f32.mrb[0].mxu0
    %v337 = vadd.f32 %v264, %v336
    %v338 = vpop.f32.mrb[0].mxu0
    %339 = vdwg.mxu0
    %s340 = scalar_lea.vmem %s2, 16
    %v341 = vld [vmem:[%s340] sm:$0xff]
    %v343 = vsel %vm35, %v341, 0
    %345 = vmatprep.subr.mxu0 0.0
    %346 = vmatpush1.msra.mxu0 %v41
    %347 = vmatprep.subr.mxu0 0.0
    %348 = vmatpush1.msra.mxu0 0.0
    %349 = vmatprep.subr.mxu0 0.0
    %350 = vmatpush1.msra.mxu0 0.0
    %351 = vmatprep.subr.mxu0 0.0
    %352 = vmatpush1.msra.mxu0 0.0
    %353 = vmatprep.subr.mxu0 0.0
    %354 = vmatpush1.msra.mxu0 0.0
    %355 = vmatprep.subr.mxu0 0.0
    %356 = vmatpush1.msra.mxu0 0.0
    %357 = vmatprep.subr.mxu0 0.0
    %358 = vmatpush1.msra.mxu0 0.0
    %359 = vmatprep.subr.mxu0 0.0
    %360 = vmatpush1.msra.mxu0 0.0
    %361 = vmatprep.subr.mxu0 0.0
    %362 = vmatpush1.msra.mxu0 0.0
    %363 = vmatprep.subr.mxu0 0.0
    %364 = vmatpush1.msra.mxu0 0.0
    %365 = vmatprep.subr.mxu0 0.0
    %366 = vmatpush1.msra.mxu0 0.0
    %367 = vmatprep.subr.mxu0 0.0
    %368 = vmatpush1.msra.mxu0 0.0
    %369 = vmatprep.subr.mxu0 0.0
    %370 = vmatpush1.msra.mxu0 0.0
    %371 = vmatprep.subr.mxu0 0.0
    %372 = vmatpush1.msra.mxu0 0.0
    %373 = vmatprep.subr.mxu0 0.0
    %374 = vmatpush1.msra.mxu0 0.0
    %375 = vmatprep.subr.mxu0 0.0
    %376 = vmatpush1.msra.mxu0 0.0
    %377 = vmatprep.subr.mxu0 0.0
    %378 = vmatpush1.msra.mxu0 0.0
    %379 = vmatprep.subr.mxu0 0.0
    %380 = vmatpush1.msra.mxu0 0.0
    %381 = vmatprep.subr.mxu0 0.0
    %382 = vmatpush1.msra.mxu0 0.0
    %383 = vmatprep.subr.mxu0 0.0
    %384 = vmatpush1.msra.mxu0 0.0
    %385 = vmatprep.subr.mxu0 0.0
    %386 = vmatpush1.msra.mxu0 0.0
    %387 = vmatprep.subr.mxu0 0.0
    %388 = vmatpush1.msra.mxu0 0.0
    %389 = vmatprep.subr.mxu0 0.0
    %390 = vmatpush1.msra.mxu0 0.0
    %391 = vmatprep.subr.mxu0 0.0
    %392 = vmatpush1.msra.mxu0 0.0
    %393 = vmatprep.subr.mxu0 0.0
    %394 = vmatpush1.msra.mxu0 0.0
    %395 = vmatprep.subr.mxu0 0.0
    %396 = vmatpush1.msra.mxu0 0.0
    %397 = vmatprep.subr.mxu0 0.0
    %398 = vmatpush1.msra.mxu0 0.0
    %399 = vmatprep.subr.mxu0 0.0
    %400 = vmatpush1.msra.mxu0 0.0
    %401 = vmatprep.subr.mxu0 0.0
    %402 = vmatpush1.msra.mxu0 0.0
    %403 = vmatprep.subr.mxu0 0.0
    %404 = vmatpush1.msra.mxu0 0.0
    %405 = vmatprep.subr.mxu0 0.0
    %406 = vmatpush1.msra.mxu0 0.0
    %407 = vmatprep.subr.mxu0 0.0
    %408 = vmatpush1.msra.mxu0 0.0
    %409 = vmatprep.mubr.f32.mxu0 0.0
    %410 = vmatmul.mubr.f32.gmra.mrb[0].mxu0 %v343
    %v411 = vpop.f32.mrb[0].mxu0
    %v412 = vadd.f32 0.0, %v411
    %v413 = vpop.f32.mrb[0].mxu0
    %414 = vdwg.mxu0
    %s415 = scalar_lea.vmem %s1, 32
    %v416 = vld [vmem:[%s415] sm:$0xff]
    %v417 = vld [vmem:[%s415 + $0x8] sm:$0xff]
    %v419 = vsel %vm193, %v412, 0
    %421 = vmatprep.subr.mxu0 0.0
    %422 = vmatpush1.msra.mxu0 %v416
    %423 = vmatprep.subr.mxu0 0.0
    %424 = vmatpush1.msra.mxu0 %v417
    %425 = vmatprep.subr.mxu0 0.0
    %426 = vmatpush1.msra.mxu0 0.0
    %427 = vmatprep.subr.mxu0 0.0
    %428 = vmatpush1.msra.mxu0 0.0
    %429 = vmatprep.subr.mxu0 0.0
    %430 = vmatpush1.msra.mxu0 0.0
    %431 = vmatprep.subr.mxu0 0.0
    %432 = vmatpush1.msra.mxu0 0.0
    %433 = vmatprep.subr.mxu0 0.0
    %434 = vmatpush1.msra.mxu0 0.0
    %435 = vmatprep.subr.mxu0 0.0
    %436 = vmatpush1.msra.mxu0 0.0
    %437 = vmatprep.subr.mxu0 0.0
    %438 = vmatpush1.msra.mxu0 0.0
    %439 = vmatprep.subr.mxu0 0.0
    %440 = vmatpush1.msra.mxu0 0.0
    %441 = vmatprep.subr.mxu0 0.0
    %442 = vmatpush1.msra.mxu0 0.0
    %443 = vmatprep.subr.mxu0 0.0
    %444 = vmatpush1.msra.mxu0 0.0
    %445 = vmatprep.subr.mxu0 0.0
    %446 = vmatpush1.msra.mxu0 0.0
    %447 = vmatprep.subr.mxu0 0.0
    %448 = vmatpush1.msra.mxu0 0.0
    %449 = vmatprep.subr.mxu0 0.0
    %450 = vmatpush1.msra.mxu0 0.0
    %451 = vmatprep.subr.mxu0 0.0
    %452 = vmatpush1.msra.mxu0 0.0
    %453 = vmatprep.subr.mxu0 0.0
    %454 = vmatpush1.msra.mxu0 0.0
    %455 = vmatprep.subr.mxu0 0.0
    %456 = vmatpush1.msra.mxu0 0.0
    %457 = vmatprep.subr.mxu0 0.0
    %458 = vmatpush1.msra.mxu0 0.0
    %459 = vmatprep.subr.mxu0 0.0
    %460 = vmatpush1.msra.mxu0 0.0
    %461 = vmatprep.subr.mxu0 0.0
    %462 = vmatpush1.msra.mxu0 0.0
    %463 = vmatprep.subr.mxu0 0.0
    %464 = vmatpush1.msra.mxu0 0.0
    %465 = vmatprep.subr.mxu0 0.0
    %466 = vmatpush1.msra.mxu0 0.0
    %467 = vmatprep.subr.mxu0 0.0
    %468 = vmatpush1.msra.mxu0 0.0
    %469 = vmatprep.subr.mxu0 0.0
    %470 = vmatpush1.msra.mxu0 0.0
    %471 = vmatprep.subr.mxu0 0.0
    %472 = vmatpush1.msra.mxu0 0.0
    %473 = vmatprep.subr.mxu0 0.0
    %474 = vmatpush1.msra.mxu0 0.0
    %475 = vmatprep.subr.mxu0 0.0
    %476 = vmatpush1.msra.mxu0 0.0
    %477 = vmatprep.subr.mxu0 0.0
    %478 = vmatpush1.msra.mxu0 0.0
    %479 = vmatprep.subr.mxu0 0.0
    %480 = vmatpush1.msra.mxu0 0.0
    %481 = vmatprep.subr.mxu0 0.0
    %482 = vmatpush1.msra.mxu0 0.0
    %483 = vmatprep.subr.mxu0 0.0
    %484 = vmatpush1.msra.mxu0 0.0
    %485 = vmatprep.mubr.f32.mxu0 0.0
    %486 = vmatmul.mubr.f32.gmra.mrb[0].mxu0 %v419
    %v487 = vpop.f32.mrb[0].mxu0
    %v488 = vadd.f32 0.0, %v487
    %v489 = vpop.f32.mrb[0].mxu0
    %490 = vdwg.mxu0
    %v491 = vadd.f32 %v337, %v488
    %493 = vset.pattern.permute.xlu0 0
    %494 = vperm.xlu0 %493, %v32
    %v495 = vpop.permute.xlu0 %494
    %v497 = vadd.f32 %v491, %v495
    %v498 = vmax.f32 %v497, 0.0
    %vm499 = vcmask 261120
    %500 = vst.msk [vmem:[#allocation5] sm:$0xff] %vm499, %v498
    %s501 = scalar_lea.vmem [#allocation2], 4
    %v502 = vld [vmem:[%s501] sm:$0xf]
    %v503 = vld [vmem:[%s2] sm:$0xff]
    %v505 = vsel %vm35, %v503, 0
    %v508 = vsel %vm39, %v502, 0
    %510 = vmatprep.subr.mxu0 0.0
    %511 = vmatpush1.msra.mxu0 %v508
    %512 = vmatprep.subr.mxu0 0.0
    %513 = vmatpush1.msra.mxu0 0.0
    %514 = vmatprep.subr.mxu0 0.0
    %515 = vmatpush1.msra.mxu0 0.0
    %516 = vmatprep.subr.mxu0 0.0
    %517 = vmatpush1.msra.mxu0 0.0
    %518 = vmatprep.subr.mxu0 0.0
    %519 = vmatpush1.msra.mxu0 0.0
    %520 = vmatprep.subr.mxu0 0.0
    %521 = vmatpush1.msra.mxu0 0.0
    %522 = vmatprep.subr.mxu0 0.0
    %523 = vmatpush1.msra.mxu0 0.0
    %524 = vmatprep.subr.mxu0 0.0
    %525 = vmatpush1.msra.mxu0 0.0
    %526 = vmatprep.subr.mxu0 0.0
    %527 = vmatpush1.msra.mxu0 0.0
    %528 = vmatprep.subr.mxu0 0.0
    %529 = vmatpush1.msra.mxu0 0.0
    %530 = vmatprep.subr.mxu0 0.0
    %531 = vmatpush1.msra.mxu0 0.0
    %532 = vmatprep.subr.mxu0 0.0
    %533 = vmatpush1.msra.mxu0 0.0
    %534 = vmatprep.subr.mxu0 0.0
    %535 = vmatpush1.msra.mxu0 0.0
    %536 = vmatprep.subr.mxu0 0.0
    %537 = vmatpush1.msra.mxu0 0.0
    %538 = vmatprep.subr.mxu0 0.0
    %539 = vmatpush1.msra.mxu0 0.0
    %540 = vmatprep.subr.mxu0 0.0
    %541 = vmatpush1.msra.mxu0 0.0
    %542 = vmatprep.subr.mxu0 0.0
    %543 = vmatpush1.msra.mxu0 0.0
    %544 = vmatprep.subr.mxu0 0.0
    %545 = vmatpush1.msra.mxu0 0.0
    %546 = vmatprep.subr.mxu0 0.0
    %547 = vmatpush1.msra.mxu0 0.0
    %548 = vmatprep.subr.mxu0 0.0
    %549 = vmatpush1.msra.mxu0 0.0
    %550 = vmatprep.subr.mxu0 0.0
    %551 = vmatpush1.msra.mxu0 0.0
    %552 = vmatprep.subr.mxu0 0.0
    %553 = vmatpush1.msra.mxu0 0.0
    %554 = vmatprep.subr.mxu0 0.0
    %555 = vmatpush1.msra.mxu0 0.0
    %556 = vmatprep.subr.mxu0 0.0
    %557 = vmatpush1.msra.mxu0 0.0
    %558 = vmatprep.subr.mxu0 0.0
    %559 = vmatpush1.msra.mxu0 0.0
    %560 = vmatprep.subr.mxu0 0.0
    %561 = vmatpush1.msra.mxu0 0.0
    %562 = vmatprep.subr.mxu0 0.0
    %563 = vmatpush1.msra.mxu0 0.0
    %564 = vmatprep.subr.mxu0 0.0
    %565 = vmatpush1.msra.mxu0 0.0
    %566 = vmatprep.subr.mxu0 0.0
    %567 = vmatpush1.msra.mxu0 0.0
    %568 = vmatprep.subr.mxu0 0.0
    %569 = vmatpush1.msra.mxu0 0.0
    %570 = vmatprep.subr.mxu0 0.0
    %571 = vmatpush1.msra.mxu0 0.0
    %572 = vmatprep.subr.mxu0 0.0
    %573 = vmatpush1.msra.mxu0 0.0
    %574 = vmatprep.mubr.f32.mxu0 0.0
    %575 = vmatmul.mubr.f32.gmra.mrb[0].mxu0 %v505
    %v576 = vpop.f32.mrb[0].mxu0
    %v577 = vadd.f32 0.0, %v576
    %v578 = vpop.f32.mrb[0].mxu0
    %579 = vdwg.mxu0
    %v580 = vld [vmem:[%s1] sm:$0xff]
    %v581 = vld [vmem:[%s1 + $0x8] sm:$0xff]
    %v582 = vld [vmem:[%s115] sm:$0xff]
    %v584 = vsel %vm35, %v582, 0
    %586 = vmatprep.subr.mxu0 0.0
    %587 = vmatpush1.msra.mxu0 %v508
    %588 = vmatprep.subr.mxu0 0.0
    %589 = vmatpush1.msra.mxu0 0.0
    %590 = vmatprep.subr.mxu0 0.0
    %591 = vmatpush1.msra.mxu0 0.0
    %592 = vmatprep.subr.mxu0 0.0
    %593 = vmatpush1.msra.mxu0 0.0
    %594 = vmatprep.subr.mxu0 0.0
    %595 = vmatpush1.msra.mxu0 0.0
    %596 = vmatprep.subr.mxu0 0.0
    %597 = vmatpush1.msra.mxu0 0.0
    %598 = vmatprep.subr.mxu0 0.0
    %599 = vmatpush1.msra.mxu0 0.0
    %600 = vmatprep.subr.mxu0 0.0
    %601 = vmatpush1.msra.mxu0 0.0
    %602 = vmatprep.subr.mxu0 0.0
    %603 = vmatpush1.msra.mxu0 0.0
    %604 = vmatprep.subr.mxu0 0.0
    %605 = vmatpush1.msra.mxu0 0.0
    %606 = vmatprep.subr.mxu0 0.0
    %607 = vmatpush1.msra.mxu0 0.0
    %608 = vmatprep.subr.mxu0 0.0
    %609 = vmatpush1.msra.mxu0 0.0
    %610 = vmatprep.subr.mxu0 0.0
    %611 = vmatpush1.msra.mxu0 0.0
    %612 = vmatprep.subr.mxu0 0.0
    %613 = vmatpush1.msra.mxu0 0.0
    %614 = vmatprep.subr.mxu0 0.0
    %615 = vmatpush1.msra.mxu0 0.0
    %616 = vmatprep.subr.mxu0 0.0
    %617 = vmatpush1.msra.mxu0 0.0
    %618 = vmatprep.subr.mxu0 0.0
    %619 = vmatpush1.msra.mxu0 0.0
    %620 = vmatprep.subr.mxu0 0.0
    %621 = vmatpush1.msra.mxu0 0.0
    %622 = vmatprep.subr.mxu0 0.0
    %623 = vmatpush1.msra.mxu0 0.0
    %624 = vmatprep.subr.mxu0 0.0
    %625 = vmatpush1.msra.mxu0 0.0
    %626 = vmatprep.subr.mxu0 0.0
    %627 = vmatpush1.msra.mxu0 0.0
    %628 = vmatprep.subr.mxu0 0.0
    %629 = vmatpush1.msra.mxu0 0.0
    %630 = vmatprep.subr.mxu0 0.0
    %631 = vmatpush1.msra.mxu0 0.0
    %632 = vmatprep.subr.mxu0 0.0
    %633 = vmatpush1.msra.mxu0 0.0
    %634 = vmatprep.subr.mxu0 0.0
    %635 = vmatpush1.msra.mxu0 0.0
    %636 = vmatprep.subr.mxu0 0.0
    %637 = vmatpush1.msra.mxu0 0.0
    %638 = vmatprep.subr.mxu0 0.0
    %639 = vmatpush1.msra.mxu0 0.0
    %640 = vmatprep.subr.mxu0 0.0
    %641 = vmatpush1.msra.mxu0 0.0
    %642 = vmatprep.subr.mxu0 0.0
    %643 = vmatpush1.msra.mxu0 0.0
    %644 = vmatprep.subr.mxu0 0.0
    %645 = vmatpush1.msra.mxu0 0.0
    %646 = vmatprep.subr.mxu0 0.0
    %647 = vmatpush1.msra.mxu0 0.0
    %648 = vmatprep.subr.mxu0 0.0
    %649 = vmatpush1.msra.mxu0 0.0
    %650 = vmatprep.mubr.f32.mxu0 0.0
    %651 = vmatmul.mubr.f32.gmra.mrb[0].mxu0 %v584
    %v652 = vpop.f32.mrb[0].mxu0
    %v653 = vadd.f32 0.0, %v652
    %v654 = vpop.f32.mrb[0].mxu0
    %655 = vdwg.mxu0
    %v656 = vld [vmem:[%s190] sm:$0xff]
    %v657 = vld [vmem:[%s190 + $0x8] sm:$0xff]
    %v659 = vsel %vm193, %v653, 0
    %661 = vmatprep.subr.mxu0 0.0
    %662 = vmatpush1.msra.mxu0 %v656
    %663 = vmatprep.subr.mxu0 0.0
    %664 = vmatpush1.msra.mxu0 %v657
    %665 = vmatprep.subr.mxu0 0.0
    %666 = vmatpush1.msra.mxu0 0.0
    %667 = vmatprep.subr.mxu0 0.0
    %668 = vmatpush1.msra.mxu0 0.0
    %669 = vmatprep.subr.mxu0 0.0
    %670 = vmatpush1.msra.mxu0 0.0
    %671 = vmatprep.subr.mxu0 0.0
    %672 = vmatpush1.msra.mxu0 0.0
    %673 = vmatprep.subr.mxu0 0.0
    %674 = vmatpush1.msra.mxu0 0.0
    %675 = vmatprep.subr.mxu0 0.0
    %676 = vmatpush1.msra.mxu0 0.0
    %677 = vmatprep.subr.mxu0 0.0
    %678 = vmatpush1.msra.mxu0 0.0
    %679 = vmatprep.subr.mxu0 0.0
    %680 = vmatpush1.msra.mxu0 0.0
    %681 = vmatprep.subr.mxu0 0.0
    %682 = vmatpush1.msra.mxu0 0.0
    %683 = vmatprep.subr.mxu0 0.0
    %684 = vmatpush1.msra.mxu0 0.0
    %685 = vmatprep.subr.mxu0 0.0
    %686 = vmatpush1.msra.mxu0 0.0
    %687 = vmatprep.subr.mxu0 0.0
    %688 = vmatpush1.msra.mxu0 0.0
    %689 = vmatprep.subr.mxu0 0.0
    %690 = vmatpush1.msra.mxu0 0.0
    %691 = vmatprep.subr.mxu0 0.0
    %692 = vmatpush1.msra.mxu0 0.0
    %693 = vmatprep.subr.mxu0 0.0
    %694 = vmatpush1.msra.mxu0 0.0
    %695 = vmatprep.subr.mxu0 0.0
    %696 = vmatpush1.msra.mxu0 0.0
    %697 = vmatprep.subr.mxu0 0.0
    %698 = vmatpush1.msra.mxu0 0.0
    %699 = vmatprep.subr.mxu0 0.0
    %700 = vmatpush1.msra.mxu0 0.0
    %701 = vmatprep.subr.mxu0 0.0
    %702 = vmatpush1.msra.mxu0 0.0
    %703 = vmatprep.subr.mxu0 0.0
    %704 = vmatpush1.msra.mxu0 0.0
    %705 = vmatprep.subr.mxu0 0.0
    %706 = vmatpush1.msra.mxu0 0.0
    %707 = vmatprep.subr.mxu0 0.0
    %708 = vmatpush1.msra.mxu0 0.0
    %709 = vmatprep.subr.mxu0 0.0
    %710 = vmatpush1.msra.mxu0 0.0
    %711 = vmatprep.subr.mxu0 0.0
    %712 = vmatpush1.msra.mxu0 0.0
    %713 = vmatprep.subr.mxu0 0.0
    %714 = vmatpush1.msra.mxu0 0.0
    %715 = vmatprep.subr.mxu0 0.0
    %716 = vmatpush1.msra.mxu0 0.0
    %717 = vmatprep.subr.mxu0 0.0
    %718 = vmatpush1.msra.mxu0 0.0
    %719 = vmatprep.subr.mxu0 0.0
    %720 = vmatpush1.msra.mxu0 0.0
    %721 = vmatprep.subr.mxu0 0.0
    %722 = vmatpush1.msra.mxu0 0.0
    %723 = vmatprep.subr.mxu0 0.0
    %724 = vmatpush1.msra.mxu0 0.0
    %725 = vmatprep.mubr.f32.mxu0 0.0
    %726 = vmatmul.mubr.f32.gmra.mrb[0].mxu0 %v659
    %v727 = vpop.f32.mrb[0].mxu0
    %v728 = vadd.f32 0.0, %v727
    %v729 = vpop.f32.mrb[0].mxu0
    %730 = vdwg.mxu0
    %v732 = vsel %vm193, %v577, 0
    %734 = vmatprep.subr.mxu0 0.0
    %735 = vmatpush1.msra.mxu0 %v580
    %736 = vmatprep.subr.mxu0 0.0
    %737 = vmatpush1.msra.mxu0 %v581
    %738 = vmatprep.subr.mxu0 0.0
    %739 = vmatpush1.msra.mxu0 0.0
    %740 = vmatprep.subr.mxu0 0.0
    %741 = vmatpush1.msra.mxu0 0.0
    %742 = vmatprep.subr.mxu0 0.0
    %743 = vmatpush1.msra.mxu0 0.0
    %744 = vmatprep.subr.mxu0 0.0
    %745 = vmatpush1.msra.mxu0 0.0
    %746 = vmatprep.subr.mxu0 0.0
    %747 = vmatpush1.msra.mxu0 0.0
    %748 = vmatprep.subr.mxu0 0.0
    %749 = vmatpush1.msra.mxu0 0.0
    %750 = vmatprep.subr.mxu0 0.0
    %751 = vmatpush1.msra.mxu0 0.0
    %752 = vmatprep.subr.mxu0 0.0
    %753 = vmatpush1.msra.mxu0 0.0
    %754 = vmatprep.subr.mxu0 0.0
    %755 = vmatpush1.msra.mxu0 0.0
    %756 = vmatprep.subr.mxu0 0.0
    %757 = vmatpush1.msra.mxu0 0.0
    %758 = vmatprep.subr.mxu0 0.0
    %759 = vmatpush1.msra.mxu0 0.0
    %760 = vmatprep.subr.mxu0 0.0
    %761 = vmatpush1.msra.mxu0 0.0
    %762 = vmatprep.subr.mxu0 0.0
    %763 = vmatpush1.msra.mxu0 0.0
    %764 = vmatprep.subr.mxu0 0.0
    %765 = vmatpush1.msra.mxu0 0.0
    %766 = vmatprep.subr.mxu0 0.0
    %767 = vmatpush1.msra.mxu0 0.0
    %768 = vmatprep.subr.mxu0 0.0
    %769 = vmatpush1.msra.mxu0 0.0
    %770 = vmatprep.subr.mxu0 0.0
    %771 = vmatpush1.msra.mxu0 0.0
    %772 = vmatprep.subr.mxu0 0.0
    %773 = vmatpush1.msra.mxu0 0.0
    %774 = vmatprep.subr.mxu0 0.0
    %775 = vmatpush1.msra.mxu0 0.0
    %776 = vmatprep.subr.mxu0 0.0
    %777 = vmatpush1.msra.mxu0 0.0
    %778 = vmatprep.subr.mxu0 0.0
    %779 = vmatpush1.msra.mxu0 0.0
    %780 = vmatprep.subr.mxu0 0.0
    %781 = vmatpush1.msra.mxu0 0.0
    %782 = vmatprep.subr.mxu0 0.0
    %783 = vmatpush1.msra.mxu0 0.0
    %784 = vmatprep.subr.mxu0 0.0
    %785 = vmatpush1.msra.mxu0 0.0
    %786 = vmatprep.subr.mxu0 0.0
    %787 = vmatpush1.msra.mxu0 0.0
    %788 = vmatprep.subr.mxu0 0.0
    %789 = vmatpush1.msra.mxu0 0.0
    %790 = vmatprep.subr.mxu0 0.0
    %791 = vmatpush1.msra.mxu0 0.0
    %792 = vmatprep.subr.mxu0 0.0
    %793 = vmatpush1.msra.mxu0 0.0
    %794 = vmatprep.subr.mxu0 0.0
    %795 = vmatpush1.msra.mxu0 0.0
    %796 = vmatprep.subr.mxu0 0.0
    %797 = vmatpush1.msra.mxu0 0.0
    %798 = vmatprep.mubr.f32.mxu0 0.0
    %799 = vmatmul.mubr.f32.gmra.mrb[0].mxu0 %v732
    %v800 = vpop.f32.mrb[0].mxu0
    %v801 = vadd.f32 %v728, %v800
    %v802 = vpop.f32.mrb[0].mxu0
    %803 = vdwg.mxu0
    %v804 = vld [vmem:[%s340] sm:$0xff]
    %v806 = vsel %vm35, %v804, 0
    %808 = vmatprep.subr.mxu0 0.0
    %809 = vmatpush1.msra.mxu0 %v508
    %810 = vmatprep.subr.mxu0 0.0
    %811 = vmatpush1.msra.mxu0 0.0
    %812 = vmatprep.subr.mxu0 0.0
    %813 = vmatpush1.msra.mxu0 0.0
    %814 = vmatprep.subr.mxu0 0.0
    %815 = vmatpush1.msra.mxu0 0.0
    %816 = vmatprep.subr.mxu0 0.0
    %817 = vmatpush1.msra.mxu0 0.0
    %818 = vmatprep.subr.mxu0 0.0
    %819 = vmatpush1.msra.mxu0 0.0
    %820 = vmatprep.subr.mxu0 0.0
    %821 = vmatpush1.msra.mxu0 0.0
    %822 = vmatprep.subr.mxu0 0.0
    %823 = vmatpush1.msra.mxu0 0.0
    %824 = vmatprep.subr.mxu0 0.0
    %825 = vmatpush1.msra.mxu0 0.0
    %826 = vmatprep.subr.mxu0 0.0
    %827 = vmatpush1.msra.mxu0 0.0
    %828 = vmatprep.subr.mxu0 0.0
    %829 = vmatpush1.msra.mxu0 0.0
    %830 = vmatprep.subr.mxu0 0.0
    %831 = vmatpush1.msra.mxu0 0.0
    %832 = vmatprep.subr.mxu0 0.0
    %833 = vmatpush1.msra.mxu0 0.0
    %834 = vmatprep.subr.mxu0 0.0
    %835 = vmatpush1.msra.mxu0 0.0
    %836 = vmatprep.subr.mxu0 0.0
    %837 = vmatpush1.msra.mxu0 0.0
    %838 = vmatprep.subr.mxu0 0.0
    %839 = vmatpush1.msra.mxu0 0.0
    %840 = vmatprep.subr.mxu0 0.0
    %841 = vmatpush1.msra.mxu0 0.0
    %842 = vmatprep.subr.mxu0 0.0
    %843 = vmatpush1.msra.mxu0 0.0
    %844 = vmatprep.subr.mxu0 0.0
    %845 = vmatpush1.msra.mxu0 0.0
    %846 = vmatprep.subr.mxu0 0.0
    %847 = vmatpush1.msra.mxu0 0.0
    %848 = vmatprep.subr.mxu0 0.0
    %849 = vmatpush1.msra.mxu0 0.0
    %850 = vmatprep.subr.mxu0 0.0
    %851 = vmatpush1.msra.mxu0 0.0
    %852 = vmatprep.subr.mxu0 0.0
    %853 = vmatpush1.msra.mxu0 0.0
    %854 = vmatprep.subr.mxu0 0.0
    %855 = vmatpush1.msra.mxu0 0.0
    %856 = vmatprep.subr.mxu0 0.0
    %857 = vmatpush1.msra.mxu0 0.0
    %858 = vmatprep.subr.mxu0 0.0
    %859 = vmatpush1.msra.mxu0 0.0
    %860 = vmatprep.subr.mxu0 0.0
    %861 = vmatpush1.msra.mxu0 0.0
    %862 = vmatprep.subr.mxu0 0.0
    %863 = vmatpush1.msra.mxu0 0.0
    %864 = vmatprep.subr.mxu0 0.0
    %865 = vmatpush1.msra.mxu0 0.0
    %866 = vmatprep.subr.mxu0 0.0
    %867 = vmatpush1.msra.mxu0 0.0
    %868 = vmatprep.subr.mxu0 0.0
    %869 = vmatpush1.msra.mxu0 0.0
    %870 = vmatprep.subr.mxu0 0.0
    %871 = vmatpush1.msra.mxu0 0.0
    %872 = vmatprep.mubr.f32.mxu0 0.0
    %873 = vmatmul.mubr.f32.gmra.mrb[0].mxu0 %v806
    %v874 = vpop.f32.mrb[0].mxu0
    %v875 = vadd.f32 0.0, %v874
    %v876 = vpop.f32.mrb[0].mxu0
    %877 = vdwg.mxu0
    %v878 = vld [vmem:[%s415] sm:$0xff]
    %v879 = vld [vmem:[%s415 + $0x8] sm:$0xff]
    %v881 = vsel %vm193, %v875, 0
    %883 = vmatprep.subr.mxu0 0.0
    %884 = vmatpush1.msra.mxu0 %v878
    %885 = vmatprep.subr.mxu0 0.0
    %886 = vmatpush1.msra.mxu0 %v879
    %887 = vmatprep.subr.mxu0 0.0
    %888 = vmatpush1.msra.mxu0 0.0
    %889 = vmatprep.subr.mxu0 0.0
    %890 = vmatpush1.msra.mxu0 0.0
    %891 = vmatprep.subr.mxu0 0.0
    %892 = vmatpush1.msra.mxu0 0.0
    %893 = vmatprep.subr.mxu0 0.0
    %894 = vmatpush1.msra.mxu0 0.0
    %895 = vmatprep.subr.mxu0 0.0
    %896 = vmatpush1.msra.mxu0 0.0
    %897 = vmatprep.subr.mxu0 0.0
    %898 = vmatpush1.msra.mxu0 0.0
    %899 = vmatprep.subr.mxu0 0.0
    %900 = vmatpush1.msra.mxu0 0.0
    %901 = vmatprep.subr.mxu0 0.0
    %902 = vmatpush1.msra.mxu0 0.0
    %903 = vmatprep.subr.mxu0 0.0
    %904 = vmatpush1.msra.mxu0 0.0
    %905 = vmatprep.subr.mxu0 0.0
    %906 = vmatpush1.msra.mxu0 0.0
    %907 = vmatprep.subr.mxu0 0.0
    %908 = vmatpush1.msra.mxu0 0.0
    %909 = vmatprep.subr.mxu0 0.0
    %910 = vmatpush1.msra.mxu0 0.0
    %911 = vmatprep.subr.mxu0 0.0
    %912 = vmatpush1.msra.mxu0 0.0
    %913 = vmatprep.subr.mxu0 0.0
    %914 = vmatpush1.msra.mxu0 0.0
    %915 = vmatprep.subr.mxu0 0.0
    %916 = vmatpush1.msra.mxu0 0.0
    %917 = vmatprep.subr.mxu0 0.0
    %918 = vmatpush1.msra.mxu0 0.0
    %919 = vmatprep.subr.mxu0 0.0
    %920 = vmatpush1.msra.mxu0 0.0
    %921 = vmatprep.subr.mxu0 0.0
    %922 = vmatpush1.msra.mxu0 0.0
    %923 = vmatprep.subr.mxu0 0.0
    %924 = vmatpush1.msra.mxu0 0.0
    %925 = vmatprep.subr.mxu0 0.0
    %926 = vmatpush1.msra.mxu0 0.0
    %927 = vmatprep.subr.mxu0 0.0
    %928 = vmatpush1.msra.mxu0 0.0
    %929 = vmatprep.subr.mxu0 0.0
    %930 = vmatpush1.msra.mxu0 0.0
    %931 = vmatprep.subr.mxu0 0.0
    %932 = vmatpush1.msra.mxu0 0.0
    %933 = vmatprep.subr.mxu0 0.0
    %934 = vmatpush1.msra.mxu0 0.0
    %935 = vmatprep.subr.mxu0 0.0
    %936 = vmatpush1.msra.mxu0 0.0
    %937 = vmatprep.subr.mxu0 0.0
    %938 = vmatpush1.msra.mxu0 0.0
    %939 = vmatprep.subr.mxu0 0.0
    %940 = vmatpush1.msra.mxu0 0.0
    %941 = vmatprep.subr.mxu0 0.0
    %942 = vmatpush1.msra.mxu0 0.0
    %943 = vmatprep.subr.mxu0 0.0
    %944 = vmatpush1.msra.mxu0 0.0
    %945 = vmatprep.subr.mxu0 0.0
    %946 = vmatpush1.msra.mxu0 0.0
    %947 = vmatprep.mubr.f32.mxu0 0.0
    %948 = vmatmul.mubr.f32.gmra.mrb[0].mxu0 %v881
    %v949 = vpop.f32.mrb[0].mxu0
    %v950 = vadd.f32 0.0, %v949
    %v951 = vpop.f32.mrb[0].mxu0
    %952 = vdwg.mxu0
    %v953 = vadd.f32 %v801, %v950
    %v954 = vadd.f32 %v953, %v495
    %v955 = vmax.f32 %v954, 0.0
    %s956 = scalar_lea.vmem [#allocation5], 8
    %957 = vst.msk [vmem:[%s956] sm:$0xff] %vm499, %v955
    %s958 = scalar_lea.vmem [#allocation2], 8
    %v959 = vld [vmem:[%s958] sm:$0xf]
    %v960 = vld [vmem:[%s2] sm:$0xff]
    %v962 = vsel %vm35, %v960, 0
    %v965 = vsel %vm39, %v959, 0
    %967 = vmatprep.subr.mxu0 0.0
    %968 = vmatpush1.msra.mxu0 %v965
    %969 = vmatprep.subr.mxu0 0.0
    %970 = vmatpush1.msra.mxu0 0.0
    %971 = vmatprep.subr.mxu0 0.0
    %972 = vmatpush1.msra.mxu0 0.0
    %973 = vmatprep.subr.mxu0 0.0
    %974 = vmatpush1.msra.mxu0 0.0
    %975 = vmatprep.subr.mxu0 0.0
    %976 = vmatpush1.msra.mxu0 0.0
    %977 = vmatprep.subr.mxu0 0.0
    %978 = vmatpush1.msra.mxu0 0.0
    %979 = vmatprep.subr.mxu0 0.0
    %980 = vmatpush1.msra.mxu0 0.0
    %981 = vmatprep.subr.mxu0 0.0
    %982 = vmatpush1.msra.mxu0 0.0
    %983 = vmatprep.subr.mxu0 0.0
    %984 = vmatpush1.msra.mxu0 0.0
    %985 = vmatprep.subr.mxu0 0.0
    %986 = vmatpush1.msra.mxu0 0.0
    %987 = vmatprep.subr.mxu0 0.0
    %988 = vmatpush1.msra.mxu0 0.0
    %989 = vmatprep.subr.mxu0 0.0
    %990 = vmatpush1.msra.mxu0 0.0
    %991 = vmatprep.subr.mxu0 0.0
    %992 = vmatpush1.msra.mxu0 0.0
    %993 = vmatprep.subr.mxu0 0.0
    %994 = vmatpush1.msra.mxu0 0.0
    %995 = vmatprep.subr.mxu0 0.0
    %996 = vmatpush1.msra.mxu0 0.0
    %997 = vmatprep.subr.mxu0 0.0
    %998 = vmatpush1.msra.mxu0 0.0
    %999 = vmatprep.subr.mxu0 0.0
    %1000 = vmatpush1.msra.mxu0 0.0
    %1001 = vmatprep.subr.mxu0 0.0
    %1002 = vmatpush1.msra.mxu0 0.0
    %1003 = vmatprep.subr.mxu0 0.0
    %1004 = vmatpush1.msra.mxu0 0.0
    %1005 = vmatprep.subr.mxu0 0.0
    %1006 = vmatpush1.msra.mxu0 0.0
    %1007 = vmatprep.subr.mxu0 0.0
    %1008 = vmatpush1.msra.mxu0 0.0
    %1009 = vmatprep.subr.mxu0 0.0
    %1010 = vmatpush1.msra.mxu0 0.0
    %1011 = vmatprep.subr.mxu0 0.0
    %1012 = vmatpush1.msra.mxu0 0.0
    %1013 = vmatprep.subr.mxu0 0.0
    %1014 = vmatpush1.msra.mxu0 0.0
    %1015 = vmatprep.subr.mxu0 0.0
    %1016 = vmatpush1.msra.mxu0 0.0
    %1017 = vmatprep.subr.mxu0 0.0
    %1018 = vmatpush1.msra.mxu0 0.0
    %1019 = vmatprep.subr.mxu0 0.0
    %1020 = vmatpush1.msra.mxu0 0.0
    %1021 = vmatprep.subr.mxu0 0.0
    %1022 = vmatpush1.msra.mxu0 0.0
    %1023 = vmatprep.subr.mxu0 0.0
    %1024 = vmatpush1.msra.mxu0 0.0
    %1025 = vmatprep.subr.mxu0 0.0
    %1026 = vmatpush1.msra.mxu0 0.0
    %1027 = vmatprep.subr.mxu0 0.0
    %1028 = vmatpush1.msra.mxu0 0.0
    %1029 = vmatprep.subr.mxu0 0.0
    %1030 = vmatpush1.msra.mxu0 0.0
    %1031 = vmatprep.mubr.f32.mxu0 0.0
    %1032 = vmatmul.mubr.f32.gmra.mrb[0].mxu0 %v962
    %v1033 = vpop.f32.mrb[0].mxu0
    %v1034 = vadd.f32 0.0, %v1033
    %v1035 = vpop.f32.mrb[0].mxu0
    %1036 = vdwg.mxu0
    %v1037 = vld [vmem:[%s1] sm:$0xff]
    %v1038 = vld [vmem:[%s1 + $0x8] sm:$0xff]
    %v1039 = vld [vmem:[%s115] sm:$0xff]
    %v1041 = vsel %vm35, %v1039, 0
    %1043 = vmatprep.subr.mxu0 0.0
    %1044 = vmatpush1.msra.mxu0 %v965
    %1045 = vmatprep.subr.mxu0 0.0
    %1046 = vmatpush1.msra.mxu0 0.0
    %1047 = vmatprep.subr.mxu0 0.0
    %1048 = vmatpush1.msra.mxu0 0.0
    %1049 = vmatprep.subr.mxu0 0.0
    %1050 = vmatpush1.msra.mxu0 0.0
    %1051 = vmatprep.subr.mxu0 0.0
    %1052 = vmatpush1.msra.mxu0 0.0
    %1053 = vmatprep.subr.mxu0 0.0
    %1054 = vmatpush1.msra.mxu0 0.0
    %1055 = vmatprep.subr.mxu0 0.0
    %1056 = vmatpush1.msra.mxu0 0.0
    %1057 = vmatprep.subr.mxu0 0.0
    %1058 = vmatpush1.msra.mxu0 0.0
    %1059 = vmatprep.subr.mxu0 0.0
    %1060 = vmatpush1.msra.mxu0 0.0
    %1061 = vmatprep.subr.mxu0 0.0
    %1062 = vmatpush1.msra.mxu0 0.0
    %1063 = vmatprep.subr.mxu0 0.0
    %1064 = vmatpush1.msra.mxu0 0.0
    %1065 = vmatprep.subr.mxu0 0.0
    %1066 = vmatpush1.msra.mxu0 0.0
    %1067 = vmatprep.subr.mxu0 0.0
    %1068 = vmatpush1.msra.mxu0 0.0
    %1069 = vmatprep.subr.mxu0 0.0
    %1070 = vmatpush1.msra.mxu0 0.0
    %1071 = vmatprep.subr.mxu0 0.0
    %1072 = vmatpush1.msra.mxu0 0.0
    %1073 = vmatprep.subr.mxu0 0.0
    %1074 = vmatpush1.msra.mxu0 0.0
    %1075 = vmatprep.subr.mxu0 0.0
    %1076 = vmatpush1.msra.mxu0 0.0
    %1077 = vmatprep.subr.mxu0 0.0
    %1078 = vmatpush1.msra.mxu0 0.0
    %1079 = vmatprep.subr.mxu0 0.0
    %1080 = vmatpush1.msra.mxu0 0.0
    %1081 = vmatprep.subr.mxu0 0.0
    %1082 = vmatpush1.msra.mxu0 0.0
    %1083 = vmatprep.subr.mxu0 0.0
    %1084 = vmatpush1.msra.mxu0 0.0
    %1085 = vmatprep.subr.mxu0 0.0
    %1086 = vmatpush1.msra.mxu0 0.0
    %1087 = vmatprep.subr.mxu0 0.0
    %1088 = vmatpush1.msra.mxu0 0.0
    %1089 = vmatprep.subr.mxu0 0.0
    %1090 = vmatpush1.msra.mxu0 0.0
    %1091 = vmatprep.subr.mxu0 0.0
    %1092 = vmatpush1.msra.mxu0 0.0
    %1093 = vmatprep.subr.mxu0 0.0
    %1094 = vmatpush1.msra.mxu0 0.0
    %1095 = vmatprep.subr.mxu0 0.0
    %1096 = vmatpush1.msra.mxu0 0.0
    %1097 = vmatprep.subr.mxu0 0.0
    %1098 = vmatpush1.msra.mxu0 0.0
    %1099 = vmatprep.subr.mxu0 0.0
    %1100 = vmatpush1.msra.mxu0 0.0
    %1101 = vmatprep.subr.mxu0 0.0
    %1102 = vmatpush1.msra.mxu0 0.0
    %1103 = vmatprep.subr.mxu0 0.0
    %1104 = vmatpush1.msra.mxu0 0.0
    %1105 = vmatprep.subr.mxu0 0.0
    %1106 = vmatpush1.msra.mxu0 0.0
    %1107 = vmatprep.mubr.f32.mxu0 0.0
    %1108 = vmatmul.mubr.f32.gmra.mrb[0].mxu0 %v1041
    %v1109 = vpop.f32.mrb[0].mxu0
    %v1110 = vadd.f32 0.0, %v1109
    %v1111 = vpop.f32.mrb[0].mxu0
    %1112 = vdwg.mxu0
    %v1113 = vld [vmem:[%s190] sm:$0xff]
    %v1114 = vld [vmem:[%s190 + $0x8] sm:$0xff]
    %v1116 = vsel %vm193, %v1110, 0
    %1118 = vmatprep.subr.mxu0 0.0
    %1119 = vmatpush1.msra.mxu0 %v1113
    %1120 = vmatprep.subr.mxu0 0.0
    %1121 = vmatpush1.msra.mxu0 %v1114
    %1122 = vmatprep.subr.mxu0 0.0
    %1123 = vmatpush1.msra.mxu0 0.0
    %1124 = vmatprep.subr.mxu0 0.0
    %1125 = vmatpush1.msra.mxu0 0.0
    %1126 = vmatprep.subr.mxu0 0.0
    %1127 = vmatpush1.msra.mxu0 0.0
    %1128 = vmatprep.subr.mxu0 0.0
    %1129 = vmatpush1.msra.mxu0 0.0
    %1130 = vmatprep.subr.mxu0 0.0
    %1131 = vmatpush1.msra.mxu0 0.0
    %1132 = vmatprep.subr.mxu0 0.0
    %1133 = vmatpush1.msra.mxu0 0.0
    %1134 = vmatprep.subr.mxu0 0.0
    %1135 = vmatpush1.msra.mxu0 0.0
    %1136 = vmatprep.subr.mxu0 0.0
    %1137 = vmatpush1.msra.mxu0 0.0
    %1138 = vmatprep.subr.mxu0 0.0
    %1139 = vmatpush1.msra.mxu0 0.0
    %1140 = vmatprep.subr.mxu0 0.0
    %1141 = vmatpush1.msra.mxu0 0.0
    %1142 = vmatprep.subr.mxu0 0.0
    %1143 = vmatpush1.msra.mxu0 0.0
    %1144 = vmatprep.subr.mxu0 0.0
    %1145 = vmatpush1.msra.mxu0 0.0
    %1146 = vmatprep.subr.mxu0 0.0
    %1147 = vmatpush1.msra.mxu0 0.0
    %1148 = vmatprep.subr.mxu0 0.0
    %1149 = vmatpush1.msra.mxu0 0.0
    %1150 = vmatprep.subr.mxu0 0.0
    %1151 = vmatpush1.msra.mxu0 0.0
    %1152 = vmatprep.subr.mxu0 0.0
    %1153 = vmatpush1.msra.mxu0 0.0
    %1154 = vmatprep.subr.mxu0 0.0
    %1155 = vmatpush1.msra.mxu0 0.0
    %1156 = vmatprep.subr.mxu0 0.0
    %1157 = vmatpush1.msra.mxu0 0.0
    %1158 = vmatprep.subr.mxu0 0.0
    %1159 = vmatpush1.msra.mxu0 0.0
    %1160 = vmatprep.subr.mxu0 0.0
    %1161 = vmatpush1.msra.mxu0 0.0
    %1162 = vmatprep.subr.mxu0 0.0
    %1163 = vmatpush1.msra.mxu0 0.0
    %1164 = vmatprep.subr.mxu0 0.0
    %1165 = vmatpush1.msra.mxu0 0.0
    %1166 = vmatprep.subr.mxu0 0.0
    %1167 = vmatpush1.msra.mxu0 0.0
    %1168 = vmatprep.subr.mxu0 0.0
    %1169 = vmatpush1.msra.mxu0 0.0
    %1170 = vmatprep.subr.mxu0 0.0
    %1171 = vmatpush1.msra.mxu0 0.0
    %1172 = vmatprep.subr.mxu0 0.0
    %1173 = vmatpush1.msra.mxu0 0.0
    %1174 = vmatprep.subr.mxu0 0.0
    %1175 = vmatpush1.msra.mxu0 0.0
    %1176 = vmatprep.subr.mxu0 0.0
    %1177 = vmatpush1.msra.mxu0 0.0
    %1178 = vmatprep.subr.mxu0 0.0
    %1179 = vmatpush1.msra.mxu0 0.0
    %1180 = vmatprep.subr.mxu0 0.0
    %1181 = vmatpush1.msra.mxu0 0.0
    %1182 = vmatprep.mubr.f32.mxu0 0.0
    %1183 = vmatmul.mubr.f32.gmra.mrb[0].mxu0 %v1116
    %v1184 = vpop.f32.mrb[0].mxu0
    %v1185 = vadd.f32 0.0, %v1184
    %v1186 = vpop.f32.mrb[0].mxu0
    %1187 = vdwg.mxu0
    %v1189 = vsel %vm193, %v1034, 0
    %1191 = vmatprep.subr.mxu0 0.0
    %1192 = vmatpush1.msra.mxu0 %v1037
    %1193 = vmatprep.subr.mxu0 0.0
    %1194 = vmatpush1.msra.mxu0 %v1038
    %1195 = vmatprep.subr.mxu0 0.0
    %1196 = vmatpush1.msra.mxu0 0.0
    %1197 = vmatprep.subr.mxu0 0.0
    %1198 = vmatpush1.msra.mxu0 0.0
    %1199 = vmatprep.subr.mxu0 0.0
    %1200 = vmatpush1.msra.mxu0 0.0
    %1201 = vmatprep.subr.mxu0 0.0
    %1202 = vmatpush1.msra.mxu0 0.0
    %1203 = vmatprep.subr.mxu0 0.0
    %1204 = vmatpush1.msra.mxu0 0.0
    %1205 = vmatprep.subr.mxu0 0.0
    %1206 = vmatpush1.msra.mxu0 0.0
    %1207 = vmatprep.subr.mxu0 0.0
    %1208 = vmatpush1.msra.mxu0 0.0
    %1209 = vmatprep.subr.mxu0 0.0
    %1210 = vmatpush1.msra.mxu0 0.0
    %1211 = vmatprep.subr.mxu0 0.0
    %1212 = vmatpush1.msra.mxu0 0.0
    %1213 = vmatprep.subr.mxu0 0.0
    %1214 = vmatpush1.msra.mxu0 0.0
    %1215 = vmatprep.subr.mxu0 0.0
    %1216 = vmatpush1.msra.mxu0 0.0
    %1217 = vmatprep.subr.mxu0 0.0
    %1218 = vmatpush1.msra.mxu0 0.0
    %1219 = vmatprep.subr.mxu0 0.0
    %1220 = vmatpush1.msra.mxu0 0.0
    %1221 = vmatprep.subr.mxu0 0.0
    %1222 = vmatpush1.msra.mxu0 0.0
    %1223 = vmatprep.subr.mxu0 0.0
    %1224 = vmatpush1.msra.mxu0 0.0
    %1225 = vmatprep.subr.mxu0 0.0
    %1226 = vmatpush1.msra.mxu0 0.0
    %1227 = vmatprep.subr.mxu0 0.0
    %1228 = vmatpush1.msra.mxu0 0.0
    %1229 = vmatprep.subr.mxu0 0.0
    %1230 = vmatpush1.msra.mxu0 0.0
    %1231 = vmatprep.subr.mxu0 0.0
    %1232 = vmatpush1.msra.mxu0 0.0
    %1233 = vmatprep.subr.mxu0 0.0
    %1234 = vmatpush1.msra.mxu0 0.0
    %1235 = vmatprep.subr.mxu0 0.0
    %1236 = vmatpush1.msra.mxu0 0.0
    %1237 = vmatprep.subr.mxu0 0.0
    %1238 = vmatpush1.msra.mxu0 0.0
    %1239 = vmatprep.subr.mxu0 0.0
    %1240 = vmatpush1.msra.mxu0 0.0
    %1241 = vmatprep.subr.mxu0 0.0
    %1242 = vmatpush1.msra.mxu0 0.0
    %1243 = vmatprep.subr.mxu0 0.0
    %1244 = vmatpush1.msra.mxu0 0.0
    %1245 = vmatprep.subr.mxu0 0.0
    %1246 = vmatpush1.msra.mxu0 0.0
    %1247 = vmatprep.subr.mxu0 0.0
    %1248 = vmatpush1.msra.mxu0 0.0
    %1249 = vmatprep.subr.mxu0 0.0
    %1250 = vmatpush1.msra.mxu0 0.0
    %1251 = vmatprep.subr.mxu0 0.0
    %1252 = vmatpush1.msra.mxu0 0.0
    %1253 = vmatprep.subr.mxu0 0.0
    %1254 = vmatpush1.msra.mxu0 0.0
    %1255 = vmatprep.mubr.f32.mxu0 0.0
    %1256 = vmatmul.mubr.f32.gmra.mrb[0].mxu0 %v1189
    %v1257 = vpop.f32.mrb[0].mxu0
    %v1258 = vadd.f32 %v1185, %v1257
    %v1259 = vpop.f32.mrb[0].mxu0
    %1260 = vdwg.mxu0
    %v1261 = vld [vmem:[%s340] sm:$0xff]
    %v1263 = vsel %vm35, %v1261, 0
    %1265 = vmatprep.subr.mxu0 0.0
    %1266 = vmatpush1.msra.mxu0 %v965
    %1267 = vmatprep.subr.mxu0 0.0
    %1268 = vmatpush1.msra.mxu0 0.0
    %1269 = vmatprep.subr.mxu0 0.0
    %1270 = vmatpush1.msra.mxu0 0.0
    %1271 = vmatprep.subr.mxu0 0.0
    %1272 = vmatpush1.msra.mxu0 0.0
    %1273 = vmatprep.subr.mxu0 0.0
    %1274 = vmatpush1.msra.mxu0 0.0
    %1275 = vmatprep.subr.mxu0 0.0
    %1276 = vmatpush1.msra.mxu0 0.0
    %1277 = vmatprep.subr.mxu0 0.0
    %1278 = vmatpush1.msra.mxu0 0.0
    %1279 = vmatprep.subr.mxu0 0.0
    %1280 = vmatpush1.msra.mxu0 0.0
    %1281 = vmatprep.subr.mxu0 0.0
    %1282 = vmatpush1.msra.mxu0 0.0
    %1283 = vmatprep.subr.mxu0 0.0
    %1284 = vmatpush1.msra.mxu0 0.0
    %1285 = vmatprep.subr.mxu0 0.0
    %1286 = vmatpush1.msra.mxu0 0.0
    %1287 = vmatprep.subr.mxu0 0.0
    %1288 = vmatpush1.msra.mxu0 0.0
    %1289 = vmatprep.subr.mxu0 0.0
    %1290 = vmatpush1.msra.mxu0 0.0
    %1291 = vmatprep.subr.mxu0 0.0
    %1292 = vmatpush1.msra.mxu0 0.0
    %1293 = vmatprep.subr.mxu0 0.0
    %1294 = vmatpush1.msra.mxu0 0.0
    %1295 = vmatprep.subr.mxu0 0.0
    %1296 = vmatpush1.msra.mxu0 0.0
    %1297 = vmatprep.subr.mxu0 0.0
    %1298 = vmatpush1.msra.mxu0 0.0
    %1299 = vmatprep.subr.mxu0 0.0
    %1300 = vmatpush1.msra.mxu0 0.0
    %1301 = vmatprep.subr.mxu0 0.0
    %1302 = vmatpush1.msra.mxu0 0.0
    %1303 = vmatprep.subr.mxu0 0.0
    %1304 = vmatpush1.msra.mxu0 0.0
    %1305 = vmatprep.subr.mxu0 0.0
    %1306 = vmatpush1.msra.mxu0 0.0
    %1307 = vmatprep.subr.mxu0 0.0
    %1308 = vmatpush1.msra.mxu0 0.0
    %1309 = vmatprep.subr.mxu0 0.0
    %1310 = vmatpush1.msra.mxu0 0.0
    %1311 = vmatprep.subr.mxu0 0.0
    %1312 = vmatpush1.msra.mxu0 0.0
    %1313 = vmatprep.subr.mxu0 0.0
    %1314 = vmatpush1.msra.mxu0 0.0
    %1315 = vmatprep.subr.mxu0 0.0
    %1316 = vmatpush1.msra.mxu0 0.0
    %1317 = vmatprep.subr.mxu0 0.0
    %1318 = vmatpush1.msra.mxu0 0.0
    %1319 = vmatprep.subr.mxu0 0.0
    %1320 = vmatpush1.msra.mxu0 0.0
    %1321 = vmatprep.subr.mxu0 0.0
    %1322 = vmatpush1.msra.mxu0 0.0
    %1323 = vmatprep.subr.mxu0 0.0
    %1324 = vmatpush1.msra.mxu0 0.0
    %1325 = vmatprep.subr.mxu0 0.0
    %1326 = vmatpush1.msra.mxu0 0.0
    %1327 = vmatprep.subr.mxu0 0.0
    %1328 = vmatpush1.msra.mxu0 0.0
    %1329 = vmatprep.mubr.f32.mxu0 0.0
    %1330 = vmatmul.mubr.f32.gmra.mrb[0].mxu0 %v1263
    %v1331 = vpop.f32.mrb[0].mxu0
    %v1332 = vadd.f32 0.0, %v1331
    %v1333 = vpop.f32.mrb[0].mxu0
    %1334 = vdwg.mxu0
    %v1335 = vld [vmem:[%s415] sm:$0xff]
    %v1336 = vld [vmem:[%s415 + $0x8] sm:$0xff]
    %v1338 = vsel %vm193, %v1332, 0
    %1340 = vmatprep.subr.mxu0 0.0
    %1341 = vmatpush1.msra.mxu0 %v1335
    %1342 = vmatprep.subr.mxu0 0.0
    %1343 = vmatpush1.msra.mxu0 %v1336
    %1344 = vmatprep.subr.mxu0 0.0
    %1345 = vmatpush1.msra.mxu0 0.0
    %1346 = vmatprep.subr.mxu0 0.0
    %1347 = vmatpush1.msra.mxu0 0.0
    %1348 = vmatprep.subr.mxu0 0.0
    %1349 = vmatpush1.msra.mxu0 0.0
    %1350 = vmatprep.subr.mxu0 0.0
    %1351 = vmatpush1.msra.mxu0 0.0
    %1352 = vmatprep.subr.mxu0 0.0
    %1353 = vmatpush1.msra.mxu0 0.0
    %1354 = vmatprep.subr.mxu0 0.0
    %1355 = vmatpush1.msra.mxu0 0.0
    %1356 = vmatprep.subr.mxu0 0.0
    %1357 = vmatpush1.msra.mxu0 0.0
    %1358 = vmatprep.subr.mxu0 0.0
    %1359 = vmatpush1.msra.mxu0 0.0
    %1360 = vmatprep.subr.mxu0 0.0
    %1361 = vmatpush1.msra.mxu0 0.0
    %1362 = vmatprep.subr.mxu0 0.0
    %1363 = vmatpush1.msra.mxu0 0.0
    %1364 = vmatprep.subr.mxu0 0.0
    %1365 = vmatpush1.msra.mxu0 0.0
    %1366 = vmatprep.subr.mxu0 0.0
    %1367 = vmatpush1.msra.mxu0 0.0
    %1368 = vmatprep.subr.mxu0 0.0
    %1369 = vmatpush1.msra.mxu0 0.0
    %1370 = vmatprep.subr.mxu0 0.0
    %1371 = vmatpush1.msra.mxu0 0.0
    %1372 = vmatprep.subr.mxu0 0.0
    %1373 = vmatpush1.msra.mxu0 0.0
    %1374 = vmatprep.subr.mxu0 0.0
    %1375 = vmatpush1.msra.mxu0 0.0
    %1376 = vmatprep.subr.mxu0 0.0
    %1377 = vmatpush1.msra.mxu0 0.0
    %1378 = vmatprep.subr.mxu0 0.0
    %1379 = vmatpush1.msra.mxu0 0.0
    %1380 = vmatprep.subr.mxu0 0.0
    %1381 = vmatpush1.msra.mxu0 0.0
    %1382 = vmatprep.subr.mxu0 0.0
    %1383 = vmatpush1.msra.mxu0 0.0
    %1384 = vmatprep.subr.mxu0 0.0
    %1385 = vmatpush1.msra.mxu0 0.0
    %1386 = vmatprep.subr.mxu0 0.0
    %1387 = vmatpush1.msra.mxu0 0.0
    %1388 = vmatprep.subr.mxu0 0.0
    %1389 = vmatpush1.msra.mxu0 0.0
    %1390 = vmatprep.subr.mxu0 0.0
    %1391 = vmatpush1.msra.mxu0 0.0
    %1392 = vmatprep.subr.mxu0 0.0
    %1393 = vmatpush1.msra.mxu0 0.0
    %1394 = vmatprep.subr.mxu0 0.0
    %1395 = vmatpush1.msra.mxu0 0.0
    %1396 = vmatprep.subr.mxu0 0.0
    %1397 = vmatpush1.msra.mxu0 0.0
    %1398 = vmatprep.subr.mxu0 0.0
    %1399 = vmatpush1.msra.mxu0 0.0
    %1400 = vmatprep.subr.mxu0 0.0
    %1401 = vmatpush1.msra.mxu0 0.0
    %1402 = vmatprep.subr.mxu0 0.0
    %1403 = vmatpush1.msra.mxu0 0.0
    %1404 = vmatprep.mubr.f32.mxu0 0.0
    %1405 = vmatmul.mubr.f32.gmra.mrb[0].mxu0 %v1338
    %v1406 = vpop.f32.mrb[0].mxu0
    %v1407 = vadd.f32 0.0, %v1406
    %v1408 = vpop.f32.mrb[0].mxu0
    %1409 = vdwg.mxu0
    %v1410 = vadd.f32 %v1258, %v1407
    %v1411 = vadd.f32 %v1410, %v495
    %v1412 = vmax.f32 %v1411, 0.0
    %s1413 = scalar_lea.vmem [#allocation5], 16
    %1414 = vst.msk [vmem:[%s1413] sm:$0xff] %vm499, %v1412
    %s1415 = scalar_lea.vmem [#allocation2], 12
    %v1416 = vld [vmem:[%s1415] sm:$0xf]
    %v1417 = vld [vmem:[%s2] sm:$0xff]
    %v1419 = vsel %vm35, %v1417, 0
    %v1422 = vsel %vm39, %v1416, 0
    %1424 = vmatprep.subr.mxu0 0.0
    %1425 = vmatpush1.msra.mxu0 %v1422
    %1426 = vmatprep.subr.mxu0 0.0
    %1427 = vmatpush1.msra.mxu0 0.0
    %1428 = vmatprep.subr.mxu0 0.0
    %1429 = vmatpush1.msra.mxu0 0.0
    %1430 = vmatprep.subr.mxu0 0.0
    %1431 = vmatpush1.msra.mxu0 0.0
    %1432 = vmatprep.subr.mxu0 0.0
    %1433 = vmatpush1.msra.mxu0 0.0
    %1434 = vmatprep.subr.mxu0 0.0
    %1435 = vmatpush1.msra.mxu0 0.0
    %1436 = vmatprep.subr.mxu0 0.0
    %1437 = vmatpush1.msra.mxu0 0.0
    %1438 = vmatprep.subr.mxu0 0.0
    %1439 = vmatpush1.msra.mxu0 0.0
    %1440 = vmatprep.subr.mxu0 0.0
    %1441 = vmatpush1.msra.mxu0 0.0
    %1442 = vmatprep.subr.mxu0 0.0
    %1443 = vmatpush1.msra.mxu0 0.0
    %1444 = vmatprep.subr.mxu0 0.0
    %1445 = vmatpush1.msra.mxu0 0.0
    %1446 = vmatprep.subr.mxu0 0.0
    %1447 = vmatpush1.msra.mxu0 0.0
    %1448 = vmatprep.subr.mxu0 0.0
    %1449 = vmatpush1.msra.mxu0 0.0
    %1450 = vmatprep.subr.mxu0 0.0
    %1451 = vmatpush1.msra.mxu0 0.0
    %1452 = vmatprep.subr.mxu0 0.0
    %1453 = vmatpush1.msra.mxu0 0.0
    %1454 = vmatprep.subr.mxu0 0.0
    %1455 = vmatpush1.msra.mxu0 0.0
    %1456 = vmatprep.subr.mxu0 0.0
    %1457 = vmatpush1.msra.mxu0 0.0
    %1458 = vmatprep.subr.mxu0 0.0
    %1459 = vmatpush1.msra.mxu0 0.0
    %1460 = vmatprep.subr.mxu0 0.0
    %1461 = vmatpush1.msra.mxu0 0.0
    %1462 = vmatprep.subr.mxu0 0.0
    %1463 = vmatpush1.msra.mxu0 0.0
    %1464 = vmatprep.subr.mxu0 0.0
    %1465 = vmatpush1.msra.mxu0 0.0
    %1466 = vmatprep.subr.mxu0 0.0
    %1467 = vmatpush1.msra.mxu0 0.0
    %1468 = vmatprep.subr.mxu0 0.0
    %1469 = vmatpush1.msra.mxu0 0.0
    %1470 = vmatprep.subr.mxu0 0.0
    %1471 = vmatpush1.msra.mxu0 0.0
    %1472 = vmatprep.subr.mxu0 0.0
    %1473 = vmatpush1.msra.mxu0 0.0
    %1474 = vmatprep.subr.mxu0 0.0
    %1475 = vmatpush1.msra.mxu0 0.0
    %1476 = vmatprep.subr.mxu0 0.0
    %1477 = vmatpush1.msra.mxu0 0.0
    %1478 = vmatprep.subr.mxu0 0.0
    %1479 = vmatpush1.msra.mxu0 0.0
    %1480 = vmatprep.subr.mxu0 0.0
    %1481 = vmatpush1.msra.mxu0 0.0
    %1482 = vmatprep.subr.mxu0 0.0
    %1483 = vmatpush1.msra.mxu0 0.0
    %1484 = vmatprep.subr.mxu0 0.0
    %1485 = vmatpush1.msra.mxu0 0.0
    %1486 = vmatprep.subr.mxu0 0.0
    %1487 = vmatpush1.msra.mxu0 0.0
    %1488 = vmatprep.mubr.f32.mxu0 0.0
    %1489 = vmatmul.mubr.f32.gmra.mrb[0].mxu0 %v1419
    %v1490 = vpop.f32.mrb[0].mxu0
    %v1491 = vadd.f32 0.0, %v1490
    %v1492 = vpop.f32.mrb[0].mxu0
    %1493 = vdwg.mxu0
    %v1494 = vld [vmem:[%s1] sm:$0xff]
    %v1495 = vld [vmem:[%s1 + $0x8] sm:$0xff]
    %v1496 = vld [vmem:[%s115] sm:$0xff]
    %v1498 = vsel %vm35, %v1496, 0
    %1500 = vmatprep.subr.mxu0 0.0
    %1501 = vmatpush1.msra.mxu0 %v1422
    %1502 = vmatprep.subr.mxu0 0.0
    %1503 = vmatpush1.msra.mxu0 0.0
    %1504 = vmatprep.subr.mxu0 0.0
    %1505 = vmatpush1.msra.mxu0 0.0
    %1506 = vmatprep.subr.mxu0 0.0
    %1507 = vmatpush1.msra.mxu0 0.0
    %1508 = vmatprep.subr.mxu0 0.0
    %1509 = vmatpush1.msra.mxu0 0.0
    %1510 = vmatprep.subr.mxu0 0.0
    %1511 = vmatpush1.msra.mxu0 0.0
    %1512 = vmatprep.subr.mxu0 0.0
    %1513 = vmatpush1.msra.mxu0 0.0
    %1514 = vmatprep.subr.mxu0 0.0
    %1515 = vmatpush1.msra.mxu0 0.0
    %1516 = vmatprep.subr.mxu0 0.0
    %1517 = vmatpush1.msra.mxu0 0.0
    %1518 = vmatprep.subr.mxu0 0.0
    %1519 = vmatpush1.msra.mxu0 0.0
    %1520 = vmatprep.subr.mxu0 0.0
    %1521 = vmatpush1.msra.mxu0 0.0
    %1522 = vmatprep.subr.mxu0 0.0
    %1523 = vmatpush1.msra.mxu0 0.0
    %1524 = vmatprep.subr.mxu0 0.0
    %1525 = vmatpush1.msra.mxu0 0.0
    %1526 = vmatprep.subr.mxu0 0.0
    %1527 = vmatpush1.msra.mxu0 0.0
    %1528 = vmatprep.subr.mxu0 0.0
    %1529 = vmatpush1.msra.mxu0 0.0
    %1530 = vmatprep.subr.mxu0 0.0
    %1531 = vmatpush1.msra.mxu0 0.0
    %1532 = vmatprep.subr.mxu0 0.0
    %1533 = vmatpush1.msra.mxu0 0.0
    %1534 = vmatprep.subr.mxu0 0.0
    %1535 = vmatpush1.msra.mxu0 0.0
    %1536 = vmatprep.subr.mxu0 0.0
    %1537 = vmatpush1.msra.mxu0 0.0
    %1538 = vmatprep.subr.mxu0 0.0
    %1539 = vmatpush1.msra.mxu0 0.0
    %1540 = vmatprep.subr.mxu0 0.0
    %1541 = vmatpush1.msra.mxu0 0.0
    %1542 = vmatprep.subr.mxu0 0.0
    %1543 = vmatpush1.msra.mxu0 0.0
    %1544 = vmatprep.subr.mxu0 0.0
    %1545 = vmatpush1.msra.mxu0 0.0
    %1546 = vmatprep.subr.mxu0 0.0
    %1547 = vmatpush1.msra.mxu0 0.0
    %1548 = vmatprep.subr.mxu0 0.0
    %1549 = vmatpush1.msra.mxu0 0.0
    %1550 = vmatprep.subr.mxu0 0.0
    %1551 = vmatpush1.msra.mxu0 0.0
    %1552 = vmatprep.subr.mxu0 0.0
    %1553 = vmatpush1.msra.mxu0 0.0
    %1554 = vmatprep.subr.mxu0 0.0
    %1555 = vmatpush1.msra.mxu0 0.0
    %1556 = vmatprep.subr.mxu0 0.0
    %1557 = vmatpush1.msra.mxu0 0.0
    %1558 = vmatprep.subr.mxu0 0.0
    %1559 = vmatpush1.msra.mxu0 0.0
    %1560 = vmatprep.subr.mxu0 0.0
    %1561 = vmatpush1.msra.mxu0 0.0
    %1562 = vmatprep.subr.mxu0 0.0
    %1563 = vmatpush1.msra.mxu0 0.0
    %1564 = vmatprep.mubr.f32.mxu0 0.0
    %1565 = vmatmul.mubr.f32.gmra.mrb[0].mxu0 %v1498
    %v1566 = vpop.f32.mrb[0].mxu0
    %v1567 = vadd.f32 0.0, %v1566
    %v1568 = vpop.f32.mrb[0].mxu0
    %1569 = vdwg.mxu0
    %v1570 = vld [vmem:[%s190] sm:$0xff]
    %v1571 = vld [vmem:[%s190 + $0x8] sm:$0xff]
    %v1573 = vsel %vm193, %v1567, 0
    %1575 = vmatprep.subr.mxu0 0.0
    %1576 = vmatpush1.msra.mxu0 %v1570
    %1577 = vmatprep.subr.mxu0 0.0
    %1578 = vmatpush1.msra.mxu0 %v1571
    %1579 = vmatprep.subr.mxu0 0.0
    %1580 = vmatpush1.msra.mxu0 0.0
    %1581 = vmatprep.subr.mxu0 0.0
    %1582 = vmatpush1.msra.mxu0 0.0
    %1583 = vmatprep.subr.mxu0 0.0
    %1584 = vmatpush1.msra.mxu0 0.0
    %1585 = vmatprep.subr.mxu0 0.0
    %1586 = vmatpush1.msra.mxu0 0.0
    %1587 = vmatprep.subr.mxu0 0.0
    %1588 = vmatpush1.msra.mxu0 0.0
    %1589 = vmatprep.subr.mxu0 0.0
    %1590 = vmatpush1.msra.mxu0 0.0
    %1591 = vmatprep.subr.mxu0 0.0
    %1592 = vmatpush1.msra.mxu0 0.0
    %1593 = vmatprep.subr.mxu0 0.0
    %1594 = vmatpush1.msra.mxu0 0.0
    %1595 = vmatprep.subr.mxu0 0.0
    %1596 = vmatpush1.msra.mxu0 0.0
    %1597 = vmatprep.subr.mxu0 0.0
    %1598 = vmatpush1.msra.mxu0 0.0
    %1599 = vmatprep.subr.mxu0 0.0
    %1600 = vmatpush1.msra.mxu0 0.0
    %1601 = vmatprep.subr.mxu0 0.0
    %1602 = vmatpush1.msra.mxu0 0.0
    %1603 = vmatprep.subr.mxu0 0.0
    %1604 = vmatpush1.msra.mxu0 0.0
    %1605 = vmatprep.subr.mxu0 0.0
    %1606 = vmatpush1.msra.mxu0 0.0
    %1607 = vmatprep.subr.mxu0 0.0
    %1608 = vmatpush1.msra.mxu0 0.0
    %1609 = vmatprep.subr.mxu0 0.0
    %1610 = vmatpush1.msra.mxu0 0.0
    %1611 = vmatprep.subr.mxu0 0.0
    %1612 = vmatpush1.msra.mxu0 0.0
    %1613 = vmatprep.subr.mxu0 0.0
    %1614 = vmatpush1.msra.mxu0 0.0
    %1615 = vmatprep.subr.mxu0 0.0
    %1616 = vmatpush1.msra.mxu0 0.0
    %1617 = vmatprep.subr.mxu0 0.0
    %1618 = vmatpush1.msra.mxu0 0.0
    %1619 = vmatprep.subr.mxu0 0.0
    %1620 = vmatpush1.msra.mxu0 0.0
    %1621 = vmatprep.subr.mxu0 0.0
    %1622 = vmatpush1.msra.mxu0 0.0
    %1623 = vmatprep.subr.mxu0 0.0
    %1624 = vmatpush1.msra.mxu0 0.0
    %1625 = vmatprep.subr.mxu0 0.0
    %1626 = vmatpush1.msra.mxu0 0.0
    %1627 = vmatprep.subr.mxu0 0.0
    %1628 = vmatpush1.msra.mxu0 0.0
    %1629 = vmatprep.subr.mxu0 0.0
    %1630 = vmatpush1.msra.mxu0 0.0
    %1631 = vmatprep.subr.mxu0 0.0
    %1632 = vmatpush1.msra.mxu0 0.0
    %1633 = vmatprep.subr.mxu0 0.0
    %1634 = vmatpush1.msra.mxu0 0.0
    %1635 = vmatprep.subr.mxu0 0.0
    %1636 = vmatpush1.msra.mxu0 0.0
    %1637 = vmatprep.subr.mxu0 0.0
    %1638 = vmatpush1.msra.mxu0 0.0
    %1639 = vmatprep.mubr.f32.mxu0 0.0
    %1640 = vmatmul.mubr.f32.gmra.mrb[0].mxu0 %v1573
    %v1641 = vpop.f32.mrb[0].mxu0
    %v1642 = vadd.f32 0.0, %v1641
    %v1643 = vpop.f32.mrb[0].mxu0
    %1644 = vdwg.mxu0
    %v1646 = vsel %vm193, %v1491, 0
    %1648 = vmatprep.subr.mxu0 0.0
    %1649 = vmatpush1.msra.mxu0 %v1494
    %1650 = vmatprep.subr.mxu0 0.0
    %1651 = vmatpush1.msra.mxu0 %v1495
    %1652 = vmatprep.subr.mxu0 0.0
    %1653 = vmatpush1.msra.mxu0 0.0
    %1654 = vmatprep.subr.mxu0 0.0
    %1655 = vmatpush1.msra.mxu0 0.0
    %1656 = vmatprep.subr.mxu0 0.0
    %1657 = vmatpush1.msra.mxu0 0.0
    %1658 = vmatprep.subr.mxu0 0.0
    %1659 = vmatpush1.msra.mxu0 0.0
    %1660 = vmatprep.subr.mxu0 0.0
    %1661 = vmatpush1.msra.mxu0 0.0
    %1662 = vmatprep.subr.mxu0 0.0
    %1663 = vmatpush1.msra.mxu0 0.0
    %1664 = vmatprep.subr.mxu0 0.0
    %1665 = vmatpush1.msra.mxu0 0.0
    %1666 = vmatprep.subr.mxu0 0.0
    %1667 = vmatpush1.msra.mxu0 0.0
    %1668 = vmatprep.subr.mxu0 0.0
    %1669 = vmatpush1.msra.mxu0 0.0
    %1670 = vmatprep.subr.mxu0 0.0
    %1671 = vmatpush1.msra.mxu0 0.0
    %1672 = vmatprep.subr.mxu0 0.0
    %1673 = vmatpush1.msra.mxu0 0.0
    %1674 = vmatprep.subr.mxu0 0.0
    %1675 = vmatpush1.msra.mxu0 0.0
    %1676 = vmatprep.subr.mxu0 0.0
    %1677 = vmatpush1.msra.mxu0 0.0
    %1678 = vmatprep.subr.mxu0 0.0
    %1679 = vmatpush1.msra.mxu0 0.0
    %1680 = vmatprep.subr.mxu0 0.0
    %1681 = vmatpush1.msra.mxu0 0.0
    %1682 = vmatprep.subr.mxu0 0.0
    %1683 = vmatpush1.msra.mxu0 0.0
    %1684 = vmatprep.subr.mxu0 0.0
    %1685 = vmatpush1.msra.mxu0 0.0
    %1686 = vmatprep.subr.mxu0 0.0
    %1687 = vmatpush1.msra.mxu0 0.0
    %1688 = vmatprep.subr.mxu0 0.0
    %1689 = vmatpush1.msra.mxu0 0.0
    %1690 = vmatprep.subr.mxu0 0.0
    %1691 = vmatpush1.msra.mxu0 0.0
    %1692 = vmatprep.subr.mxu0 0.0
    %1693 = vmatpush1.msra.mxu0 0.0
    %1694 = vmatprep.subr.mxu0 0.0
    %1695 = vmatpush1.msra.mxu0 0.0
    %1696 = vmatprep.subr.mxu0 0.0
    %1697 = vmatpush1.msra.mxu0 0.0
    %1698 = vmatprep.subr.mxu0 0.0
    %1699 = vmatpush1.msra.mxu0 0.0
    %1700 = vmatprep.subr.mxu0 0.0
    %1701 = vmatpush1.msra.mxu0 0.0
    %1702 = vmatprep.subr.mxu0 0.0
    %1703 = vmatpush1.msra.mxu0 0.0
    %1704 = vmatprep.subr.mxu0 0.0
    %1705 = vmatpush1.msra.mxu0 0.0
    %1706 = vmatprep.subr.mxu0 0.0
    %1707 = vmatpush1.msra.mxu0 0.0
    %1708 = vmatprep.subr.mxu0 0.0
    %1709 = vmatpush1.msra.mxu0 0.0
    %1710 = vmatprep.subr.mxu0 0.0
    %1711 = vmatpush1.msra.mxu0 0.0
    %1712 = vmatprep.mubr.f32.mxu0 0.0
    %1713 = vmatmul.mubr.f32.gmra.mrb[0].mxu0 %v1646
    %v1714 = vpop.f32.mrb[0].mxu0
    %v1715 = vadd.f32 %v1642, %v1714
    %v1716 = vpop.f32.mrb[0].mxu0
    %1717 = vdwg.mxu0
    %v1718 = vld [vmem:[%s340] sm:$0xff]
    %v1720 = vsel %vm35, %v1718, 0
    %1722 = vmatprep.subr.mxu0 0.0
    %1723 = vmatpush1.msra.mxu0 %v1422
    %1724 = vmatprep.subr.mxu0 0.0
    %1725 = vmatpush1.msra.mxu0 0.0
    %1726 = vmatprep.subr.mxu0 0.0
    %1727 = vmatpush1.msra.mxu0 0.0
    %1728 = vmatprep.subr.mxu0 0.0
    %1729 = vmatpush1.msra.mxu0 0.0
    %1730 = vmatprep.subr.mxu0 0.0
    %1731 = vmatpush1.msra.mxu0 0.0
    %1732 = vmatprep.subr.mxu0 0.0
    %1733 = vmatpush1.msra.mxu0 0.0
    %1734 = vmatprep.subr.mxu0 0.0
    %1735 = vmatpush1.msra.mxu0 0.0
    %1736 = vmatprep.subr.mxu0 0.0
    %1737 = vmatpush1.msra.mxu0 0.0
    %1738 = vmatprep.subr.mxu0 0.0
    %1739 = vmatpush1.msra.mxu0 0.0
    %1740 = vmatprep.subr.mxu0 0.0
    %1741 = vmatpush1.msra.mxu0 0.0
    %1742 = vmatprep.subr.mxu0 0.0
    %1743 = vmatpush1.msra.mxu0 0.0
    %1744 = vmatprep.subr.mxu0 0.0
    %1745 = vmatpush1.msra.mxu0 0.0
    %1746 = vmatprep.subr.mxu0 0.0
    %1747 = vmatpush1.msra.mxu0 0.0
    %1748 = vmatprep.subr.mxu0 0.0
    %1749 = vmatpush1.msra.mxu0 0.0
    %1750 = vmatprep.subr.mxu0 0.0
    %1751 = vmatpush1.msra.mxu0 0.0
    %1752 = vmatprep.subr.mxu0 0.0
    %1753 = vmatpush1.msra.mxu0 0.0
    %1754 = vmatprep.subr.mxu0 0.0
    %1755 = vmatpush1.msra.mxu0 0.0
    %1756 = vmatprep.subr.mxu0 0.0
    %1757 = vmatpush1.msra.mxu0 0.0
    %1758 = vmatprep.subr.mxu0 0.0
    %1759 = vmatpush1.msra.mxu0 0.0
    %1760 = vmatprep.subr.mxu0 0.0
    %1761 = vmatpush1.msra.mxu0 0.0
    %1762 = vmatprep.subr.mxu0 0.0
    %1763 = vmatpush1.msra.mxu0 0.0
    %1764 = vmatprep.subr.mxu0 0.0
    %1765 = vmatpush1.msra.mxu0 0.0
    %1766 = vmatprep.subr.mxu0 0.0
    %1767 = vmatpush1.msra.mxu0 0.0
    %1768 = vmatprep.subr.mxu0 0.0
    %1769 = vmatpush1.msra.mxu0 0.0
    %1770 = vmatprep.subr.mxu0 0.0
    %1771 = vmatpush1.msra.mxu0 0.0
    %1772 = vmatprep.subr.mxu0 0.0
    %1773 = vmatpush1.msra.mxu0 0.0
    %1774 = vmatprep.subr.mxu0 0.0
    %1775 = vmatpush1.msra.mxu0 0.0
    %1776 = vmatprep.subr.mxu0 0.0
    %1777 = vmatpush1.msra.mxu0 0.0
    %1778 = vmatprep.subr.mxu0 0.0
    %1779 = vmatpush1.msra.mxu0 0.0
    %1780 = vmatprep.subr.mxu0 0.0
    %1781 = vmatpush1.msra.mxu0 0.0
    %1782 = vmatprep.subr.mxu0 0.0
    %1783 = vmatpush1.msra.mxu0 0.0
    %1784 = vmatprep.subr.mxu0 0.0
    %1785 = vmatpush1.msra.mxu0 0.0
    %1786 = vmatprep.mubr.f32.mxu0 0.0
    %1787 = vmatmul.mubr.f32.gmra.mrb[0].mxu0 %v1720
    %v1788 = vpop.f32.mrb[0].mxu0
    %v1789 = vadd.f32 0.0, %v1788
    %v1790 = vpop.f32.mrb[0].mxu0
    %1791 = vdwg.mxu0
    %v1792 = vld [vmem:[%s415] sm:$0xff]
    %v1793 = vld [vmem:[%s415 + $0x8] sm:$0xff]
    %v1795 = vsel %vm193, %v1789, 0
    %1797 = vmatprep.subr.mxu0 0.0
    %1798 = vmatpush1.msra.mxu0 %v1792
    %1799 = vmatprep.subr.mxu0 0.0
    %1800 = vmatpush1.msra.mxu0 %v1793
    %1801 = vmatprep.subr.mxu0 0.0
    %1802 = vmatpush1.msra.mxu0 0.0
    %1803 = vmatprep.subr.mxu0 0.0
    %1804 = vmatpush1.msra.mxu0 0.0
    %1805 = vmatprep.subr.mxu0 0.0
    %1806 = vmatpush1.msra.mxu0 0.0
    %1807 = vmatprep.subr.mxu0 0.0
    %1808 = vmatpush1.msra.mxu0 0.0
    %1809 = vmatprep.subr.mxu0 0.0
    %1810 = vmatpush1.msra.mxu0 0.0
    %1811 = vmatprep.subr.mxu0 0.0
    %1812 = vmatpush1.msra.mxu0 0.0
    %1813 = vmatprep.subr.mxu0 0.0
    %1814 = vmatpush1.msra.mxu0 0.0
    %1815 = vmatprep.subr.mxu0 0.0
    %1816 = vmatpush1.msra.mxu0 0.0
    %1817 = vmatprep.subr.mxu0 0.0
    %1818 = vmatpush1.msra.mxu0 0.0
    %1819 = vmatprep.subr.mxu0 0.0
    %1820 = vmatpush1.msra.mxu0 0.0
    %1821 = vmatprep.subr.mxu0 0.0
    %1822 = vmatpush1.msra.mxu0 0.0
    %1823 = vmatprep.subr.mxu0 0.0
    %1824 = vmatpush1.msra.mxu0 0.0
    %1825 = vmatprep.subr.mxu0 0.0
    %1826 = vmatpush1.msra.mxu0 0.0
    %1827 = vmatprep.subr.mxu0 0.0
    %1828 = vmatpush1.msra.mxu0 0.0
    %1829 = vmatprep.subr.mxu0 0.0
    %1830 = vmatpush1.msra.mxu0 0.0
    %1831 = vmatprep.subr.mxu0 0.0
    %1832 = vmatpush1.msra.mxu0 0.0
    %1833 = vmatprep.subr.mxu0 0.0
    %1834 = vmatpush1.msra.mxu0 0.0
    %1835 = vmatprep.subr.mxu0 0.0
    %1836 = vmatpush1.msra.mxu0 0.0
    %1837 = vmatprep.subr.mxu0 0.0
    %1838 = vmatpush1.msra.mxu0 0.0
    %1839 = vmatprep.subr.mxu0 0.0
    %1840 = vmatpush1.msra.mxu0 0.0
    %1841 = vmatprep.subr.mxu0 0.0
    %1842 = vmatpush1.msra.mxu0 0.0
    %1843 = vmatprep.subr.mxu0 0.0
    %1844 = vmatpush1.msra.mxu0 0.0
    %1845 = vmatprep.subr.mxu0 0.0
    %1846 = vmatpush1.msra.mxu0 0.0
    %1847 = vmatprep.subr.mxu0 0.0
    %1848 = vmatpush1.msra.mxu0 0.0
    %1849 = vmatprep.subr.mxu0 0.0
    %1850 = vmatpush1.msra.mxu0 0.0
    %1851 = vmatprep.subr.mxu0 0.0
    %1852 = vmatpush1.msra.mxu0 0.0
    %1853 = vmatprep.subr.mxu0 0.0
    %1854 = vmatpush1.msra.mxu0 0.0
    %1855 = vmatprep.subr.mxu0 0.0
    %1856 = vmatpush1.msra.mxu0 0.0
    %1857 = vmatprep.subr.mxu0 0.0
    %1858 = vmatpush1.msra.mxu0 0.0
    %1859 = vmatprep.subr.mxu0 0.0
    %1860 = vmatpush1.msra.mxu0 0.0
    %1861 = vmatprep.mubr.f32.mxu0 0.0
    %1862 = vmatmul.mubr.f32.gmra.mrb[0].mxu0 %v1795
    %v1863 = vpop.f32.mrb[0].mxu0
    %v1864 = vadd.f32 0.0, %v1863
    %v1865 = vpop.f32.mrb[0].mxu0
    %1866 = vdwg.mxu0
    %v1867 = vadd.f32 %v1715, %v1864
    %v1868 = vadd.f32 %v1867, %v495
    %v1869 = vmax.f32 %v1868, 0.0
    %s1870 = scalar_lea.vmem [#allocation5], 24
    %1871 = vst.msk [vmem:[%s1870] sm:$0xff] %vm499, %v1869
    %s1872 = scalar_lea.vmem [#allocation2], 16
    %v1873 = vld [vmem:[%s1872] sm:$0xf]
    %v1874 = vld [vmem:[%s2] sm:$0xff]
    %v1876 = vsel %vm35, %v1874, 0
    %v1879 = vsel %vm39, %v1873, 0
    %1881 = vmatprep.subr.mxu0 0.0
    %1882 = vmatpush1.msra.mxu0 %v1879
    %1883 = vmatprep.subr.mxu0 0.0
    %1884 = vmatpush1.msra.mxu0 0.0
    %1885 = vmatprep.subr.mxu0 0.0
    %1886 = vmatpush1.msra.mxu0 0.0
    %1887 = vmatprep.subr.mxu0 0.0
    %1888 = vmatpush1.msra.mxu0 0.0
    %1889 = vmatprep.subr.mxu0 0.0
    %1890 = vmatpush1.msra.mxu0 0.0
    %1891 = vmatprep.subr.mxu0 0.0
    %1892 = vmatpush1.msra.mxu0 0.0
    %1893 = vmatprep.subr.mxu0 0.0
    %1894 = vmatpush1.msra.mxu0 0.0
    %1895 = vmatprep.subr.mxu0 0.0
    %1896 = vmatpush1.msra.mxu0 0.0
    %1897 = vmatprep.subr.mxu0 0.0
    %1898 = vmatpush1.msra.mxu0 0.0
    %1899 = vmatprep.subr.mxu0 0.0
    %1900 = vmatpush1.msra.mxu0 0.0
    %1901 = vmatprep.subr.mxu0 0.0
    %1902 = vmatpush1.msra.mxu0 0.0
    %1903 = vmatprep.subr.mxu0 0.0
    %1904 = vmatpush1.msra.mxu0 0.0
    %1905 = vmatprep.subr.mxu0 0.0
    %1906 = vmatpush1.msra.mxu0 0.0
    %1907 = vmatprep.subr.mxu0 0.0
    %1908 = vmatpush1.msra.mxu0 0.0
    %1909 = vmatprep.subr.mxu0 0.0
    %1910 = vmatpush1.msra.mxu0 0.0
    %1911 = vmatprep.subr.mxu0 0.0
    %1912 = vmatpush1.msra.mxu0 0.0
    %1913 = vmatprep.subr.mxu0 0.0
    %1914 = vmatpush1.msra.mxu0 0.0
    %1915 = vmatprep.subr.mxu0 0.0
    %1916 = vmatpush1.msra.mxu0 0.0
    %1917 = vmatprep.subr.mxu0 0.0
    %1918 = vmatpush1.msra.mxu0 0.0
    %1919 = vmatprep.subr.mxu0 0.0
    %1920 = vmatpush1.msra.mxu0 0.0
    %1921 = vmatprep.subr.mxu0 0.0
    %1922 = vmatpush1.msra.mxu0 0.0
    %1923 = vmatprep.subr.mxu0 0.0
    %1924 = vmatpush1.msra.mxu0 0.0
    %1925 = vmatprep.subr.mxu0 0.0
    %1926 = vmatpush1.msra.mxu0 0.0
    %1927 = vmatprep.subr.mxu0 0.0
    %1928 = vmatpush1.msra.mxu0 0.0
    %1929 = vmatprep.subr.mxu0 0.0
    %1930 = vmatpush1.msra.mxu0 0.0
    %1931 = vmatprep.subr.mxu0 0.0
    %1932 = vmatpush1.msra.mxu0 0.0
    %1933 = vmatprep.subr.mxu0 0.0
    %1934 = vmatpush1.msra.mxu0 0.0
    %1935 = vmatprep.subr.mxu0 0.0
    %1936 = vmatpush1.msra.mxu0 0.0
    %1937 = vmatprep.subr.mxu0 0.0
    %1938 = vmatpush1.msra.mxu0 0.0
    %1939 = vmatprep.subr.mxu0 0.0
    %1940 = vmatpush1.msra.mxu0 0.0
    %1941 = vmatprep.subr.mxu0 0.0
    %1942 = vmatpush1.msra.mxu0 0.0
    %1943 = vmatprep.subr.mxu0 0.0
    %1944 = vmatpush1.msra.mxu0 0.0
    %1945 = vmatprep.mubr.f32.mxu0 0.0
    %1946 = vmatmul.mubr.f32.gmra.mrb[0].mxu0 %v1876
    %v1947 = vpop.f32.mrb[0].mxu0
    %v1948 = vadd.f32 0.0, %v1947
    %v1949 = vpop.f32.mrb[0].mxu0
    %1950 = vdwg.mxu0
    %v1951 = vld [vmem:[%s1] sm:$0xff]
    %v1952 = vld [vmem:[%s1 + $0x8] sm:$0xff]
    %v1953 = vld [vmem:[%s115] sm:$0xff]
    %v1955 = vsel %vm35, %v1953, 0
    %1957 = vmatprep.subr.mxu0 0.0
    %1958 = vmatpush1.msra.mxu0 %v1879
    %1959 = vmatprep.subr.mxu0 0.0
    %1960 = vmatpush1.msra.mxu0 0.0
    %1961 = vmatprep.subr.mxu0 0.0
    %1962 = vmatpush1.msra.mxu0 0.0
    %1963 = vmatprep.subr.mxu0 0.0
    %1964 = vmatpush1.msra.mxu0 0.0
    %1965 = vmatprep.subr.mxu0 0.0
    %1966 = vmatpush1.msra.mxu0 0.0
    %1967 = vmatprep.subr.mxu0 0.0
    %1968 = vmatpush1.msra.mxu0 0.0
    %1969 = vmatprep.subr.mxu0 0.0
    %1970 = vmatpush1.msra.mxu0 0.0
    %1971 = vmatprep.subr.mxu0 0.0
    %1972 = vmatpush1.msra.mxu0 0.0
    %1973 = vmatprep.subr.mxu0 0.0
    %1974 = vmatpush1.msra.mxu0 0.0
    %1975 = vmatprep.subr.mxu0 0.0
    %1976 = vmatpush1.msra.mxu0 0.0
    %1977 = vmatprep.subr.mxu0 0.0
    %1978 = vmatpush1.msra.mxu0 0.0
    %1979 = vmatprep.subr.mxu0 0.0
    %1980 = vmatpush1.msra.mxu0 0.0
    %1981 = vmatprep.subr.mxu0 0.0
    %1982 = vmatpush1.msra.mxu0 0.0
    %1983 = vmatprep.subr.mxu0 0.0
    %1984 = vmatpush1.msra.mxu0 0.0
    %1985 = vmatprep.subr.mxu0 0.0
    %1986 = vmatpush1.msra.mxu0 0.0
    %1987 = vmatprep.subr.mxu0 0.0
    %1988 = vmatpush1.msra.mxu0 0.0
    %1989 = vmatprep.subr.mxu0 0.0
    %1990 = vmatpush1.msra.mxu0 0.0
    %1991 = vmatprep.subr.mxu0 0.0
    %1992 = vmatpush1.msra.mxu0 0.0
    %1993 = vmatprep.subr.mxu0 0.0
    %1994 = vmatpush1.msra.mxu0 0.0
    %1995 = vmatprep.subr.mxu0 0.0
    %1996 = vmatpush1.msra.mxu0 0.0
    %1997 = vmatprep.subr.mxu0 0.0
    %1998 = vmatpush1.msra.mxu0 0.0
    %1999 = vmatprep.subr.mxu0 0.0
    %2000 = vmatpush1.msra.mxu0 0.0
    %2001 = vmatprep.subr.mxu0 0.0
    %2002 = vmatpush1.msra.mxu0 0.0
    %2003 = vmatprep.subr.mxu0 0.0
    %2004 = vmatpush1.msra.mxu0 0.0
    %2005 = vmatprep.subr.mxu0 0.0
    %2006 = vmatpush1.msra.mxu0 0.0
    %2007 = vmatprep.subr.mxu0 0.0
    %2008 = vmatpush1.msra.mxu0 0.0
    %2009 = vmatprep.subr.mxu0 0.0
    %2010 = vmatpush1.msra.mxu0 0.0
    %2011 = vmatprep.subr.mxu0 0.0
    %2012 = vmatpush1.msra.mxu0 0.0
    %2013 = vmatprep.subr.mxu0 0.0
    %2014 = vmatpush1.msra.mxu0 0.0
    %2015 = vmatprep.subr.mxu0 0.0
    %2016 = vmatpush1.msra.mxu0 0.0
    %2017 = vmatprep.subr.mxu0 0.0
    %2018 = vmatpush1.msra.mxu0 0.0
    %2019 = vmatprep.subr.mxu0 0.0
    %2020 = vmatpush1.msra.mxu0 0.0
    %2021 = vmatprep.mubr.f32.mxu0 0.0
    %2022 = vmatmul.mubr.f32.gmra.mrb[0].mxu0 %v1955
    %v2023 = vpop.f32.mrb[0].mxu0
    %v2024 = vadd.f32 0.0, %v2023
    %v2025 = vpop.f32.mrb[0].mxu0
    %2026 = vdwg.mxu0
    %v2027 = vld [vmem:[%s190] sm:$0xff]
    %v2028 = vld [vmem:[%s190 + $0x8] sm:$0xff]
    %v2030 = vsel %vm193, %v2024, 0
    %2032 = vmatprep.subr.mxu0 0.0
    %2033 = vmatpush1.msra.mxu0 %v2027
    %2034 = vmatprep.subr.mxu0 0.0
    %2035 = vmatpush1.msra.mxu0 %v2028
    %2036 = vmatprep.subr.mxu0 0.0
    %2037 = vmatpush1.msra.mxu0 0.0
    %2038 = vmatprep.subr.mxu0 0.0
    %2039 = vmatpush1.msra.mxu0 0.0
    %2040 = vmatprep.subr.mxu0 0.0
    %2041 = vmatpush1.msra.mxu0 0.0
    %2042 = vmatprep.subr.mxu0 0.0
    %2043 = vmatpush1.msra.mxu0 0.0
    %2044 = vmatprep.subr.mxu0 0.0
    %2045 = vmatpush1.msra.mxu0 0.0
    %2046 = vmatprep.subr.mxu0 0.0
    %2047 = vmatpush1.msra.mxu0 0.0
    %2048 = vmatprep.subr.mxu0 0.0
    %2049 = vmatpush1.msra.mxu0 0.0
    %2050 = vmatprep.subr.mxu0 0.0
    %2051 = vmatpush1.msra.mxu0 0.0
    %2052 = vmatprep.subr.mxu0 0.0
    %2053 = vmatpush1.msra.mxu0 0.0
    %2054 = vmatprep.subr.mxu0 0.0
    %2055 = vmatpush1.msra.mxu0 0.0
    %2056 = vmatprep.subr.mxu0 0.0
    %2057 = vmatpush1.msra.mxu0 0.0
    %2058 = vmatprep.subr.mxu0 0.0
    %2059 = vmatpush1.msra.mxu0 0.0
    %2060 = vmatprep.subr.mxu0 0.0
    %2061 = vmatpush1.msra.mxu0 0.0
    %2062 = vmatprep.subr.mxu0 0.0
    %2063 = vmatpush1.msra.mxu0 0.0
    %2064 = vmatprep.subr.mxu0 0.0
    %2065 = vmatpush1.msra.mxu0 0.0
    %2066 = vmatprep.subr.mxu0 0.0
    %2067 = vmatpush1.msra.mxu0 0.0
    %2068 = vmatprep.subr.mxu0 0.0
    %2069 = vmatpush1.msra.mxu0 0.0
    %2070 = vmatprep.subr.mxu0 0.0
    %2071 = vmatpush1.msra.mxu0 0.0
    %2072 = vmatprep.subr.mxu0 0.0
    %2073 = vmatpush1.msra.mxu0 0.0
    %2074 = vmatprep.subr.mxu0 0.0
    %2075 = vmatpush1.msra.mxu0 0.0
    %2076 = vmatprep.subr.mxu0 0.0
    %2077 = vmatpush1.msra.mxu0 0.0
    %2078 = vmatprep.subr.mxu0 0.0
    %2079 = vmatpush1.msra.mxu0 0.0
    %2080 = vmatprep.subr.mxu0 0.0
    %2081 = vmatpush1.msra.mxu0 0.0
    %2082 = vmatprep.subr.mxu0 0.0
    %2083 = vmatpush1.msra.mxu0 0.0
    %2084 = vmatprep.subr.mxu0 0.0
    %2085 = vmatpush1.msra.mxu0 0.0
    %2086 = vmatprep.subr.mxu0 0.0
    %2087 = vmatpush1.msra.mxu0 0.0
    %2088 = vmatprep.subr.mxu0 0.0
    %2089 = vmatpush1.msra.mxu0 0.0
    %2090 = vmatprep.subr.mxu0 0.0
    %2091 = vmatpush1.msra.mxu0 0.0
    %2092 = vmatprep.subr.mxu0 0.0
    %2093 = vmatpush1.msra.mxu0 0.0
    %2094 = vmatprep.subr.mxu0 0.0
    %2095 = vmatpush1.msra.mxu0 0.0
    %2096 = vmatprep.mubr.f32.mxu0 0.0
    %2097 = vmatmul.mubr.f32.gmra.mrb[0].mxu0 %v2030
    %v2098 = vpop.f32.mrb[0].mxu0
    %v2099 = vadd.f32 0.0, %v2098
    %v2100 = vpop.f32.mrb[0].mxu0
    %2101 = vdwg.mxu0
    %v2103 = vsel %vm193, %v1948, 0
    %2105 = vmatprep.subr.mxu0 0.0
    %2106 = vmatpush1.msra.mxu0 %v1951
    %2107 = vmatprep.subr.mxu0 0.0
    %2108 = vmatpush1.msra.mxu0 %v1952
    %2109 = vmatprep.subr.mxu0 0.0
    %2110 = vmatpush1.msra.mxu0 0.0
    %2111 = vmatprep.subr.mxu0 0.0
    %2112 = vmatpush1.msra.mxu0 0.0
    %2113 = vmatprep.subr.mxu0 0.0
    %2114 = vmatpush1.msra.mxu0 0.0
    %2115 = vmatprep.subr.mxu0 0.0
    %2116 = vmatpush1.msra.mxu0 0.0
    %2117 = vmatprep.subr.mxu0 0.0
    %2118 = vmatpush1.msra.mxu0 0.0
    %2119 = vmatprep.subr.mxu0 0.0
    %2120 = vmatpush1.msra.mxu0 0.0
    %2121 = vmatprep.subr.mxu0 0.0
    %2122 = vmatpush1.msra.mxu0 0.0
    %2123 = vmatprep.subr.mxu0 0.0
    %2124 = vmatpush1.msra.mxu0 0.0
    %2125 = vmatprep.subr.mxu0 0.0
    %2126 = vmatpush1.msra.mxu0 0.0
    %2127 = vmatprep.subr.mxu0 0.0
    %2128 = vmatpush1.msra.mxu0 0.0
    %2129 = vmatprep.subr.mxu0 0.0
    %2130 = vmatpush1.msra.mxu0 0.0
    %2131 = vmatprep.subr.mxu0 0.0
    %2132 = vmatpush1.msra.mxu0 0.0
    %2133 = vmatprep.subr.mxu0 0.0
    %2134 = vmatpush1.msra.mxu0 0.0
    %2135 = vmatprep.subr.mxu0 0.0
    %2136 = vmatpush1.msra.mxu0 0.0
    %2137 = vmatprep.subr.mxu0 0.0
    %2138 = vmatpush1.msra.mxu0 0.0
    %2139 = vmatprep.subr.mxu0 0.0
    %2140 = vmatpush1.msra.mxu0 0.0
    %2141 = vmatprep.subr.mxu0 0.0
    %2142 = vmatpush1.msra.mxu0 0.0
    %2143 = vmatprep.subr.mxu0 0.0
    %2144 = vmatpush1.msra.mxu0 0.0
    %2145 = vmatprep.subr.mxu0 0.0
    %2146 = vmatpush1.msra.mxu0 0.0
    %2147 = vmatprep.subr.mxu0 0.0
    %2148 = vmatpush1.msra.mxu0 0.0
    %2149 = vmatprep.subr.mxu0 0.0
    %2150 = vmatpush1.msra.mxu0 0.0
    %2151 = vmatprep.subr.mxu0 0.0
    %2152 = vmatpush1.msra.mxu0 0.0
    %2153 = vmatprep.subr.mxu0 0.0
    %2154 = vmatpush1.msra.mxu0 0.0
    %2155 = vmatprep.subr.mxu0 0.0
    %2156 = vmatpush1.msra.mxu0 0.0
    %2157 = vmatprep.subr.mxu0 0.0
    %2158 = vmatpush1.msra.mxu0 0.0
    %2159 = vmatprep.subr.mxu0 0.0
    %2160 = vmatpush1.msra.mxu0 0.0
    %2161 = vmatprep.subr.mxu0 0.0
    %2162 = vmatpush1.msra.mxu0 0.0
    %2163 = vmatprep.subr.mxu0 0.0
    %2164 = vmatpush1.msra.mxu0 0.0
    %2165 = vmatprep.subr.mxu0 0.0
    %2166 = vmatpush1.msra.mxu0 0.0
    %2167 = vmatprep.subr.mxu0 0.0
    %2168 = vmatpush1.msra.mxu0 0.0
    %2169 = vmatprep.mubr.f32.mxu0 0.0
    %2170 = vmatmul.mubr.f32.gmra.mrb[0].mxu0 %v2103
    %v2171 = vpop.f32.mrb[0].mxu0
    %v2172 = vadd.f32 %v2099, %v2171
    %v2173 = vpop.f32.mrb[0].mxu0
    %2174 = vdwg.mxu0
    %v2175 = vld [vmem:[%s340] sm:$0xff]
    %v2177 = vsel %vm35, %v2175, 0
    %2179 = vmatprep.subr.mxu0 0.0
    %2180 = vmatpush1.msra.mxu0 %v1879
    %2181 = vmatprep.subr.mxu0 0.0
    %2182 = vmatpush1.msra.mxu0 0.0
    %2183 = vmatprep.subr.mxu0 0.0
    %2184 = vmatpush1.msra.mxu0 0.0
    %2185 = vmatprep.subr.mxu0 0.0
    %2186 = vmatpush1.msra.mxu0 0.0
    %2187 = vmatprep.subr.mxu0 0.0
    %2188 = vmatpush1.msra.mxu0 0.0
    %2189 = vmatprep.subr.mxu0 0.0
    %2190 = vmatpush1.msra.mxu0 0.0
    %2191 = vmatprep.subr.mxu0 0.0
    %2192 = vmatpush1.msra.mxu0 0.0
    %2193 = vmatprep.subr.mxu0 0.0
    %2194 = vmatpush1.msra.mxu0 0.0
    %2195 = vmatprep.subr.mxu0 0.0
    %2196 = vmatpush1.msra.mxu0 0.0
    %2197 = vmatprep.subr.mxu0 0.0
    %2198 = vmatpush1.msra.mxu0 0.0
    %2199 = vmatprep.subr.mxu0 0.0
    %2200 = vmatpush1.msra.mxu0 0.0
    %2201 = vmatprep.subr.mxu0 0.0
    %2202 = vmatpush1.msra.mxu0 0.0
    %2203 = vmatprep.subr.mxu0 0.0
    %2204 = vmatpush1.msra.mxu0 0.0
    %2205 = vmatprep.subr.mxu0 0.0
    %2206 = vmatpush1.msra.mxu0 0.0
    %2207 = vmatprep.subr.mxu0 0.0
    %2208 = vmatpush1.msra.mxu0 0.0
    %2209 = vmatprep.subr.mxu0 0.0
    %2210 = vmatpush1.msra.mxu0 0.0
    %2211 = vmatprep.subr.mxu0 0.0
    %2212 = vmatpush1.msra.mxu0 0.0
    %2213 = vmatprep.subr.mxu0 0.0
    %2214 = vmatpush1.msra.mxu0 0.0
    %2215 = vmatprep.subr.mxu0 0.0
    %2216 = vmatpush1.msra.mxu0 0.0
    %2217 = vmatprep.subr.mxu0 0.0
    %2218 = vmatpush1.msra.mxu0 0.0
    %2219 = vmatprep.subr.mxu0 0.0
    %2220 = vmatpush1.msra.mxu0 0.0
    %2221 = vmatprep.subr.mxu0 0.0
    %2222 = vmatpush1.msra.mxu0 0.0
    %2223 = vmatprep.subr.mxu0 0.0
    %2224 = vmatpush1.msra.mxu0 0.0
    %2225 = vmatprep.subr.mxu0 0.0
    %2226 = vmatpush1.msra.mxu0 0.0
    %2227 = vmatprep.subr.mxu0 0.0
    %2228 = vmatpush1.msra.mxu0 0.0
    %2229 = vmatprep.subr.mxu0 0.0
    %2230 = vmatpush1.msra.mxu0 0.0
    %2231 = vmatprep.subr.mxu0 0.0
    %2232 = vmatpush1.msra.mxu0 0.0
    %2233 = vmatprep.subr.mxu0 0.0
    %2234 = vmatpush1.msra.mxu0 0.0
    %2235 = vmatprep.subr.mxu0 0.0
    %2236 = vmatpush1.msra.mxu0 0.0
    %2237 = vmatprep.subr.mxu0 0.0
    %2238 = vmatpush1.msra.mxu0 0.0
    %2239 = vmatprep.subr.mxu0 0.0
    %2240 = vmatpush1.msra.mxu0 0.0
    %2241 = vmatprep.subr.mxu0 0.0
    %2242 = vmatpush1.msra.mxu0 0.0
    %2243 = vmatprep.mubr.f32.mxu0 0.0
    %2244 = vmatmul.mubr.f32.gmra.mrb[0].mxu0 %v2177
    %v2245 = vpop.f32.mrb[0].mxu0
    %v2246 = vadd.f32 0.0, %v2245
    %v2247 = vpop.f32.mrb[0].mxu0
    %2248 = vdwg.mxu0
    %v2249 = vld [vmem:[%s415] sm:$0xff]
    %v2250 = vld [vmem:[%s415 + $0x8] sm:$0xff]
    %v2252 = vsel %vm193, %v2246, 0
    %2254 = vmatprep.subr.mxu0 0.0
    %2255 = vmatpush1.msra.mxu0 %v2249
    %2256 = vmatprep.subr.mxu0 0.0
    %2257 = vmatpush1.msra.mxu0 %v2250
    %2258 = vmatprep.subr.mxu0 0.0
    %2259 = vmatpush1.msra.mxu0 0.0
    %2260 = vmatprep.subr.mxu0 0.0
    %2261 = vmatpush1.msra.mxu0 0.0
    %2262 = vmatprep.subr.mxu0 0.0
    %2263 = vmatpush1.msra.mxu0 0.0
    %2264 = vmatprep.subr.mxu0 0.0
    %2265 = vmatpush1.msra.mxu0 0.0
    %2266 = vmatprep.subr.mxu0 0.0
    %2267 = vmatpush1.msra.mxu0 0.0
    %2268 = vmatprep.subr.mxu0 0.0
    %2269 = vmatpush1.msra.mxu0 0.0
    %2270 = vmatprep.subr.mxu0 0.0
    %2271 = vmatpush1.msra.mxu0 0.0
    %2272 = vmatprep.subr.mxu0 0.0
    %2273 = vmatpush1.msra.mxu0 0.0
    %2274 = vmatprep.subr.mxu0 0.0
    %2275 = vmatpush1.msra.mxu0 0.0
    %2276 = vmatprep.subr.mxu0 0.0
    %2277 = vmatpush1.msra.mxu0 0.0
    %2278 = vmatprep.subr.mxu0 0.0
    %2279 = vmatpush1.msra.mxu0 0.0
    %2280 = vmatprep.subr.mxu0 0.0
    %2281 = vmatpush1.msra.mxu0 0.0
    %2282 = vmatprep.subr.mxu0 0.0
    %2283 = vmatpush1.msra.mxu0 0.0
    %2284 = vmatprep.subr.mxu0 0.0
    %2285 = vmatpush1.msra.mxu0 0.0
    %2286 = vmatprep.subr.mxu0 0.0
    %2287 = vmatpush1.msra.mxu0 0.0
    %2288 = vmatprep.subr.mxu0 0.0
    %2289 = vmatpush1.msra.mxu0 0.0
    %2290 = vmatprep.subr.mxu0 0.0
    %2291 = vmatpush1.msra.mxu0 0.0
    %2292 = vmatprep.subr.mxu0 0.0
    %2293 = vmatpush1.msra.mxu0 0.0
    %2294 = vmatprep.subr.mxu0 0.0
    %2295 = vmatpush1.msra.mxu0 0.0
    %2296 = vmatprep.subr.mxu0 0.0
    %2297 = vmatpush1.msra.mxu0 0.0
    %2298 = vmatprep.subr.mxu0 0.0
    %2299 = vmatpush1.msra.mxu0 0.0
    %2300 = vmatprep.subr.mxu0 0.0
    %2301 = vmatpush1.msra.mxu0 0.0
    %2302 = vmatprep.subr.mxu0 0.0
    %2303 = vmatpush1.msra.mxu0 0.0
    %2304 = vmatprep.subr.mxu0 0.0
    %2305 = vmatpush1.msra.mxu0 0.0
    %2306 = vmatprep.subr.mxu0 0.0
    %2307 = vmatpush1.msra.mxu0 0.0
    %2308 = vmatprep.subr.mxu0 0.0
    %2309 = vmatpush1.msra.mxu0 0.0
    %2310 = vmatprep.subr.mxu0 0.0
    %2311 = vmatpush1.msra.mxu0 0.0
    %2312 = vmatprep.subr.mxu0 0.0
    %2313 = vmatpush1.msra.mxu0 0.0
    %2314 = vmatprep.subr.mxu0 0.0
    %2315 = vmatpush1.msra.mxu0 0.0
    %2316 = vmatprep.subr.mxu0 0.0
    %2317 = vmatpush1.msra.mxu0 0.0
    %2318 = vmatprep.mubr.f32.mxu0 0.0
    %2319 = vmatmul.mubr.f32.gmra.mrb[0].mxu0 %v2252
    %v2320 = vpop.f32.mrb[0].mxu0
    %v2321 = vadd.f32 0.0, %v2320
    %v2322 = vpop.f32.mrb[0].mxu0
    %2323 = vdwg.mxu0
    %v2324 = vadd.f32 %v2172, %v2321
    %v2325 = vadd.f32 %v2324, %v495
    %v2326 = vmax.f32 %v2325, 0.0
    %s2327 = scalar_lea.vmem [#allocation5], 32
    %2328 = vst.msk [vmem:[%s2327] sm:$0xff] %vm499, %v2326
    %s2329 = scalar_lea.vmem [#allocation2], 20
    %v2330 = vld [vmem:[%s2329] sm:$0xf]
    %v2331 = vld [vmem:[%s2] sm:$0xff]
    %v2333 = vsel %vm35, %v2331, 0
    %v2336 = vsel %vm39, %v2330, 0
    %2338 = vmatprep.subr.mxu0 0.0
    %2339 = vmatpush1.msra.mxu0 %v2336
    %2340 = vmatprep.subr.mxu0 0.0
    %2341 = vmatpush1.msra.mxu0 0.0
    %2342 = vmatprep.subr.mxu0 0.0
    %2343 = vmatpush1.msra.mxu0 0.0
    %2344 = vmatprep.subr.mxu0 0.0
    %2345 = vmatpush1.msra.mxu0 0.0
    %2346 = vmatprep.subr.mxu0 0.0
    %2347 = vmatpush1.msra.mxu0 0.0
    %2348 = vmatprep.subr.mxu0 0.0
    %2349 = vmatpush1.msra.mxu0 0.0
    %2350 = vmatprep.subr.mxu0 0.0
    %2351 = vmatpush1.msra.mxu0 0.0
    %2352 = vmatprep.subr.mxu0 0.0
    %2353 = vmatpush1.msra.mxu0 0.0
    %2354 = vmatprep.subr.mxu0 0.0
    %2355 = vmatpush1.msra.mxu0 0.0
    %2356 = vmatprep.subr.mxu0 0.0
    %2357 = vmatpush1.msra.mxu0 0.0
    %2358 = vmatprep.subr.mxu0 0.0
    %2359 = vmatpush1.msra.mxu0 0.0
    %2360 = vmatprep.subr.mxu0 0.0
    %2361 = vmatpush1.msra.mxu0 0.0
    %2362 = vmatprep.subr.mxu0 0.0
    %2363 = vmatpush1.msra.mxu0 0.0
    %2364 = vmatprep.subr.mxu0 0.0
    %2365 = vmatpush1.msra.mxu0 0.0
    %2366 = vmatprep.subr.mxu0 0.0
    %2367 = vmatpush1.msra.mxu0 0.0
    %2368 = vmatprep.subr.mxu0 0.0
    %2369 = vmatpush1.msra.mxu0 0.0
    %2370 = vmatprep.subr.mxu0 0.0
    %2371 = vmatpush1.msra.mxu0 0.0
    %2372 = vmatprep.subr.mxu0 0.0
    %2373 = vmatpush1.msra.mxu0 0.0
    %2374 = vmatprep.subr.mxu0 0.0
    %2375 = vmatpush1.msra.mxu0 0.0
    %2376 = vmatprep.subr.mxu0 0.0
    %2377 = vmatpush1.msra.mxu0 0.0
    %2378 = vmatprep.subr.mxu0 0.0
    %2379 = vmatpush1.msra.mxu0 0.0
    %2380 = vmatprep.subr.mxu0 0.0
    %2381 = vmatpush1.msra.mxu0 0.0
    %2382 = vmatprep.subr.mxu0 0.0
    %2383 = vmatpush1.msra.mxu0 0.0
    %2384 = vmatprep.subr.mxu0 0.0
    %2385 = vmatpush1.msra.mxu0 0.0
    %2386 = vmatprep.subr.mxu0 0.0
    %2387 = vmatpush1.msra.mxu0 0.0
    %2388 = vmatprep.subr.mxu0 0.0
    %2389 = vmatpush1.msra.mxu0 0.0
    %2390 = vmatprep.subr.mxu0 0.0
    %2391 = vmatpush1.msra.mxu0 0.0
    %2392 = vmatprep.subr.mxu0 0.0
    %2393 = vmatpush1.msra.mxu0 0.0
    %2394 = vmatprep.subr.mxu0 0.0
    %2395 = vmatpush1.msra.mxu0 0.0
    %2396 = vmatprep.subr.mxu0 0.0
    %2397 = vmatpush1.msra.mxu0 0.0
    %2398 = vmatprep.subr.mxu0 0.0
    %2399 = vmatpush1.msra.mxu0 0.0
    %2400 = vmatprep.subr.mxu0 0.0
    %2401 = vmatpush1.msra.mxu0 0.0
    %2402 = vmatprep.mubr.f32.mxu0 0.0
    %2403 = vmatmul.mubr.f32.gmra.mrb[0].mxu0 %v2333
    %v2404 = vpop.f32.mrb[0].mxu0
    %v2405 = vadd.f32 0.0, %v2404
    %v2406 = vpop.f32.mrb[0].mxu0
    %2407 = vdwg.mxu0
    %v2408 = vld [vmem:[%s1] sm:$0xff]
    %v2409 = vld [vmem:[%s1 + $0x8] sm:$0xff]
    %v2410 = vld [vmem:[%s115] sm:$0xff]
    %v2412 = vsel %vm35, %v2410, 0
    %2414 = vmatprep.subr.mxu0 0.0
    %2415 = vmatpush1.msra.mxu0 %v2336
    %2416 = vmatprep.subr.mxu0 0.0
    %2417 = vmatpush1.msra.mxu0 0.0
    %2418 = vmatprep.subr.mxu0 0.0
    %2419 = vmatpush1.msra.mxu0 0.0
    %2420 = vmatprep.subr.mxu0 0.0
    %2421 = vmatpush1.msra.mxu0 0.0
    %2422 = vmatprep.subr.mxu0 0.0
    %2423 = vmatpush1.msra.mxu0 0.0
    %2424 = vmatprep.subr.mxu0 0.0
    %2425 = vmatpush1.msra.mxu0 0.0
    %2426 = vmatprep.subr.mxu0 0.0
    %2427 = vmatpush1.msra.mxu0 0.0
    %2428 = vmatprep.subr.mxu0 0.0
    %2429 = vmatpush1.msra.mxu0 0.0
    %2430 = vmatprep.subr.mxu0 0.0
    %2431 = vmatpush1.msra.mxu0 0.0
    %2432 = vmatprep.subr.mxu0 0.0
    %2433 = vmatpush1.msra.mxu0 0.0
    %2434 = vmatprep.subr.mxu0 0.0
    %2435 = vmatpush1.msra.mxu0 0.0
    %2436 = vmatprep.subr.mxu0 0.0
    %2437 = vmatpush1.msra.mxu0 0.0
    %2438 = vmatprep.subr.mxu0 0.0
    %2439 = vmatpush1.msra.mxu0 0.0
    %2440 = vmatprep.subr.mxu0 0.0
    %2441 = vmatpush1.msra.mxu0 0.0
    %2442 = vmatprep.subr.mxu0 0.0
    %2443 = vmatpush1.msra.mxu0 0.0
    %2444 = vmatprep.subr.mxu0 0.0
    %2445 = vmatpush1.msra.mxu0 0.0
    %2446 = vmatprep.subr.mxu0 0.0
    %2447 = vmatpush1.msra.mxu0 0.0
    %2448 = vmatprep.subr.mxu0 0.0
    %2449 = vmatpush1.msra.mxu0 0.0
    %2450 = vmatprep.subr.mxu0 0.0
    %2451 = vmatpush1.msra.mxu0 0.0
    %2452 = vmatprep.subr.mxu0 0.0
    %2453 = vmatpush1.msra.mxu0 0.0
    %2454 = vmatprep.subr.mxu0 0.0
    %2455 = vmatpush1.msra.mxu0 0.0
    %2456 = vmatprep.subr.mxu0 0.0
    %2457 = vmatpush1.msra.mxu0 0.0
    %2458 = vmatprep.subr.mxu0 0.0
    %2459 = vmatpush1.msra.mxu0 0.0
    %2460 = vmatprep.subr.mxu0 0.0
    %2461 = vmatpush1.msra.mxu0 0.0
    %2462 = vmatprep.subr.mxu0 0.0
    %2463 = vmatpush1.msra.mxu0 0.0
    %2464 = vmatprep.subr.mxu0 0.0
    %2465 = vmatpush1.msra.mxu0 0.0
    %2466 = vmatprep.subr.mxu0 0.0
    %2467 = vmatpush1.msra.mxu0 0.0
    %2468 = vmatprep.subr.mxu0 0.0
    %2469 = vmatpush1.msra.mxu0 0.0
    %2470 = vmatprep.subr.mxu0 0.0
    %2471 = vmatpush1.msra.mxu0 0.0
    %2472 = vmatprep.subr.mxu0 0.0
    %2473 = vmatpush1.msra.mxu0 0.0
    %2474 = vmatprep.subr.mxu0 0.0
    %2475 = vmatpush1.msra.mxu0 0.0
    %2476 = vmatprep.subr.mxu0 0.0
    %2477 = vmatpush1.msra.mxu0 0.0
    %2478 = vmatprep.mubr.f32.mxu0 0.0
    %2479 = vmatmul.mubr.f32.gmra.mrb[0].mxu0 %v2412
    %v2480 = vpop.f32.mrb[0].mxu0
    %v2481 = vadd.f32 0.0, %v2480
    %v2482 = vpop.f32.mrb[0].mxu0
    %2483 = vdwg.mxu0
    %v2484 = vld [vmem:[%s190] sm:$0xff]
    %v2485 = vld [vmem:[%s190 + $0x8] sm:$0xff]
    %v2487 = vsel %vm193, %v2481, 0
    %2489 = vmatprep.subr.mxu0 0.0
    %2490 = vmatpush1.msra.mxu0 %v2484
    %2491 = vmatprep.subr.mxu0 0.0
    %2492 = vmatpush1.msra.mxu0 %v2485
    %2493 = vmatprep.subr.mxu0 0.0
    %2494 = vmatpush1.msra.mxu0 0.0
    %2495 = vmatprep.subr.mxu0 0.0
    %2496 = vmatpush1.msra.mxu0 0.0
    %2497 = vmatprep.subr.mxu0 0.0
    %2498 = vmatpush1.msra.mxu0 0.0
    %2499 = vmatprep.subr.mxu0 0.0
    %2500 = vmatpush1.msra.mxu0 0.0
    %2501 = vmatprep.subr.mxu0 0.0
    %2502 = vmatpush1.msra.mxu0 0.0
    %2503 = vmatprep.subr.mxu0 0.0
    %2504 = vmatpush1.msra.mxu0 0.0
    %2505 = vmatprep.subr.mxu0 0.0
    %2506 = vmatpush1.msra.mxu0 0.0
    %2507 = vmatprep.subr.mxu0 0.0
    %2508 = vmatpush1.msra.mxu0 0.0
    %2509 = vmatprep.subr.mxu0 0.0
    %2510 = vmatpush1.msra.mxu0 0.0
    %2511 = vmatprep.subr.mxu0 0.0
    %2512 = vmatpush1.msra.mxu0 0.0
    %2513 = vmatprep.subr.mxu0 0.0
    %2514 = vmatpush1.msra.mxu0 0.0
    %2515 = vmatprep.subr.mxu0 0.0
    %2516 = vmatpush1.msra.mxu0 0.0
    %2517 = vmatprep.subr.mxu0 0.0
    %2518 = vmatpush1.msra.mxu0 0.0
    %2519 = vmatprep.subr.mxu0 0.0
    %2520 = vmatpush1.msra.mxu0 0.0
    %2521 = vmatprep.subr.mxu0 0.0
    %2522 = vmatpush1.msra.mxu0 0.0
    %2523 = vmatprep.subr.mxu0 0.0
    %2524 = vmatpush1.msra.mxu0 0.0
    %2525 = vmatprep.subr.mxu0 0.0
    %2526 = vmatpush1.msra.mxu0 0.0
    %2527 = vmatprep.subr.mxu0 0.0
    %2528 = vmatpush1.msra.mxu0 0.0
    %2529 = vmatprep.subr.mxu0 0.0
    %2530 = vmatpush1.msra.mxu0 0.0
    %2531 = vmatprep.subr.mxu0 0.0
    %2532 = vmatpush1.msra.mxu0 0.0
    %2533 = vmatprep.subr.mxu0 0.0
    %2534 = vmatpush1.msra.mxu0 0.0
    %2535 = vmatprep.subr.mxu0 0.0
    %2536 = vmatpush1.msra.mxu0 0.0
    %2537 = vmatprep.subr.mxu0 0.0
    %2538 = vmatpush1.msra.mxu0 0.0
    %2539 = vmatprep.subr.mxu0 0.0
    %2540 = vmatpush1.msra.mxu0 0.0
    %2541 = vmatprep.subr.mxu0 0.0
    %2542 = vmatpush1.msra.mxu0 0.0
    %2543 = vmatprep.subr.mxu0 0.0
    %2544 = vmatpush1.msra.mxu0 0.0
    %2545 = vmatprep.subr.mxu0 0.0
    %2546 = vmatpush1.msra.mxu0 0.0
    %2547 = vmatprep.subr.mxu0 0.0
    %2548 = vmatpush1.msra.mxu0 0.0
    %2549 = vmatprep.subr.mxu0 0.0
    %2550 = vmatpush1.msra.mxu0 0.0
    %2551 = vmatprep.subr.mxu0 0.0
    %2552 = vmatpush1.msra.mxu0 0.0
    %2553 = vmatprep.mubr.f32.mxu0 0.0
    %2554 = vmatmul.mubr.f32.gmra.mrb[0].mxu0 %v2487
    %v2555 = vpop.f32.mrb[0].mxu0
    %v2556 = vadd.f32 0.0, %v2555
    %v2557 = vpop.f32.mrb[0].mxu0
    %2558 = vdwg.mxu0
    %v2560 = vsel %vm193, %v2405, 0
    %2562 = vmatprep.subr.mxu0 0.0
    %2563 = vmatpush1.msra.mxu0 %v2408
    %2564 = vmatprep.subr.mxu0 0.0
    %2565 = vmatpush1.msra.mxu0 %v2409
    %2566 = vmatprep.subr.mxu0 0.0
    %2567 = vmatpush1.msra.mxu0 0.0
    %2568 = vmatprep.subr.mxu0 0.0
    %2569 = vmatpush1.msra.mxu0 0.0
    %2570 = vmatprep.subr.mxu0 0.0
    %2571 = vmatpush1.msra.mxu0 0.0
    %2572 = vmatprep.subr.mxu0 0.0
    %2573 = vmatpush1.msra.mxu0 0.0
    %2574 = vmatprep.subr.mxu0 0.0
    %2575 = vmatpush1.msra.mxu0 0.0
    %2576 = vmatprep.subr.mxu0 0.0
    %2577 = vmatpush1.msra.mxu0 0.0
    %2578 = vmatprep.subr.mxu0 0.0
    %2579 = vmatpush1.msra.mxu0 0.0
    %2580 = vmatprep.subr.mxu0 0.0
    %2581 = vmatpush1.msra.mxu0 0.0
    %2582 = vmatprep.subr.mxu0 0.0
    %2583 = vmatpush1.msra.mxu0 0.0
    %2584 = vmatprep.subr.mxu0 0.0
    %2585 = vmatpush1.msra.mxu0 0.0
    %2586 = vmatprep.subr.mxu0 0.0
    %2587 = vmatpush1.msra.mxu0 0.0
    %2588 = vmatprep.subr.mxu0 0.0
    %2589 = vmatpush1.msra.mxu0 0.0
    %2590 = vmatprep.subr.mxu0 0.0
    %2591 = vmatpush1.msra.mxu0 0.0
    %2592 = vmatprep.subr.mxu0 0.0
    %2593 = vmatpush1.msra.mxu0 0.0
    %2594 = vmatprep.subr.mxu0 0.0
    %2595 = vmatpush1.msra.mxu0 0.0
    %2596 = vmatprep.subr.mxu0 0.0
    %2597 = vmatpush1.msra.mxu0 0.0
    %2598 = vmatprep.subr.mxu0 0.0
    %2599 = vmatpush1.msra.mxu0 0.0
    %2600 = vmatprep.subr.mxu0 0.0
    %2601 = vmatpush1.msra.mxu0 0.0
    %2602 = vmatprep.subr.mxu0 0.0
    %2603 = vmatpush1.msra.mxu0 0.0
    %2604 = vmatprep.subr.mxu0 0.0
    %2605 = vmatpush1.msra.mxu0 0.0
    %2606 = vmatprep.subr.mxu0 0.0
    %2607 = vmatpush1.msra.mxu0 0.0
    %2608 = vmatprep.subr.mxu0 0.0
    %2609 = vmatpush1.msra.mxu0 0.0
    %2610 = vmatprep.subr.mxu0 0.0
    %2611 = vmatpush1.msra.mxu0 0.0
    %2612 = vmatprep.subr.mxu0 0.0
    %2613 = vmatpush1.msra.mxu0 0.0
    %2614 = vmatprep.subr.mxu0 0.0
    %2615 = vmatpush1.msra.mxu0 0.0
    %2616 = vmatprep.subr.mxu0 0.0
    %2617 = vmatpush1.msra.mxu0 0.0
    %2618 = vmatprep.subr.mxu0 0.0
    %2619 = vmatpush1.msra.mxu0 0.0
    %2620 = vmatprep.subr.mxu0 0.0
    %2621 = vmatpush1.msra.mxu0 0.0
    %2622 = vmatprep.subr.mxu0 0.0
    %2623 = vmatpush1.msra.mxu0 0.0
    %2624 = vmatprep.subr.mxu0 0.0
    %2625 = vmatpush1.msra.mxu0 0.0
    %2626 = vmatprep.mubr.f32.mxu0 0.0
    %2627 = vmatmul.mubr.f32.gmra.mrb[0].mxu0 %v2560
    %v2628 = vpop.f32.mrb[0].mxu0
    %v2629 = vadd.f32 %v2556, %v2628
    %v2630 = vpop.f32.mrb[0].mxu0
    %2631 = vdwg.mxu0
    %v2632 = vld [vmem:[%s340] sm:$0xff]
    %v2634 = vsel %vm35, %v2632, 0
    %2636 = vmatprep.subr.mxu0 0.0
    %2637 = vmatpush1.msra.mxu0 %v2336
    %2638 = vmatprep.subr.mxu0 0.0
    %2639 = vmatpush1.msra.mxu0 0.0
    %2640 = vmatprep.subr.mxu0 0.0
    %2641 = vmatpush1.msra.mxu0 0.0
    %2642 = vmatprep.subr.mxu0 0.0
    %2643 = vmatpush1.msra.mxu0 0.0
    %2644 = vmatprep.subr.mxu0 0.0
    %2645 = vmatpush1.msra.mxu0 0.0
    %2646 = vmatprep.subr.mxu0 0.0
    %2647 = vmatpush1.msra.mxu0 0.0
    %2648 = vmatprep.subr.mxu0 0.0
    %2649 = vmatpush1.msra.mxu0 0.0
    %2650 = vmatprep.subr.mxu0 0.0
    %2651 = vmatpush1.msra.mxu0 0.0
    %2652 = vmatprep.subr.mxu0 0.0
    %2653 = vmatpush1.msra.mxu0 0.0
    %2654 = vmatprep.subr.mxu0 0.0
    %2655 = vmatpush1.msra.mxu0 0.0
    %2656 = vmatprep.subr.mxu0 0.0
    %2657 = vmatpush1.msra.mxu0 0.0
    %2658 = vmatprep.subr.mxu0 0.0
    %2659 = vmatpush1.msra.mxu0 0.0
    %2660 = vmatprep.subr.mxu0 0.0
    %2661 = vmatpush1.msra.mxu0 0.0
    %2662 = vmatprep.subr.mxu0 0.0
    %2663 = vmatpush1.msra.mxu0 0.0
    %2664 = vmatprep.subr.mxu0 0.0
    %2665 = vmatpush1.msra.mxu0 0.0
    %2666 = vmatprep.subr.mxu0 0.0
    %2667 = vmatpush1.msra.mxu0 0.0
    %2668 = vmatprep.subr.mxu0 0.0
    %2669 = vmatpush1.msra.mxu0 0.0
    %2670 = vmatprep.subr.mxu0 0.0
    %2671 = vmatpush1.msra.mxu0 0.0
    %2672 = vmatprep.subr.mxu0 0.0
    %2673 = vmatpush1.msra.mxu0 0.0
    %2674 = vmatprep.subr.mxu0 0.0
    %2675 = vmatpush1.msra.mxu0 0.0
    %2676 = vmatprep.subr.mxu0 0.0
    %2677 = vmatpush1.msra.mxu0 0.0
    %2678 = vmatprep.subr.mxu0 0.0
    %2679 = vmatpush1.msra.mxu0 0.0
    %2680 = vmatprep.subr.mxu0 0.0
    %2681 = vmatpush1.msra.mxu0 0.0
    %2682 = vmatprep.subr.mxu0 0.0
    %2683 = vmatpush1.msra.mxu0 0.0
    %2684 = vmatprep.subr.mxu0 0.0
    %2685 = vmatpush1.msra.mxu0 0.0
    %2686 = vmatprep.subr.mxu0 0.0
    %2687 = vmatpush1.msra.mxu0 0.0
    %2688 = vmatprep.subr.mxu0 0.0
    %2689 = vmatpush1.msra.mxu0 0.0
    %2690 = vmatprep.subr.mxu0 0.0
    %2691 = vmatpush1.msra.mxu0 0.0
    %2692 = vmatprep.subr.mxu0 0.0
    %2693 = vmatpush1.msra.mxu0 0.0
    %2694 = vmatprep.subr.mxu0 0.0
    %2695 = vmatpush1.msra.mxu0 0.0
    %2696 = vmatprep.subr.mxu0 0.0
    %2697 = vmatpush1.msra.mxu0 0.0
    %2698 = vmatprep.subr.mxu0 0.0
    %2699 = vmatpush1.msra.mxu0 0.0
    %2700 = vmatprep.mubr.f32.mxu0 0.0
    %2701 = vmatmul.mubr.f32.gmra.mrb[0].mxu0 %v2634
    %v2702 = vpop.f32.mrb[0].mxu0
    %v2703 = vadd.f32 0.0, %v2702
    %v2704 = vpop.f32.mrb[0].mxu0
    %2705 = vdwg.mxu0
    %v2706 = vld [vmem:[%s415] sm:$0xff]
    %v2707 = vld [vmem:[%s415 + $0x8] sm:$0xff]
    %v2709 = vsel %vm193, %v2703, 0
    %2711 = vmatprep.subr.mxu0 0.0
    %2712 = vmatpush1.msra.mxu0 %v2706
    %2713 = vmatprep.subr.mxu0 0.0
    %2714 = vmatpush1.msra.mxu0 %v2707
    %2715 = vmatprep.subr.mxu0 0.0
    %2716 = vmatpush1.msra.mxu0 0.0
    %2717 = vmatprep.subr.mxu0 0.0
    %2718 = vmatpush1.msra.mxu0 0.0
    %2719 = vmatprep.subr.mxu0 0.0
    %2720 = vmatpush1.msra.mxu0 0.0
    %2721 = vmatprep.subr.mxu0 0.0
    %2722 = vmatpush1.msra.mxu0 0.0
    %2723 = vmatprep.subr.mxu0 0.0
    %2724 = vmatpush1.msra.mxu0 0.0
    %2725 = vmatprep.subr.mxu0 0.0
    %2726 = vmatpush1.msra.mxu0 0.0
    %2727 = vmatprep.subr.mxu0 0.0
    %2728 = vmatpush1.msra.mxu0 0.0
    %2729 = vmatprep.subr.mxu0 0.0
    %2730 = vmatpush1.msra.mxu0 0.0
    %2731 = vmatprep.subr.mxu0 0.0
    %2732 = vmatpush1.msra.mxu0 0.0
    %2733 = vmatprep.subr.mxu0 0.0
    %2734 = vmatpush1.msra.mxu0 0.0
    %2735 = vmatprep.subr.mxu0 0.0
    %2736 = vmatpush1.msra.mxu0 0.0
    %2737 = vmatprep.subr.mxu0 0.0
    %2738 = vmatpush1.msra.mxu0 0.0
    %2739 = vmatprep.subr.mxu0 0.0
    %2740 = vmatpush1.msra.mxu0 0.0
    %2741 = vmatprep.subr.mxu0 0.0
    %2742 = vmatpush1.msra.mxu0 0.0
    %2743 = vmatprep.subr.mxu0 0.0
    %2744 = vmatpush1.msra.mxu0 0.0
    %2745 = vmatprep.subr.mxu0 0.0
    %2746 = vmatpush1.msra.mxu0 0.0
    %2747 = vmatprep.subr.mxu0 0.0
    %2748 = vmatpush1.msra.mxu0 0.0
    %2749 = vmatprep.subr.mxu0 0.0
    %2750 = vmatpush1.msra.mxu0 0.0
    %2751 = vmatprep.subr.mxu0 0.0
    %2752 = vmatpush1.msra.mxu0 0.0
    %2753 = vmatprep.subr.mxu0 0.0
    %2754 = vmatpush1.msra.mxu0 0.0
    %2755 = vmatprep.subr.mxu0 0.0
    %2756 = vmatpush1.msra.mxu0 0.0
    %2757 = vmatprep.subr.mxu0 0.0
    %2758 = vmatpush1.msra.mxu0 0.0
    %2759 = vmatprep.subr.mxu0 0.0
    %2760 = vmatpush1.msra.mxu0 0.0
    %2761 = vmatprep.subr.mxu0 0.0
    %2762 = vmatpush1.msra.mxu0 0.0
    %2763 = vmatprep.subr.mxu0 0.0
    %2764 = vmatpush1.msra.mxu0 0.0
    %2765 = vmatprep.subr.mxu0 0.0
    %2766 = vmatpush1.msra.mxu0 0.0
    %2767 = vmatprep.subr.mxu0 0.0
    %2768 = vmatpush1.msra.mxu0 0.0
    %2769 = vmatprep.subr.mxu0 0.0
    %2770 = vmatpush1.msra.mxu0 0.0
    %2771 = vmatprep.subr.mxu0 0.0
    %2772 = vmatpush1.msra.mxu0 0.0
    %2773 = vmatprep.subr.mxu0 0.0
    %2774 = vmatpush1.msra.mxu0 0.0
    %2775 = vmatprep.mubr.f32.mxu0 0.0
    %2776 = vmatmul.mubr.f32.gmra.mrb[0].mxu0 %v2709
    %v2777 = vpop.f32.mrb[0].mxu0
    %v2778 = vadd.f32 0.0, %v2777
    %v2779 = vpop.f32.mrb[0].mxu0
    %2780 = vdwg.mxu0
    %v2781 = vadd.f32 %v2629, %v2778
    %v2782 = vadd.f32 %v2781, %v495
    %v2783 = vmax.f32 %v2782, 0.0
    %s2784 = scalar_lea.vmem [#allocation5], 40
    %2785 = vst.msk [vmem:[%s2784] sm:$0xff] %vm499, %v2783
    // Predicated region
    $region22: #{tpu_custom_call.1} parent=1 // pred_check
      _
    $region23: #{tpu_custom_call.1} parent=1 // pred_check_branch
      %2787 = sbr.rel (0) target = $region25
    $region24: #{tpu_custom_call.1} parent=1 // pred_region
      %s2789 = ssub.s32 768, 768
      %2790 = vsyncadd [#allocation4], %s2789
      %s2791 = sshll.u32 [#allocation5], 4
      %s2792 = int_to_ptr.vmem [resolvable:$true] %s2791
      %2797 = dma.vmem_to_hbm [thread:$0]  %s2792, 768, %s4, [#allocation4], 128, 128, 8
    $region25: #{tpu_custom_call.1} parent=1 // pred_fallthru
      _
    // Predicated region
    $region26: #{tpu_custom_call.1} parent=1 // pred_check
      _
    $region27: #{tpu_custom_call.1} parent=1 // pred_check_branch
      %2799 = sbr.rel (0) target = $region29
    $region28: #{tpu_custom_call.1} parent=1 // pred_region
      %2800 = dma.done [#allocation4], 768
    $region29: #{tpu_custom_call.1} parent=1 // pred_fallthru
      _
    %2801 = vsyncpa [#allocation3], 1
    %2802 = vsyncpa [#allocation4], 1

</llo_original>
